<compile_context>
chip_gen: v7x
topology: tpu7x:2x2x1
jax: 0.10.0
libtpu: 0.0.40
codegen_flags: <defaults>
</compile_context>

<pallas_src>
import functools

import jax
import jax.numpy as jnp
from jax import lax
from jax.experimental import pallas as pl
from jax.experimental.pallas import tpu as pltpu


# -----------------------------------------------------------------------------
# Static layout of the two packed parameter slabs (shared by packer + kernel).
# -----------------------------------------------------------------------------

def _mat_layout(d, ff):
  """Row-stacked weight-matrix slab layout: name -> (row_off, nrows, ncols)."""
  order = (("sa_wqkv", d, 3 * d),      # [Wq*scale | Wk | Wv]
           ("sa_wo",   d, d),
           ("ca_wq",   d, d),          # pre-scaled
           ("ca_wkv",  2 * d, 2 * d),  # blockdiag(Wk, Wv)
           ("ca_wo",   d, d),
           ("ffn_w1",  d, ff),
           ("ffn_w2",  ff, d))
  offs, r = {}, 0
  for name, nr, nc in order:
    offs[name] = (r, nr, nc)
    r += nr
  cmax = max(nc for _, _, nc in order)
  return offs, r, cmax


def _vec_layout(d, ff):
  """Bias / LayerNorm slab layout: name -> (row_index, width)."""
  order = (("sa_bqkv", 3 * d), ("sa_bo", d),
           ("ca_bq", d), ("ca_bkv", 2 * d), ("ca_bo", d),
           ("ffn_b1", ff), ("ffn_b2", d),
           ("ln0_g", d), ("ln0_b", d),
           ("ln1_g", d), ("ln1_b", d),
           ("ln2_g", d), ("ln2_b", d))
  offs = {name: (i, w) for i, (name, w) in enumerate(order)}
  vmax = max(w for _, w in order)
  return offs, len(order), vmax


# -----------------------------------------------------------------------------
# Fused decoder-stack kernel (one grid step = one batch block, all layers)
# -----------------------------------------------------------------------------

def _decoder_stack_kernel(x_ref, ekv_ref, wmat_ref, wvec_ref, o_ref, *,
                          num_layers, num_heads, dim_ff, eps):
  bb, sq, d = x_ref.shape
  sk = ekv_ref.shape[1]
  dh = d // num_heads
  moffs, mrows, _ = _mat_layout(d, dim_ff)
  voffs, vrows, _ = _vec_layout(d, dim_ff)

  def W(l, name):                       # static slab slice -> (nrows, ncols)
    r0, nr, nc = moffs[name]
    base = l * mrows + r0
    return wmat_ref[base:base + nr, 0:nc]

  def V(l, name):                       # static slab slice -> (1, width)
    i, w = voffs[name]
    r = l * vrows + i
    return wvec_ref[r:r + 1, 0:w]

  # Flatten the batch block: every projection / FFN / LN matmul runs on all
  # bb*Sq (resp. bb*Sk) rows at once.
  x = x_ref[...].reshape(bb * sq, d)
  ekv = ekv_ref[...].reshape(bb * sk, 2 * d)

  def attend(q_src, q0, kv_src, k0, v0, skv):
    """Per-(batch, head) softmax attention.  q_src rows are batch-major
    (bb*sq), kv_src rows are batch-major (bb*skv).  q0/k0/v0 are lane offsets
    of q/k/v inside their (already computed) projection outputs.
    Returns (bb*sq, d) with heads lane-concatenated, ready for ONE out-proj
    matmul over all rows."""
    rows = []
    for b in range(bb):                                 # static unroll
      qb = q_src[b * sq:(b + 1) * sq, :]
      kb = kv_src[b * skv:(b + 1) * skv, :]
      heads = []
      for h in range(num_heads):                        # static unroll
        lo = h * dh
        qh = qb[:, q0 + lo:q0 + lo + dh]
        kh = kb[:, k0 + lo:k0 + lo + dh]
        vh = kb[:, v0 + lo:v0 + lo + dh]
        # q is pre-scaled by dh**-0.5 (folded into Wq/bq at pack time).
        s = lax.dot_general(qh, kh, (((1,), (1,)), ((), ())),
                            preferred_element_type=jnp.float32)
        m = jnp.max(s, axis=-1, keepdims=True)
        p = jnp.exp(s - m)
        inv = 1.0 / jnp.sum(p, axis=-1, keepdims=True)  # exact (no EUP approx)
        oh = jnp.dot(p, vh, preferred_element_type=jnp.float32) * inv
        heads.append(oh)
      rows.append(jnp.concatenate(heads, axis=-1))      # lane-place heads
    return jnp.concatenate(rows, axis=0) if bb > 1 else rows[0]

  def add_ln(res, y, g, b):
    z = res + y
    mu = jnp.mean(z, axis=-1, keepdims=True)
    zc = z - mu
    var = jnp.mean(zc * zc, axis=-1, keepdims=True)
    return zc * lax.rsqrt(var + eps) * g + b

  for l in range(num_layers):                           # static unroll
    # --- self attention: single fused QKV matmul, heads sliced from it ---
    qkv = (jnp.dot(x, W(l, "sa_wqkv"), preferred_element_type=jnp.float32)
           + V(l, "sa_bqkv"))
    a = attend(qkv, 0, qkv, d, 2 * d, sq)
    a = (jnp.dot(a, W(l, "sa_wo"), preferred_element_type=jnp.float32)
         + V(l, "sa_bo"))
    x = add_ln(x, a, V(l, "ln0_g"), V(l, "ln0_b"))

    # --- cross attention: fused [K|V] projection with block-diag weight ---
    q = (jnp.dot(x, W(l, "ca_wq"), preferred_element_type=jnp.float32)
         + V(l, "ca_bq"))
    kv = (jnp.dot(ekv, W(l, "ca_wkv"), preferred_element_type=jnp.float32)
          + V(l, "ca_bkv"))
    a = attend(q, 0, kv, 0, d, sk)
    a = (jnp.dot(a, W(l, "ca_wo"), preferred_element_type=jnp.float32)
         + V(l, "ca_bo"))
    x = add_ln(x, a, V(l, "ln1_g"), V(l, "ln1_b"))

    # --- FFN: matmul + bias + ReLU, matmul + bias, residual + LayerNorm ---
    h1 = jnp.maximum(
        jnp.dot(x, W(l, "ffn_w1"), preferred_element_type=jnp.float32)
        + V(l, "ffn_b1"), 0.0)
    h2 = (jnp.dot(h1, W(l, "ffn_w2"), preferred_element_type=jnp.float32)
          + V(l, "ffn_b2"))
    x = add_ln(x, h2, V(l, "ln2_g"), V(l, "ln2_b"))

  o_ref[...] = x.reshape(bb, sq, d)


# -----------------------------------------------------------------------------
# Wrapper
# -----------------------------------------------------------------------------

def decoder_stack(packed, x, encoder_output_2d, encoder_output_raw, *,
                  num_heads, dim_ff, grid_steps=None):
  """Fused forward of the whole decoder stack. x: (B, S_tgt, D) float32."""
  B, Sq, D = x.shape
  Sk = encoder_output_2d.shape[1]
  _, mrows, _ = _mat_layout(D, dim_ff)
  wmat, wvec = packed["wmat"], packed["wvec"]
  L = wmat.shape[0] // mrows

  # Cross-attn K comes from encoder_output_2D and V from encoder_output_raw;
  # concatenating them once here lets the kernel do a single block-diagonal
  # K/V projection matmul per layer.
  ekv = jnp.concatenate([encoder_output_2d, encoder_output_raw], axis=-1)

  # Grid: at most 2 fat, parallel batch blocks.  Two steps feed both
  # TensorCores on v7x; on single-TC v5e/v6e pass grid_steps=1 to fold the
  # entire batch into one step (no per-step overhead, bigger matmul M).
  if grid_steps is None:
    grid_steps = 2 if (B % 2 == 0 and B >= 2) else 1
  assert B % grid_steps == 0, "grid_steps must divide batch"
  bb = B // grid_steps

  kernel = functools.partial(_decoder_stack_kernel, num_layers=L,
                             num_heads=num_heads, dim_ff=dim_ff, eps=1e-5)

  return pl.pallas_call(
      kernel,
      out_shape=jax.ShapeDtypeStruct((B, Sq, D), jnp.float32),
      grid=(grid_steps,),
      in_specs=[pl.BlockSpec((bb, Sq, D), lambda g: (g, 0, 0)),
                pl.BlockSpec((bb, Sk, 2 * D), lambda g: (g, 0, 0)),
                pl.BlockSpec(wmat.shape, lambda g: (0, 0)),   # resident slab
                pl.BlockSpec(wvec.shape, lambda g: (0, 0))],  # resident slab
      out_specs=pl.BlockSpec((bb, Sq, D), lambda g: (g, 0, 0)),
      compiler_params=pltpu.CompilerParams(
          dimension_semantics=("parallel",),      # feeds both TCs on v7x
          vmem_limit_bytes=32 * 1024 * 1024),     # tiny slabs; well under cap
  )(x, ekv, wmat, wvec)


# -----------------------------------------------------------------------------
# Deterministic parameter initialization (PyTorch-like layout) + packing
# -----------------------------------------------------------------------------

def _xavier_uniform(key, shape):
  fan_in, fan_out = shape
  limit = (6.0 / (fan_in + fan_out)) ** 0.5
  return jax.random.uniform(key, shape, jnp.float32, -limit, limit)


def _init_mha(key, d_model):
  ks = jax.random.split(key, 8)
  return {
      "wq": _xavier_uniform(ks[0], (d_model, d_model)),
      "wk": _xavier_uniform(ks[1], (d_model, d_model)),
      "wv": _xavier_uniform(ks[2], (d_model, d_model)),
      "wo": _xavier_uniform(ks[3], (d_model, d_model)),
      "bq": 0.01 * jax.random.normal(ks[4], (d_model,), jnp.float32),
      "bk": 0.01 * jax.random.normal(ks[5], (d_model,), jnp.float32),
      "bv": 0.01 * jax.random.normal(ks[6], (d_model,), jnp.float32),
      "bo": 0.01 * jax.random.normal(ks[7], (d_model,), jnp.float32),
  }


def _init_layer(key, d_model, dim_ff):
  ks = jax.random.split(key, 6)
  return {
      "self_attn": _init_mha(ks[0], d_model),
      "cross_attn": _init_mha(ks[1], d_model),
      "ffn_w1": _xavier_uniform(ks[2], (d_model, dim_ff)),
      "ffn_b1": 0.01 * jax.random.normal(ks[3], (dim_ff,), jnp.float32),
      "ffn_w2": _xavier_uniform(ks[4], (dim_ff, d_model)),
      "ffn_b2": 0.01 * jax.random.normal(ks[5], (d_model,), jnp.float32),
      "ln0_g": jnp.ones((d_model,), jnp.float32),
      "ln0_b": jnp.zeros((d_model,), jnp.float32),
      "ln1_g": jnp.ones((d_model,), jnp.float32),
      "ln1_b": jnp.zeros((d_model,), jnp.float32),
      "ln2_g": jnp.ones((d_model,), jnp.float32),
      "ln2_b": jnp.zeros((d_model,), jnp.float32),
  }


def init_decoder_stack(key, num_dec_layers, d_model, dim_ff, num_heads):
  del num_heads
  keys = jax.random.split(key, num_dec_layers)
  return {"layers": [_init_layer(k, d_model, dim_ff) for k in keys]}


def pack_decoder_params(params, num_heads):
  """Coalesce all per-layer weights into two flat f32 slabs:
     wmat: row-stacked weight matrices (Wq pre-scaled by dh**-0.5, self-attn
           QKV fused, cross-attn K/V fused into a block-diagonal weight),
     wvec: one bias / LayerNorm vector per row."""
  layers = params["layers"]
  d = layers[0]["self_attn"]["wq"].shape[0]
  ff = layers[0]["ffn_w1"].shape[1]
  L = len(layers)
  scale = float(d // num_heads) ** -0.5
  moffs, mrows, cmax = _mat_layout(d, ff)
  voffs, vrows, vmax = _vec_layout(d, ff)

  wmat = jnp.zeros((L * mrows, cmax), jnp.float32)
  wvec = jnp.zeros((L * vrows, vmax), jnp.float32)

  for l, p in enumerate(layers):
    sa, ca = p["self_attn"], p["cross_attn"]
    ca_wkv = jnp.zeros((2 * d, 2 * d), jnp.float32)
    ca_wkv = ca_wkv.at[:d, :d].set(ca["wk"]).at[d:, d:].set(ca["wv"])
    mats = {
        "sa_wqkv": jnp.concatenate([sa["wq"] * scale, sa["wk"], sa["wv"]],
                                   axis=1),
        "sa_wo": sa["wo"],
        "ca_wq": ca["wq"] * scale,
        "ca_wkv": ca_wkv,
        "ca_wo": ca["wo"],
        "ffn_w1": p["ffn_w1"],
        "ffn_w2": p["ffn_w2"],
    }
    for name, (r0, nr, nc) in moffs.items():
      base = l * mrows + r0
      wmat = wmat.at[base:base + nr, :nc].set(mats[name])

    vecs = {
        "sa_bqkv": jnp.concatenate([sa["bq"] * scale, sa["bk"], sa["bv"]]),
        "sa_bo": sa["bo"],
        "ca_bq": ca["bq"] * scale,
        "ca_bkv": jnp.concatenate([ca["bk"], ca["bv"]]),
        "ca_bo": ca["bo"],
        "ffn_b1": p["ffn_b1"],
        "ffn_b2": p["ffn_b2"],
        "ln0_g": p["ln0_g"], "ln0_b": p["ln0_b"],
        "ln1_g": p["ln1_g"], "ln1_b": p["ln1_b"],
        "ln2_g": p["ln2_g"], "ln2_b": p["ln2_b"],
    }
    for name, (i, w) in voffs.items():
      wvec = wvec.at[l * vrows + i, :w].set(vecs[name])

  return {"wmat": wmat, "wvec": wvec}


# -----------------------------------------------------------------------------
# Main
# -----------------------------------------------------------------------------

if __name__ == "__main__":
  num_dec_layers = 2
  d_model = 32
  dim_ff = 64
  num_heads = 4
  B, S_tgt, S_mem = 2, 8, 10

  root = jax.random.PRNGKey(0)
  k_params, k_x, k_e2d, k_eraw = jax.random.split(root, 4)

  params = init_decoder_stack(k_params, num_dec_layers, d_model, dim_ff,
                              num_heads)
  packed = pack_decoder_params(params, num_heads)

  x = jax.random.normal(k_x, (B, S_tgt, d_model), jnp.float32)
  encoder_output_2d = jax.random.normal(k_e2d, (B, S_mem, d_model),
                                        jnp.float32)
  encoder_output_raw = jax.random.normal(k_eraw, (B, S_mem, d_model),
                                         jnp.float32)

  out = decoder_stack(packed, x, encoder_output_2d, encoder_output_raw,
                      num_heads=num_heads, dim_ff=dim_ff)
  out = jax.block_until_ready(out)
  assert out.shape == (B, S_tgt, d_model)
  assert bool(jnp.all(jnp.isfinite(out)))
  print("KERNEL_OK")
</pallas_src>

<mosaic_0001>
module attributes {stable_mosaic.version = 11 : i64} {
  func.func @_decoder_stack_kernel(%arg0: i32, %arg1: memref<1x8x32xf32, #tpu.memory_space<vmem>>, %arg2: memref<1x10x64xf32, #tpu.memory_space<vmem>>, %arg3: memref<576x96xf32, #tpu.memory_space<vmem>>, %arg4: memref<26x96xf32, #tpu.memory_space<vmem>>, %arg5: memref<1x8x32xf32, #tpu.memory_space<vmem>>) attributes {dimension_semantics = [#tpu.dimension_semantics<parallel>], iteration_bounds = array<i64: 2>, scalar_prefetch = 0 : i64, scratch_operands = 0 : i64, tpu.core_type = #tpu.core_type<tc>, window_params = [{transform_indices = @transform_0, window_bounds = array<i64: 1, 8, 32>}, {transform_indices = @transform_1, window_bounds = array<i64: 1, 10, 64>}, {pipeline_mode = #tpu.pipeline_mode<synchronous>, transform_indices = @transform_2, window_bounds = array<i64: 576, 96>}, {pipeline_mode = #tpu.pipeline_mode<synchronous>, transform_indices = @transform_3, window_bounds = array<i64: 26, 96>}, {transform_indices = @transform_4, window_bounds = array<i64: 1, 8, 32>}]} {
    %c0 = arith.constant 0 : index
    %c0_0 = arith.constant 0 : index
    %c0_1 = arith.constant 0 : index
    %0 = vector.load %arg1[%c0, %c0_0, %c0_1] : memref<1x8x32xf32, #tpu.memory_space<vmem>>, vector<1x8x32xf32>
    %1 = vector.shape_cast %0 : vector<1x8x32xf32> to vector<8x32xf32>
    %c0_2 = arith.constant 0 : index
    %c0_3 = arith.constant 0 : index
    %c0_4 = arith.constant 0 : index
    %2 = vector.load %arg2[%c0_2, %c0_3, %c0_4] : memref<1x10x64xf32, #tpu.memory_space<vmem>>, vector<1x10x64xf32>
    %3 = vector.shape_cast %2 : vector<1x10x64xf32> to vector<10x64xf32>
    %c0_5 = arith.constant 0 : index
    %c0_6 = arith.constant 0 : index
    %4 = vector.load %arg3[%c0_5, %c0_6] : memref<576x96xf32, #tpu.memory_space<vmem>>, vector<32x96xf32>
    %cst = arith.constant dense<0.000000e+00> : vector<8x96xf32>
    %5 = tpu.matmul %1, %4, %cst {dimension_numbers = #tpu.dot_dimension_numbers<[1], [0], [0], [1], [0, 0, 1, 1], [], []>} : vector<8x32xf32>, vector<32x96xf32>, vector<8x96xf32> -> vector<8x96xf32>
    %c0_7 = arith.constant 0 : index
    %c0_8 = arith.constant 0 : index
    %6 = vector.load %arg4[%c0_7, %c0_8] : memref<26x96xf32, #tpu.memory_space<vmem>>, vector<1x96xf32>
    %7 = vector.broadcast %6 : vector<1x96xf32> to vector<8x96xf32>
    %8 = arith.addf %5, %7 : vector<8x96xf32>
    %9 = vector.extract_strided_slice %8 {offsets = [0, 0], sizes = [8, 8], strides = [1, 1]} : vector<8x96xf32> to vector<8x8xf32>
    %10 = vector.extract_strided_slice %8 {offsets = [0, 32], sizes = [8, 8], strides = [1, 1]} : vector<8x96xf32> to vector<8x8xf32>
    %11 = vector.extract_strided_slice %8 {offsets = [0, 64], sizes = [8, 8], strides = [1, 1]} : vector<8x96xf32> to vector<8x8xf32>
    %cst_9 = arith.constant dense<0.000000e+00> : vector<8x8xf32>
    %12 = tpu.matmul %9, %10, %cst_9 {dimension_numbers = #tpu.dot_dimension_numbers<[1], [1], [0], [0], [0, 0, 1, 0], [], []>} : vector<8x8xf32>, vector<8x8xf32>, vector<8x8xf32> -> vector<8x8xf32>
    %cst_10 = arith.constant dense<0xFF800000> : vector<8xf32>
    %13 = vector.multi_reduction <maximumf>, %12, %cst_10 [1] : vector<8x8xf32> to vector<8xf32>
    %14 = vector.shape_cast %13 : vector<8xf32> to vector<8x1xf32>
    %15 = vector.broadcast %14 : vector<8x1xf32> to vector<8x8xf32>
    %16 = arith.subf %12, %15 : vector<8x8xf32>
    %17 = math.exp %16 : vector<8x8xf32>
    %cst_11 = arith.constant dense<0.000000e+00> : vector<8xf32>
    %18 = vector.multi_reduction <add>, %17, %cst_11 [1] : vector<8x8xf32> to vector<8xf32>
    %19 = vector.shape_cast %18 : vector<8xf32> to vector<8x1xf32>
    %cst_12 = arith.constant 1.000000e+00 : f32
    %20 = vector.broadcast %cst_12 : f32 to vector<8x1xf32>
    %21 = arith.divf %20, %19 : vector<8x1xf32>
    %cst_13 = arith.constant dense<0.000000e+00> : vector<8x8xf32>
    %22 = tpu.matmul %17, %11, %cst_13 {dimension_numbers = #tpu.dot_dimension_numbers<[1], [0], [0], [1], [0, 0, 1, 1], [], []>} : vector<8x8xf32>, vector<8x8xf32>, vector<8x8xf32> -> vector<8x8xf32>
    %23 = vector.broadcast %21 : vector<8x1xf32> to vector<8x8xf32>
    %24 = arith.mulf %22, %23 : vector<8x8xf32>
    %25 = vector.extract_strided_slice %8 {offsets = [0, 8], sizes = [8, 8], strides = [1, 1]} : vector<8x96xf32> to vector<8x8xf32>
    %26 = vector.extract_strided_slice %8 {offsets = [0, 40], sizes = [8, 8], strides = [1, 1]} : vector<8x96xf32> to vector<8x8xf32>
    %27 = vector.extract_strided_slice %8 {offsets = [0, 72], sizes = [8, 8], strides = [1, 1]} : vector<8x96xf32> to vector<8x8xf32>
    %cst_14 = arith.constant dense<0.000000e+00> : vector<8x8xf32>
    %28 = tpu.matmul %25, %26, %cst_14 {dimension_numbers = #tpu.dot_dimension_numbers<[1], [1], [0], [0], [0, 0, 1, 0], [], []>} : vector<8x8xf32>, vector<8x8xf32>, vector<8x8xf32> -> vector<8x8xf32>
    %cst_15 = arith.constant dense<0xFF800000> : vector<8xf32>
    %29 = vector.multi_reduction <maximumf>, %28, %cst_15 [1] : vector<8x8xf32> to vector<8xf32>
    %30 = vector.shape_cast %29 : vector<8xf32> to vector<8x1xf32>
    %31 = vector.broadcast %30 : vector<8x1xf32> to vector<8x8xf32>
    %32 = arith.subf %28, %31 : vector<8x8xf32>
    %33 = math.exp %32 : vector<8x8xf32>
    %cst_16 = arith.constant dense<0.000000e+00> : vector<8xf32>
    %34 = vector.multi_reduction <add>, %33, %cst_16 [1] : vector<8x8xf32> to vector<8xf32>
    %35 = vector.shape_cast %34 : vector<8xf32> to vector<8x1xf32>
    %cst_17 = arith.constant 1.000000e+00 : f32
    %36 = vector.broadcast %cst_17 : f32 to vector<8x1xf32>
    %37 = arith.divf %36, %35 : vector<8x1xf32>
    %cst_18 = arith.constant dense<0.000000e+00> : vector<8x8xf32>
    %38 = tpu.matmul %33, %27, %cst_18 {dimension_numbers = #tpu.dot_dimension_numbers<[1], [0], [0], [1], [0, 0, 1, 1], [], []>} : vector<8x8xf32>, vector<8x8xf32>, vector<8x8xf32> -> vector<8x8xf32>
    %39 = vector.broadcast %37 : vector<8x1xf32> to vector<8x8xf32>
    %40 = arith.mulf %38, %39 : vector<8x8xf32>
    %41 = vector.extract_strided_slice %8 {offsets = [0, 16], sizes = [8, 8], strides = [1, 1]} : vector<8x96xf32> to vector<8x8xf32>
    %42 = vector.extract_strided_slice %8 {offsets = [0, 48], sizes = [8, 8], strides = [1, 1]} : vector<8x96xf32> to vector<8x8xf32>
    %43 = vector.extract_strided_slice %8 {offsets = [0, 80], sizes = [8, 8], strides = [1, 1]} : vector<8x96xf32> to vector<8x8xf32>
    %cst_19 = arith.constant dense<0.000000e+00> : vector<8x8xf32>
    %44 = tpu.matmul %41, %42, %cst_19 {dimension_numbers = #tpu.dot_dimension_numbers<[1], [1], [0], [0], [0, 0, 1, 0], [], []>} : vector<8x8xf32>, vector<8x8xf32>, vector<8x8xf32> -> vector<8x8xf32>
    %cst_20 = arith.constant dense<0xFF800000> : vector<8xf32>
    %45 = vector.multi_reduction <maximumf>, %44, %cst_20 [1] : vector<8x8xf32> to vector<8xf32>
    %46 = vector.shape_cast %45 : vector<8xf32> to vector<8x1xf32>
    %47 = vector.broadcast %46 : vector<8x1xf32> to vector<8x8xf32>
    %48 = arith.subf %44, %47 : vector<8x8xf32>
    %49 = math.exp %48 : vector<8x8xf32>
    %cst_21 = arith.constant dense<0.000000e+00> : vector<8xf32>
    %50 = vector.multi_reduction <add>, %49, %cst_21 [1] : vector<8x8xf32> to vector<8xf32>
    %51 = vector.shape_cast %50 : vector<8xf32> to vector<8x1xf32>
    %cst_22 = arith.constant 1.000000e+00 : f32
    %52 = vector.broadcast %cst_22 : f32 to vector<8x1xf32>
    %53 = arith.divf %52, %51 : vector<8x1xf32>
    %cst_23 = arith.constant dense<0.000000e+00> : vector<8x8xf32>
    %54 = tpu.matmul %49, %43, %cst_23 {dimension_numbers = #tpu.dot_dimension_numbers<[1], [0], [0], [1], [0, 0, 1, 1], [], []>} : vector<8x8xf32>, vector<8x8xf32>, vector<8x8xf32> -> vector<8x8xf32>
    %55 = vector.broadcast %53 : vector<8x1xf32> to vector<8x8xf32>
    %56 = arith.mulf %54, %55 : vector<8x8xf32>
    %57 = vector.extract_strided_slice %8 {offsets = [0, 24], sizes = [8, 8], strides = [1, 1]} : vector<8x96xf32> to vector<8x8xf32>
    %58 = vector.extract_strided_slice %8 {offsets = [0, 56], sizes = [8, 8], strides = [1, 1]} : vector<8x96xf32> to vector<8x8xf32>
    %59 = vector.extract_strided_slice %8 {offsets = [0, 88], sizes = [8, 8], strides = [1, 1]} : vector<8x96xf32> to vector<8x8xf32>
    %cst_24 = arith.constant dense<0.000000e+00> : vector<8x8xf32>
    %60 = tpu.matmul %57, %58, %cst_24 {dimension_numbers = #tpu.dot_dimension_numbers<[1], [1], [0], [0], [0, 0, 1, 0], [], []>} : vector<8x8xf32>, vector<8x8xf32>, vector<8x8xf32> -> vector<8x8xf32>
    %cst_25 = arith.constant dense<0xFF800000> : vector<8xf32>
    %61 = vector.multi_reduction <maximumf>, %60, %cst_25 [1] : vector<8x8xf32> to vector<8xf32>
    %62 = vector.shape_cast %61 : vector<8xf32> to vector<8x1xf32>
    %63 = vector.broadcast %62 : vector<8x1xf32> to vector<8x8xf32>
    %64 = arith.subf %60, %63 : vector<8x8xf32>
    %65 = math.exp %64 : vector<8x8xf32>
    %cst_26 = arith.constant dense<0.000000e+00> : vector<8xf32>
    %66 = vector.multi_reduction <add>, %65, %cst_26 [1] : vector<8x8xf32> to vector<8xf32>
    %67 = vector.shape_cast %66 : vector<8xf32> to vector<8x1xf32>
    %cst_27 = arith.constant 1.000000e+00 : f32
    %68 = vector.broadcast %cst_27 : f32 to vector<8x1xf32>
    %69 = arith.divf %68, %67 : vector<8x1xf32>
    %cst_28 = arith.constant dense<0.000000e+00> : vector<8x8xf32>
    %70 = tpu.matmul %65, %59, %cst_28 {dimension_numbers = #tpu.dot_dimension_numbers<[1], [0], [0], [1], [0, 0, 1, 1], [], []>} : vector<8x8xf32>, vector<8x8xf32>, vector<8x8xf32> -> vector<8x8xf32>
    %71 = vector.broadcast %69 : vector<8x1xf32> to vector<8x8xf32>
    %72 = arith.mulf %70, %71 : vector<8x8xf32>
    %73 = tpu.concatenate %24, %40, %56, %72 in 1 : vector<8x8xf32>, vector<8x8xf32>, vector<8x8xf32>, vector<8x8xf32> -> vector<8x32xf32>
    %c32 = arith.constant 32 : index
    %c0_29 = arith.constant 0 : index
    %74 = vector.load %arg3[%c32, %c0_29] : memref<576x96xf32, #tpu.memory_space<vmem>>, vector<32x32xf32>
    %cst_30 = arith.constant dense<0.000000e+00> : vector<8x32xf32>
    %75 = tpu.matmul %73, %74, %cst_30 {dimension_numbers = #tpu.dot_dimension_numbers<[1], [0], [0], [1], [0, 0, 1, 1], [], []>} : vector<8x32xf32>, vector<32x32xf32>, vector<8x32xf32> -> vector<8x32xf32>
    %c1 = arith.constant 1 : index
    %c0_31 = arith.constant 0 : index
    %76 = vector.load %arg4[%c1, %c0_31] : memref<26x96xf32, #tpu.memory_space<vmem>>, vector<1x32xf32>
    %77 = vector.broadcast %76 : vector<1x32xf32> to vector<8x32xf32>
    %78 = arith.addf %75, %77 : vector<8x32xf32>
    %c7 = arith.constant 7 : index
    %c0_32 = arith.constant 0 : index
    %79 = vector.load %arg4[%c7, %c0_32] : memref<26x96xf32, #tpu.memory_space<vmem>>, vector<1x32xf32>
    %c8 = arith.constant 8 : index
    %c0_33 = arith.constant 0 : index
    %80 = vector.load %arg4[%c8, %c0_33] : memref<26x96xf32, #tpu.memory_space<vmem>>, vector<1x32xf32>
    %81 = arith.addf %1, %78 : vector<8x32xf32>
    %cst_34 = arith.constant dense<0.000000e+00> : vector<8xf32>
    %82 = vector.multi_reduction <add>, %81, %cst_34 [1] : vector<8x32xf32> to vector<8xf32>
    %83 = vector.shape_cast %82 : vector<8xf32> to vector<8x1xf32>
    %cst_35 = arith.constant 3.200000e+01 : f32
    %84 = vector.broadcast %cst_35 : f32 to vector<8x1xf32>
    %85 = arith.divf %83, %84 : vector<8x1xf32>
    %86 = vector.broadcast %85 : vector<8x1xf32> to vector<8x32xf32>
    %87 = arith.subf %81, %86 : vector<8x32xf32>
    %88 = arith.mulf %87, %87 : vector<8x32xf32>
    %cst_36 = arith.constant dense<0.000000e+00> : vector<8xf32>
    %89 = vector.multi_reduction <add>, %88, %cst_36 [1] : vector<8x32xf32> to vector<8xf32>
    %90 = vector.shape_cast %89 : vector<8xf32> to vector<8x1xf32>
    %cst_37 = arith.constant 3.200000e+01 : f32
    %91 = vector.broadcast %cst_37 : f32 to vector<8x1xf32>
    %92 = arith.divf %90, %91 : vector<8x1xf32>
    %cst_38 = arith.constant 9.99999974E-6 : f32
    %93 = vector.broadcast %cst_38 : f32 to vector<8x1xf32>
    %94 = arith.addf %92, %93 : vector<8x1xf32>
    %95 = math.rsqrt %94 : vector<8x1xf32>
    %96 = vector.broadcast %95 : vector<8x1xf32> to vector<8x32xf32>
    %97 = arith.mulf %87, %96 : vector<8x32xf32>
    %98 = vector.broadcast %79 : vector<1x32xf32> to vector<8x32xf32>
    %99 = arith.mulf %97, %98 : vector<8x32xf32>
    %100 = vector.broadcast %80 : vector<1x32xf32> to vector<8x32xf32>
    %101 = arith.addf %99, %100 : vector<8x32xf32>
    %c64 = arith.constant 64 : index
    %c0_39 = arith.constant 0 : index
    %102 = vector.load %arg3[%c64, %c0_39] : memref<576x96xf32, #tpu.memory_space<vmem>>, vector<32x32xf32>
    %cst_40 = arith.constant dense<0.000000e+00> : vector<8x32xf32>
    %103 = tpu.matmul %101, %102, %cst_40 {dimension_numbers = #tpu.dot_dimension_numbers<[1], [0], [0], [1], [0, 0, 1, 1], [], []>} : vector<8x32xf32>, vector<32x32xf32>, vector<8x32xf32> -> vector<8x32xf32>
    %c2 = arith.constant 2 : index
    %c0_41 = arith.constant 0 : index
    %104 = vector.load %arg4[%c2, %c0_41] : memref<26x96xf32, #tpu.memory_space<vmem>>, vector<1x32xf32>
    %105 = vector.broadcast %104 : vector<1x32xf32> to vector<8x32xf32>
    %106 = arith.addf %103, %105 : vector<8x32xf32>
    %c96 = arith.constant 96 : index
    %c0_42 = arith.constant 0 : index
    %107 = vector.load %arg3[%c96, %c0_42] : memref<576x96xf32, #tpu.memory_space<vmem>>, vector<64x64xf32>
    %cst_43 = arith.constant dense<0.000000e+00> : vector<10x64xf32>
    %108 = tpu.matmul %3, %107, %cst_43 {dimension_numbers = #tpu.dot_dimension_numbers<[1], [0], [0], [1], [0, 0, 1, 1], [], []>} : vector<10x64xf32>, vector<64x64xf32>, vector<10x64xf32> -> vector<10x64xf32>
    %c3 = arith.constant 3 : index
    %c0_44 = arith.constant 0 : index
    %109 = vector.load %arg4[%c3, %c0_44] : memref<26x96xf32, #tpu.memory_space<vmem>>, vector<1x64xf32>
    %110 = vector.broadcast %109 : vector<1x64xf32> to vector<10x64xf32>
    %111 = arith.addf %108, %110 : vector<10x64xf32>
    %112 = vector.extract_strided_slice %106 {offsets = [0, 0], sizes = [8, 8], strides = [1, 1]} : vector<8x32xf32> to vector<8x8xf32>
    %113 = vector.extract_strided_slice %111 {offsets = [0, 0], sizes = [10, 8], strides = [1, 1]} : vector<10x64xf32> to vector<10x8xf32>
    %114 = vector.extract_strided_slice %111 {offsets = [0, 32], sizes = [10, 8], strides = [1, 1]} : vector<10x64xf32> to vector<10x8xf32>
    %cst_45 = arith.constant dense<0.000000e+00> : vector<8x10xf32>
    %115 = tpu.matmul %112, %113, %cst_45 {dimension_numbers = #tpu.dot_dimension_numbers<[1], [1], [0], [0], [0, 0, 1, 0], [], []>} : vector<8x8xf32>, vector<10x8xf32>, vector<8x10xf32> -> vector<8x10xf32>
    %cst_46 = arith.constant dense<0xFF800000> : vector<8xf32>
    %116 = vector.multi_reduction <maximumf>, %115, %cst_46 [1] : vector<8x10xf32> to vector<8xf32>
    %117 = vector.shape_cast %116 : vector<8xf32> to vector<8x1xf32>
    %118 = vector.broadcast %117 : vector<8x1xf32> to vector<8x10xf32>
    %119 = arith.subf %115, %118 : vector<8x10xf32>
    %120 = math.exp %119 : vector<8x10xf32>
    %cst_47 = arith.constant dense<0.000000e+00> : vector<8xf32>
    %121 = vector.multi_reduction <add>, %120, %cst_47 [1] : vector<8x10xf32> to vector<8xf32>
    %122 = vector.shape_cast %121 : vector<8xf32> to vector<8x1xf32>
    %cst_48 = arith.constant 1.000000e+00 : f32
    %123 = vector.broadcast %cst_48 : f32 to vector<8x1xf32>
    %124 = arith.divf %123, %122 : vector<8x1xf32>
    %cst_49 = arith.constant dense<0.000000e+00> : vector<8x8xf32>
    %125 = tpu.matmul %120, %114, %cst_49 {dimension_numbers = #tpu.dot_dimension_numbers<[1], [0], [0], [1], [0, 0, 1, 1], [], []>} : vector<8x10xf32>, vector<10x8xf32>, vector<8x8xf32> -> vector<8x8xf32>
    %126 = vector.broadcast %124 : vector<8x1xf32> to vector<8x8xf32>
    %127 = arith.mulf %125, %126 : vector<8x8xf32>
    %128 = vector.extract_strided_slice %106 {offsets = [0, 8], sizes = [8, 8], strides = [1, 1]} : vector<8x32xf32> to vector<8x8xf32>
    %129 = vector.extract_strided_slice %111 {offsets = [0, 8], sizes = [10, 8], strides = [1, 1]} : vector<10x64xf32> to vector<10x8xf32>
    %130 = vector.extract_strided_slice %111 {offsets = [0, 40], sizes = [10, 8], strides = [1, 1]} : vector<10x64xf32> to vector<10x8xf32>
    %cst_50 = arith.constant dense<0.000000e+00> : vector<8x10xf32>
    %131 = tpu.matmul %128, %129, %cst_50 {dimension_numbers = #tpu.dot_dimension_numbers<[1], [1], [0], [0], [0, 0, 1, 0], [], []>} : vector<8x8xf32>, vector<10x8xf32>, vector<8x10xf32> -> vector<8x10xf32>
    %cst_51 = arith.constant dense<0xFF800000> : vector<8xf32>
    %132 = vector.multi_reduction <maximumf>, %131, %cst_51 [1] : vector<8x10xf32> to vector<8xf32>
    %133 = vector.shape_cast %132 : vector<8xf32> to vector<8x1xf32>
    %134 = vector.broadcast %133 : vector<8x1xf32> to vector<8x10xf32>
    %135 = arith.subf %131, %134 : vector<8x10xf32>
    %136 = math.exp %135 : vector<8x10xf32>
    %cst_52 = arith.constant dense<0.000000e+00> : vector<8xf32>
    %137 = vector.multi_reduction <add>, %136, %cst_52 [1] : vector<8x10xf32> to vector<8xf32>
    %138 = vector.shape_cast %137 : vector<8xf32> to vector<8x1xf32>
    %cst_53 = arith.constant 1.000000e+00 : f32
    %139 = vector.broadcast %cst_53 : f32 to vector<8x1xf32>
    %140 = arith.divf %139, %138 : vector<8x1xf32>
    %cst_54 = arith.constant dense<0.000000e+00> : vector<8x8xf32>
    %141 = tpu.matmul %136, %130, %cst_54 {dimension_numbers = #tpu.dot_dimension_numbers<[1], [0], [0], [1], [0, 0, 1, 1], [], []>} : vector<8x10xf32>, vector<10x8xf32>, vector<8x8xf32> -> vector<8x8xf32>
    %142 = vector.broadcast %140 : vector<8x1xf32> to vector<8x8xf32>
    %143 = arith.mulf %141, %142 : vector<8x8xf32>
    %144 = vector.extract_strided_slice %106 {offsets = [0, 16], sizes = [8, 8], strides = [1, 1]} : vector<8x32xf32> to vector<8x8xf32>
    %145 = vector.extract_strided_slice %111 {offsets = [0, 16], sizes = [10, 8], strides = [1, 1]} : vector<10x64xf32> to vector<10x8xf32>
    %146 = vector.extract_strided_slice %111 {offsets = [0, 48], sizes = [10, 8], strides = [1, 1]} : vector<10x64xf32> to vector<10x8xf32>
    %cst_55 = arith.constant dense<0.000000e+00> : vector<8x10xf32>
    %147 = tpu.matmul %144, %145, %cst_55 {dimension_numbers = #tpu.dot_dimension_numbers<[1], [1], [0], [0], [0, 0, 1, 0], [], []>} : vector<8x8xf32>, vector<10x8xf32>, vector<8x10xf32> -> vector<8x10xf32>
    %cst_56 = arith.constant dense<0xFF800000> : vector<8xf32>
    %148 = vector.multi_reduction <maximumf>, %147, %cst_56 [1] : vector<8x10xf32> to vector<8xf32>
    %149 = vector.shape_cast %148 : vector<8xf32> to vector<8x1xf32>
    %150 = vector.broadcast %149 : vector<8x1xf32> to vector<8x10xf32>
    %151 = arith.subf %147, %150 : vector<8x10xf32>
    %152 = math.exp %151 : vector<8x10xf32>
    %cst_57 = arith.constant dense<0.000000e+00> : vector<8xf32>
    %153 = vector.multi_reduction <add>, %152, %cst_57 [1] : vector<8x10xf32> to vector<8xf32>
    %154 = vector.shape_cast %153 : vector<8xf32> to vector<8x1xf32>
    %cst_58 = arith.constant 1.000000e+00 : f32
    %155 = vector.broadcast %cst_58 : f32 to vector<8x1xf32>
    %156 = arith.divf %155, %154 : vector<8x1xf32>
    %cst_59 = arith.constant dense<0.000000e+00> : vector<8x8xf32>
    %157 = tpu.matmul %152, %146, %cst_59 {dimension_numbers = #tpu.dot_dimension_numbers<[1], [0], [0], [1], [0, 0, 1, 1], [], []>} : vector<8x10xf32>, vector<10x8xf32>, vector<8x8xf32> -> vector<8x8xf32>
    %158 = vector.broadcast %156 : vector<8x1xf32> to vector<8x8xf32>
    %159 = arith.mulf %157, %158 : vector<8x8xf32>
    %160 = vector.extract_strided_slice %106 {offsets = [0, 24], sizes = [8, 8], strides = [1, 1]} : vector<8x32xf32> to vector<8x8xf32>
    %161 = vector.extract_strided_slice %111 {offsets = [0, 24], sizes = [10, 8], strides = [1, 1]} : vector<10x64xf32> to vector<10x8xf32>
    %162 = vector.extract_strided_slice %111 {offsets = [0, 56], sizes = [10, 8], strides = [1, 1]} : vector<10x64xf32> to vector<10x8xf32>
    %cst_60 = arith.constant dense<0.000000e+00> : vector<8x10xf32>
    %163 = tpu.matmul %160, %161, %cst_60 {dimension_numbers = #tpu.dot_dimension_numbers<[1], [1], [0], [0], [0, 0, 1, 0], [], []>} : vector<8x8xf32>, vector<10x8xf32>, vector<8x10xf32> -> vector<8x10xf32>
    %cst_61 = arith.constant dense<0xFF800000> : vector<8xf32>
    %164 = vector.multi_reduction <maximumf>, %163, %cst_61 [1] : vector<8x10xf32> to vector<8xf32>
    %165 = vector.shape_cast %164 : vector<8xf32> to vector<8x1xf32>
    %166 = vector.broadcast %165 : vector<8x1xf32> to vector<8x10xf32>
    %167 = arith.subf %163, %166 : vector<8x10xf32>
    %168 = math.exp %167 : vector<8x10xf32>
    %cst_62 = arith.constant dense<0.000000e+00> : vector<8xf32>
    %169 = vector.multi_reduction <add>, %168, %cst_62 [1] : vector<8x10xf32> to vector<8xf32>
    %170 = vector.shape_cast %169 : vector<8xf32> to vector<8x1xf32>
    %cst_63 = arith.constant 1.000000e+00 : f32
    %171 = vector.broadcast %cst_63 : f32 to vector<8x1xf32>
    %172 = arith.divf %171, %170 : vector<8x1xf32>
    %cst_64 = arith.constant dense<0.000000e+00> : vector<8x8xf32>
    %173 = tpu.matmul %168, %162, %cst_64 {dimension_numbers = #tpu.dot_dimension_numbers<[1], [0], [0], [1], [0, 0, 1, 1], [], []>} : vector<8x10xf32>, vector<10x8xf32>, vector<8x8xf32> -> vector<8x8xf32>
    %174 = vector.broadcast %172 : vector<8x1xf32> to vector<8x8xf32>
    %175 = arith.mulf %173, %174 : vector<8x8xf32>
    %176 = tpu.concatenate %127, %143, %159, %175 in 1 : vector<8x8xf32>, vector<8x8xf32>, vector<8x8xf32>, vector<8x8xf32> -> vector<8x32xf32>
    %c160 = arith.constant 160 : index
    %c0_65 = arith.constant 0 : index
    %177 = vector.load %arg3[%c160, %c0_65] : memref<576x96xf32, #tpu.memory_space<vmem>>, vector<32x32xf32>
    %cst_66 = arith.constant dense<0.000000e+00> : vector<8x32xf32>
    %178 = tpu.matmul %176, %177, %cst_66 {dimension_numbers = #tpu.dot_dimension_numbers<[1], [0], [0], [1], [0, 0, 1, 1], [], []>} : vector<8x32xf32>, vector<32x32xf32>, vector<8x32xf32> -> vector<8x32xf32>
    %c4 = arith.constant 4 : index
    %c0_67 = arith.constant 0 : index
    %179 = vector.load %arg4[%c4, %c0_67] : memref<26x96xf32, #tpu.memory_space<vmem>>, vector<1x32xf32>
    %180 = vector.broadcast %179 : vector<1x32xf32> to vector<8x32xf32>
    %181 = arith.addf %178, %180 : vector<8x32xf32>
    %c9 = arith.constant 9 : index
    %c0_68 = arith.constant 0 : index
    %182 = vector.load %arg4[%c9, %c0_68] : memref<26x96xf32, #tpu.memory_space<vmem>>, vector<1x32xf32>
    %c10 = arith.constant 10 : index
    %c0_69 = arith.constant 0 : index
    %183 = vector.load %arg4[%c10, %c0_69] : memref<26x96xf32, #tpu.memory_space<vmem>>, vector<1x32xf32>
    %184 = arith.addf %101, %181 : vector<8x32xf32>
    %cst_70 = arith.constant dense<0.000000e+00> : vector<8xf32>
    %185 = vector.multi_reduction <add>, %184, %cst_70 [1] : vector<8x32xf32> to vector<8xf32>
    %186 = vector.shape_cast %185 : vector<8xf32> to vector<8x1xf32>
    %cst_71 = arith.constant 3.200000e+01 : f32
    %187 = vector.broadcast %cst_71 : f32 to vector<8x1xf32>
    %188 = arith.divf %186, %187 : vector<8x1xf32>
    %189 = vector.broadcast %188 : vector<8x1xf32> to vector<8x32xf32>
    %190 = arith.subf %184, %189 : vector<8x32xf32>
    %191 = arith.mulf %190, %190 : vector<8x32xf32>
    %cst_72 = arith.constant dense<0.000000e+00> : vector<8xf32>
    %192 = vector.multi_reduction <add>, %191, %cst_72 [1] : vector<8x32xf32> to vector<8xf32>
    %193 = vector.shape_cast %192 : vector<8xf32> to vector<8x1xf32>
    %cst_73 = arith.constant 3.200000e+01 : f32
    %194 = vector.broadcast %cst_73 : f32 to vector<8x1xf32>
    %195 = arith.divf %193, %194 : vector<8x1xf32>
    %cst_74 = arith.constant 9.99999974E-6 : f32
    %196 = vector.broadcast %cst_74 : f32 to vector<8x1xf32>
    %197 = arith.addf %195, %196 : vector<8x1xf32>
    %198 = math.rsqrt %197 : vector<8x1xf32>
    %199 = vector.broadcast %198 : vector<8x1xf32> to vector<8x32xf32>
    %200 = arith.mulf %190, %199 : vector<8x32xf32>
    %201 = vector.broadcast %182 : vector<1x32xf32> to vector<8x32xf32>
    %202 = arith.mulf %200, %201 : vector<8x32xf32>
    %203 = vector.broadcast %183 : vector<1x32xf32> to vector<8x32xf32>
    %204 = arith.addf %202, %203 : vector<8x32xf32>
    %c192 = arith.constant 192 : index
    %c0_75 = arith.constant 0 : index
    %205 = vector.load %arg3[%c192, %c0_75] : memref<576x96xf32, #tpu.memory_space<vmem>>, vector<32x64xf32>
    %cst_76 = arith.constant dense<0.000000e+00> : vector<8x64xf32>
    %206 = tpu.matmul %204, %205, %cst_76 {dimension_numbers = #tpu.dot_dimension_numbers<[1], [0], [0], [1], [0, 0, 1, 1], [], []>} : vector<8x32xf32>, vector<32x64xf32>, vector<8x64xf32> -> vector<8x64xf32>
    %c5 = arith.constant 5 : index
    %c0_77 = arith.constant 0 : index
    %207 = vector.load %arg4[%c5, %c0_77] : memref<26x96xf32, #tpu.memory_space<vmem>>, vector<1x64xf32>
    %208 = vector.broadcast %207 : vector<1x64xf32> to vector<8x64xf32>
    %209 = arith.addf %206, %208 : vector<8x64xf32>
    %cst_78 = arith.constant 0.000000e+00 : f32
    %210 = vector.broadcast %cst_78 : f32 to vector<8x64xf32>
    %211 = arith.maximumf %209, %210 : vector<8x64xf32>
    %c224 = arith.constant 224 : index
    %c0_79 = arith.constant 0 : index
    %212 = vector.load %arg3[%c224, %c0_79] : memref<576x96xf32, #tpu.memory_space<vmem>>, vector<64x32xf32>
    %cst_80 = arith.constant dense<0.000000e+00> : vector<8x32xf32>
    %213 = tpu.matmul %211, %212, %cst_80 {dimension_numbers = #tpu.dot_dimension_numbers<[1], [0], [0], [1], [0, 0, 1, 1], [], []>} : vector<8x64xf32>, vector<64x32xf32>, vector<8x32xf32> -> vector<8x32xf32>
    %c6 = arith.constant 6 : index
    %c0_81 = arith.constant 0 : index
    %214 = vector.load %arg4[%c6, %c0_81] : memref<26x96xf32, #tpu.memory_space<vmem>>, vector<1x32xf32>
    %215 = vector.broadcast %214 : vector<1x32xf32> to vector<8x32xf32>
    %216 = arith.addf %213, %215 : vector<8x32xf32>
    %c11 = arith.constant 11 : index
    %c0_82 = arith.constant 0 : index
    %217 = vector.load %arg4[%c11, %c0_82] : memref<26x96xf32, #tpu.memory_space<vmem>>, vector<1x32xf32>
    %c12 = arith.constant 12 : index
    %c0_83 = arith.constant 0 : index
    %218 = vector.load %arg4[%c12, %c0_83] : memref<26x96xf32, #tpu.memory_space<vmem>>, vector<1x32xf32>
    %219 = arith.addf %204, %216 : vector<8x32xf32>
    %cst_84 = arith.constant dense<0.000000e+00> : vector<8xf32>
    %220 = vector.multi_reduction <add>, %219, %cst_84 [1] : vector<8x32xf32> to vector<8xf32>
    %221 = vector.shape_cast %220 : vector<8xf32> to vector<8x1xf32>
    %cst_85 = arith.constant 3.200000e+01 : f32
    %222 = vector.broadcast %cst_85 : f32 to vector<8x1xf32>
    %223 = arith.divf %221, %222 : vector<8x1xf32>
    %224 = vector.broadcast %223 : vector<8x1xf32> to vector<8x32xf32>
    %225 = arith.subf %219, %224 : vector<8x32xf32>
    %226 = arith.mulf %225, %225 : vector<8x32xf32>
    %cst_86 = arith.constant dense<0.000000e+00> : vector<8xf32>
    %227 = vector.multi_reduction <add>, %226, %cst_86 [1] : vector<8x32xf32> to vector<8xf32>
    %228 = vector.shape_cast %227 : vector<8xf32> to vector<8x1xf32>
    %cst_87 = arith.constant 3.200000e+01 : f32
    %229 = vector.broadcast %cst_87 : f32 to vector<8x1xf32>
    %230 = arith.divf %228, %229 : vector<8x1xf32>
    %cst_88 = arith.constant 9.99999974E-6 : f32
    %231 = vector.broadcast %cst_88 : f32 to vector<8x1xf32>
    %232 = arith.addf %230, %231 : vector<8x1xf32>
    %233 = math.rsqrt %232 : vector<8x1xf32>
    %234 = vector.broadcast %233 : vector<8x1xf32> to vector<8x32xf32>
    %235 = arith.mulf %225, %234 : vector<8x32xf32>
    %236 = vector.broadcast %217 : vector<1x32xf32> to vector<8x32xf32>
    %237 = arith.mulf %235, %236 : vector<8x32xf32>
    %238 = vector.broadcast %218 : vector<1x32xf32> to vector<8x32xf32>
    %239 = arith.addf %237, %238 : vector<8x32xf32>
    %c288 = arith.constant 288 : index
    %c0_89 = arith.constant 0 : index
    %240 = vector.load %arg3[%c288, %c0_89] : memref<576x96xf32, #tpu.memory_space<vmem>>, vector<32x96xf32>
    %cst_90 = arith.constant dense<0.000000e+00> : vector<8x96xf32>
    %241 = tpu.matmul %239, %240, %cst_90 {dimension_numbers = #tpu.dot_dimension_numbers<[1], [0], [0], [1], [0, 0, 1, 1], [], []>} : vector<8x32xf32>, vector<32x96xf32>, vector<8x96xf32> -> vector<8x96xf32>
    %c13 = arith.constant 13 : index
    %c0_91 = arith.constant 0 : index
    %242 = vector.load %arg4[%c13, %c0_91] : memref<26x96xf32, #tpu.memory_space<vmem>>, vector<1x96xf32>
    %243 = vector.broadcast %242 : vector<1x96xf32> to vector<8x96xf32>
    %244 = arith.addf %241, %243 : vector<8x96xf32>
    %245 = vector.extract_strided_slice %244 {offsets = [0, 0], sizes = [8, 8], strides = [1, 1]} : vector<8x96xf32> to vector<8x8xf32>
    %246 = vector.extract_strided_slice %244 {offsets = [0, 32], sizes = [8, 8], strides = [1, 1]} : vector<8x96xf32> to vector<8x8xf32>
    %247 = vector.extract_strided_slice %244 {offsets = [0, 64], sizes = [8, 8], strides = [1, 1]} : vector<8x96xf32> to vector<8x8xf32>
    %cst_92 = arith.constant dense<0.000000e+00> : vector<8x8xf32>
    %248 = tpu.matmul %245, %246, %cst_92 {dimension_numbers = #tpu.dot_dimension_numbers<[1], [1], [0], [0], [0, 0, 1, 0], [], []>} : vector<8x8xf32>, vector<8x8xf32>, vector<8x8xf32> -> vector<8x8xf32>
    %cst_93 = arith.constant dense<0xFF800000> : vector<8xf32>
    %249 = vector.multi_reduction <maximumf>, %248, %cst_93 [1] : vector<8x8xf32> to vector<8xf32>
    %250 = vector.shape_cast %249 : vector<8xf32> to vector<8x1xf32>
    %251 = vector.broadcast %250 : vector<8x1xf32> to vector<8x8xf32>
    %252 = arith.subf %248, %251 : vector<8x8xf32>
    %253 = math.exp %252 : vector<8x8xf32>
    %cst_94 = arith.constant dense<0.000000e+00> : vector<8xf32>
    %254 = vector.multi_reduction <add>, %253, %cst_94 [1] : vector<8x8xf32> to vector<8xf32>
    %255 = vector.shape_cast %254 : vector<8xf32> to vector<8x1xf32>
    %cst_95 = arith.constant 1.000000e+00 : f32
    %256 = vector.broadcast %cst_95 : f32 to vector<8x1xf32>
    %257 = arith.divf %256, %255 : vector<8x1xf32>
    %cst_96 = arith.constant dense<0.000000e+00> : vector<8x8xf32>
    %258 = tpu.matmul %253, %247, %cst_96 {dimension_numbers = #tpu.dot_dimension_numbers<[1], [0], [0], [1], [0, 0, 1, 1], [], []>} : vector<8x8xf32>, vector<8x8xf32>, vector<8x8xf32> -> vector<8x8xf32>
    %259 = vector.broadcast %257 : vector<8x1xf32> to vector<8x8xf32>
    %260 = arith.mulf %258, %259 : vector<8x8xf32>
    %261 = vector.extract_strided_slice %244 {offsets = [0, 8], sizes = [8, 8], strides = [1, 1]} : vector<8x96xf32> to vector<8x8xf32>
    %262 = vector.extract_strided_slice %244 {offsets = [0, 40], sizes = [8, 8], strides = [1, 1]} : vector<8x96xf32> to vector<8x8xf32>
    %263 = vector.extract_strided_slice %244 {offsets = [0, 72], sizes = [8, 8], strides = [1, 1]} : vector<8x96xf32> to vector<8x8xf32>
    %cst_97 = arith.constant dense<0.000000e+00> : vector<8x8xf32>
    %264 = tpu.matmul %261, %262, %cst_97 {dimension_numbers = #tpu.dot_dimension_numbers<[1], [1], [0], [0], [0, 0, 1, 0], [], []>} : vector<8x8xf32>, vector<8x8xf32>, vector<8x8xf32> -> vector<8x8xf32>
    %cst_98 = arith.constant dense<0xFF800000> : vector<8xf32>
    %265 = vector.multi_reduction <maximumf>, %264, %cst_98 [1] : vector<8x8xf32> to vector<8xf32>
    %266 = vector.shape_cast %265 : vector<8xf32> to vector<8x1xf32>
    %267 = vector.broadcast %266 : vector<8x1xf32> to vector<8x8xf32>
    %268 = arith.subf %264, %267 : vector<8x8xf32>
    %269 = math.exp %268 : vector<8x8xf32>
    %cst_99 = arith.constant dense<0.000000e+00> : vector<8xf32>
    %270 = vector.multi_reduction <add>, %269, %cst_99 [1] : vector<8x8xf32> to vector<8xf32>
    %271 = vector.shape_cast %270 : vector<8xf32> to vector<8x1xf32>
    %cst_100 = arith.constant 1.000000e+00 : f32
    %272 = vector.broadcast %cst_100 : f32 to vector<8x1xf32>
    %273 = arith.divf %272, %271 : vector<8x1xf32>
    %cst_101 = arith.constant dense<0.000000e+00> : vector<8x8xf32>
    %274 = tpu.matmul %269, %263, %cst_101 {dimension_numbers = #tpu.dot_dimension_numbers<[1], [0], [0], [1], [0, 0, 1, 1], [], []>} : vector<8x8xf32>, vector<8x8xf32>, vector<8x8xf32> -> vector<8x8xf32>
    %275 = vector.broadcast %273 : vector<8x1xf32> to vector<8x8xf32>
    %276 = arith.mulf %274, %275 : vector<8x8xf32>
    %277 = vector.extract_strided_slice %244 {offsets = [0, 16], sizes = [8, 8], strides = [1, 1]} : vector<8x96xf32> to vector<8x8xf32>
    %278 = vector.extract_strided_slice %244 {offsets = [0, 48], sizes = [8, 8], strides = [1, 1]} : vector<8x96xf32> to vector<8x8xf32>
    %279 = vector.extract_strided_slice %244 {offsets = [0, 80], sizes = [8, 8], strides = [1, 1]} : vector<8x96xf32> to vector<8x8xf32>
    %cst_102 = arith.constant dense<0.000000e+00> : vector<8x8xf32>
    %280 = tpu.matmul %277, %278, %cst_102 {dimension_numbers = #tpu.dot_dimension_numbers<[1], [1], [0], [0], [0, 0, 1, 0], [], []>} : vector<8x8xf32>, vector<8x8xf32>, vector<8x8xf32> -> vector<8x8xf32>
    %cst_103 = arith.constant dense<0xFF800000> : vector<8xf32>
    %281 = vector.multi_reduction <maximumf>, %280, %cst_103 [1] : vector<8x8xf32> to vector<8xf32>
    %282 = vector.shape_cast %281 : vector<8xf32> to vector<8x1xf32>
    %283 = vector.broadcast %282 : vector<8x1xf32> to vector<8x8xf32>
    %284 = arith.subf %280, %283 : vector<8x8xf32>
    %285 = math.exp %284 : vector<8x8xf32>
    %cst_104 = arith.constant dense<0.000000e+00> : vector<8xf32>
    %286 = vector.multi_reduction <add>, %285, %cst_104 [1] : vector<8x8xf32> to vector<8xf32>
    %287 = vector.shape_cast %286 : vector<8xf32> to vector<8x1xf32>
    %cst_105 = arith.constant 1.000000e+00 : f32
    %288 = vector.broadcast %cst_105 : f32 to vector<8x1xf32>
    %289 = arith.divf %288, %287 : vector<8x1xf32>
    %cst_106 = arith.constant dense<0.000000e+00> : vector<8x8xf32>
    %290 = tpu.matmul %285, %279, %cst_106 {dimension_numbers = #tpu.dot_dimension_numbers<[1], [0], [0], [1], [0, 0, 1, 1], [], []>} : vector<8x8xf32>, vector<8x8xf32>, vector<8x8xf32> -> vector<8x8xf32>
    %291 = vector.broadcast %289 : vector<8x1xf32> to vector<8x8xf32>
    %292 = arith.mulf %290, %291 : vector<8x8xf32>
    %293 = vector.extract_strided_slice %244 {offsets = [0, 24], sizes = [8, 8], strides = [1, 1]} : vector<8x96xf32> to vector<8x8xf32>
    %294 = vector.extract_strided_slice %244 {offsets = [0, 56], sizes = [8, 8], strides = [1, 1]} : vector<8x96xf32> to vector<8x8xf32>
    %295 = vector.extract_strided_slice %244 {offsets = [0, 88], sizes = [8, 8], strides = [1, 1]} : vector<8x96xf32> to vector<8x8xf32>
    %cst_107 = arith.constant dense<0.000000e+00> : vector<8x8xf32>
    %296 = tpu.matmul %293, %294, %cst_107 {dimension_numbers = #tpu.dot_dimension_numbers<[1], [1], [0], [0], [0, 0, 1, 0], [], []>} : vector<8x8xf32>, vector<8x8xf32>, vector<8x8xf32> -> vector<8x8xf32>
    %cst_108 = arith.constant dense<0xFF800000> : vector<8xf32>
    %297 = vector.multi_reduction <maximumf>, %296, %cst_108 [1] : vector<8x8xf32> to vector<8xf32>
    %298 = vector.shape_cast %297 : vector<8xf32> to vector<8x1xf32>
    %299 = vector.broadcast %298 : vector<8x1xf32> to vector<8x8xf32>
    %300 = arith.subf %296, %299 : vector<8x8xf32>
    %301 = math.exp %300 : vector<8x8xf32>
    %cst_109 = arith.constant dense<0.000000e+00> : vector<8xf32>
    %302 = vector.multi_reduction <add>, %301, %cst_109 [1] : vector<8x8xf32> to vector<8xf32>
    %303 = vector.shape_cast %302 : vector<8xf32> to vector<8x1xf32>
    %cst_110 = arith.constant 1.000000e+00 : f32
    %304 = vector.broadcast %cst_110 : f32 to vector<8x1xf32>
    %305 = arith.divf %304, %303 : vector<8x1xf32>
    %cst_111 = arith.constant dense<0.000000e+00> : vector<8x8xf32>
    %306 = tpu.matmul %301, %295, %cst_111 {dimension_numbers = #tpu.dot_dimension_numbers<[1], [0], [0], [1], [0, 0, 1, 1], [], []>} : vector<8x8xf32>, vector<8x8xf32>, vector<8x8xf32> -> vector<8x8xf32>
    %307 = vector.broadcast %305 : vector<8x1xf32> to vector<8x8xf32>
    %308 = arith.mulf %306, %307 : vector<8x8xf32>
    %309 = tpu.concatenate %260, %276, %292, %308 in 1 : vector<8x8xf32>, vector<8x8xf32>, vector<8x8xf32>, vector<8x8xf32> -> vector<8x32xf32>
    %c320 = arith.constant 320 : index
    %c0_112 = arith.constant 0 : index
    %310 = vector.load %arg3[%c320, %c0_112] : memref<576x96xf32, #tpu.memory_space<vmem>>, vector<32x32xf32>
    %cst_113 = arith.constant dense<0.000000e+00> : vector<8x32xf32>
    %311 = tpu.matmul %309, %310, %cst_113 {dimension_numbers = #tpu.dot_dimension_numbers<[1], [0], [0], [1], [0, 0, 1, 1], [], []>} : vector<8x32xf32>, vector<32x32xf32>, vector<8x32xf32> -> vector<8x32xf32>
    %c14 = arith.constant 14 : index
    %c0_114 = arith.constant 0 : index
    %312 = vector.load %arg4[%c14, %c0_114] : memref<26x96xf32, #tpu.memory_space<vmem>>, vector<1x32xf32>
    %313 = vector.broadcast %312 : vector<1x32xf32> to vector<8x32xf32>
    %314 = arith.addf %311, %313 : vector<8x32xf32>
    %c20 = arith.constant 20 : index
    %c0_115 = arith.constant 0 : index
    %315 = vector.load %arg4[%c20, %c0_115] : memref<26x96xf32, #tpu.memory_space<vmem>>, vector<1x32xf32>
    %c21 = arith.constant 21 : index
    %c0_116 = arith.constant 0 : index
    %316 = vector.load %arg4[%c21, %c0_116] : memref<26x96xf32, #tpu.memory_space<vmem>>, vector<1x32xf32>
    %317 = arith.addf %239, %314 : vector<8x32xf32>
    %cst_117 = arith.constant dense<0.000000e+00> : vector<8xf32>
    %318 = vector.multi_reduction <add>, %317, %cst_117 [1] : vector<8x32xf32> to vector<8xf32>
    %319 = vector.shape_cast %318 : vector<8xf32> to vector<8x1xf32>
    %cst_118 = arith.constant 3.200000e+01 : f32
    %320 = vector.broadcast %cst_118 : f32 to vector<8x1xf32>
    %321 = arith.divf %319, %320 : vector<8x1xf32>
    %322 = vector.broadcast %321 : vector<8x1xf32> to vector<8x32xf32>
    %323 = arith.subf %317, %322 : vector<8x32xf32>
    %324 = arith.mulf %323, %323 : vector<8x32xf32>
    %cst_119 = arith.constant dense<0.000000e+00> : vector<8xf32>
    %325 = vector.multi_reduction <add>, %324, %cst_119 [1] : vector<8x32xf32> to vector<8xf32>
    %326 = vector.shape_cast %325 : vector<8xf32> to vector<8x1xf32>
    %cst_120 = arith.constant 3.200000e+01 : f32
    %327 = vector.broadcast %cst_120 : f32 to vector<8x1xf32>
    %328 = arith.divf %326, %327 : vector<8x1xf32>
    %cst_121 = arith.constant 9.99999974E-6 : f32
    %329 = vector.broadcast %cst_121 : f32 to vector<8x1xf32>
    %330 = arith.addf %328, %329 : vector<8x1xf32>
    %331 = math.rsqrt %330 : vector<8x1xf32>
    %332 = vector.broadcast %331 : vector<8x1xf32> to vector<8x32xf32>
    %333 = arith.mulf %323, %332 : vector<8x32xf32>
    %334 = vector.broadcast %315 : vector<1x32xf32> to vector<8x32xf32>
    %335 = arith.mulf %333, %334 : vector<8x32xf32>
    %336 = vector.broadcast %316 : vector<1x32xf32> to vector<8x32xf32>
    %337 = arith.addf %335, %336 : vector<8x32xf32>
    %c352 = arith.constant 352 : index
    %c0_122 = arith.constant 0 : index
    %338 = vector.load %arg3[%c352, %c0_122] : memref<576x96xf32, #tpu.memory_space<vmem>>, vector<32x32xf32>
    %cst_123 = arith.constant dense<0.000000e+00> : vector<8x32xf32>
    %339 = tpu.matmul %337, %338, %cst_123 {dimension_numbers = #tpu.dot_dimension_numbers<[1], [0], [0], [1], [0, 0, 1, 1], [], []>} : vector<8x32xf32>, vector<32x32xf32>, vector<8x32xf32> -> vector<8x32xf32>
    %c15 = arith.constant 15 : index
    %c0_124 = arith.constant 0 : index
    %340 = vector.load %arg4[%c15, %c0_124] : memref<26x96xf32, #tpu.memory_space<vmem>>, vector<1x32xf32>
    %341 = vector.broadcast %340 : vector<1x32xf32> to vector<8x32xf32>
    %342 = arith.addf %339, %341 : vector<8x32xf32>
    %c384 = arith.constant 384 : index
    %c0_125 = arith.constant 0 : index
    %343 = vector.load %arg3[%c384, %c0_125] : memref<576x96xf32, #tpu.memory_space<vmem>>, vector<64x64xf32>
    %cst_126 = arith.constant dense<0.000000e+00> : vector<10x64xf32>
    %344 = tpu.matmul %3, %343, %cst_126 {dimension_numbers = #tpu.dot_dimension_numbers<[1], [0], [0], [1], [0, 0, 1, 1], [], []>} : vector<10x64xf32>, vector<64x64xf32>, vector<10x64xf32> -> vector<10x64xf32>
    %c16 = arith.constant 16 : index
    %c0_127 = arith.constant 0 : index
    %345 = vector.load %arg4[%c16, %c0_127] : memref<26x96xf32, #tpu.memory_space<vmem>>, vector<1x64xf32>
    %346 = vector.broadcast %345 : vector<1x64xf32> to vector<10x64xf32>
    %347 = arith.addf %344, %346 : vector<10x64xf32>
    %348 = vector.extract_strided_slice %342 {offsets = [0, 0], sizes = [8, 8], strides = [1, 1]} : vector<8x32xf32> to vector<8x8xf32>
    %349 = vector.extract_strided_slice %347 {offsets = [0, 0], sizes = [10, 8], strides = [1, 1]} : vector<10x64xf32> to vector<10x8xf32>
    %350 = vector.extract_strided_slice %347 {offsets = [0, 32], sizes = [10, 8], strides = [1, 1]} : vector<10x64xf32> to vector<10x8xf32>
    %cst_128 = arith.constant dense<0.000000e+00> : vector<8x10xf32>
    %351 = tpu.matmul %348, %349, %cst_128 {dimension_numbers = #tpu.dot_dimension_numbers<[1], [1], [0], [0], [0, 0, 1, 0], [], []>} : vector<8x8xf32>, vector<10x8xf32>, vector<8x10xf32> -> vector<8x10xf32>
    %cst_129 = arith.constant dense<0xFF800000> : vector<8xf32>
    %352 = vector.multi_reduction <maximumf>, %351, %cst_129 [1] : vector<8x10xf32> to vector<8xf32>
    %353 = vector.shape_cast %352 : vector<8xf32> to vector<8x1xf32>
    %354 = vector.broadcast %353 : vector<8x1xf32> to vector<8x10xf32>
    %355 = arith.subf %351, %354 : vector<8x10xf32>
    %356 = math.exp %355 : vector<8x10xf32>
    %cst_130 = arith.constant dense<0.000000e+00> : vector<8xf32>
    %357 = vector.multi_reduction <add>, %356, %cst_130 [1] : vector<8x10xf32> to vector<8xf32>
    %358 = vector.shape_cast %357 : vector<8xf32> to vector<8x1xf32>
    %cst_131 = arith.constant 1.000000e+00 : f32
    %359 = vector.broadcast %cst_131 : f32 to vector<8x1xf32>
    %360 = arith.divf %359, %358 : vector<8x1xf32>
    %cst_132 = arith.constant dense<0.000000e+00> : vector<8x8xf32>
    %361 = tpu.matmul %356, %350, %cst_132 {dimension_numbers = #tpu.dot_dimension_numbers<[1], [0], [0], [1], [0, 0, 1, 1], [], []>} : vector<8x10xf32>, vector<10x8xf32>, vector<8x8xf32> -> vector<8x8xf32>
    %362 = vector.broadcast %360 : vector<8x1xf32> to vector<8x8xf32>
    %363 = arith.mulf %361, %362 : vector<8x8xf32>
    %364 = vector.extract_strided_slice %342 {offsets = [0, 8], sizes = [8, 8], strides = [1, 1]} : vector<8x32xf32> to vector<8x8xf32>
    %365 = vector.extract_strided_slice %347 {offsets = [0, 8], sizes = [10, 8], strides = [1, 1]} : vector<10x64xf32> to vector<10x8xf32>
    %366 = vector.extract_strided_slice %347 {offsets = [0, 40], sizes = [10, 8], strides = [1, 1]} : vector<10x64xf32> to vector<10x8xf32>
    %cst_133 = arith.constant dense<0.000000e+00> : vector<8x10xf32>
    %367 = tpu.matmul %364, %365, %cst_133 {dimension_numbers = #tpu.dot_dimension_numbers<[1], [1], [0], [0], [0, 0, 1, 0], [], []>} : vector<8x8xf32>, vector<10x8xf32>, vector<8x10xf32> -> vector<8x10xf32>
    %cst_134 = arith.constant dense<0xFF800000> : vector<8xf32>
    %368 = vector.multi_reduction <maximumf>, %367, %cst_134 [1] : vector<8x10xf32> to vector<8xf32>
    %369 = vector.shape_cast %368 : vector<8xf32> to vector<8x1xf32>
    %370 = vector.broadcast %369 : vector<8x1xf32> to vector<8x10xf32>
    %371 = arith.subf %367, %370 : vector<8x10xf32>
    %372 = math.exp %371 : vector<8x10xf32>
    %cst_135 = arith.constant dense<0.000000e+00> : vector<8xf32>
    %373 = vector.multi_reduction <add>, %372, %cst_135 [1] : vector<8x10xf32> to vector<8xf32>
    %374 = vector.shape_cast %373 : vector<8xf32> to vector<8x1xf32>
    %cst_136 = arith.constant 1.000000e+00 : f32
    %375 = vector.broadcast %cst_136 : f32 to vector<8x1xf32>
    %376 = arith.divf %375, %374 : vector<8x1xf32>
    %cst_137 = arith.constant dense<0.000000e+00> : vector<8x8xf32>
    %377 = tpu.matmul %372, %366, %cst_137 {dimension_numbers = #tpu.dot_dimension_numbers<[1], [0], [0], [1], [0, 0, 1, 1], [], []>} : vector<8x10xf32>, vector<10x8xf32>, vector<8x8xf32> -> vector<8x8xf32>
    %378 = vector.broadcast %376 : vector<8x1xf32> to vector<8x8xf32>
    %379 = arith.mulf %377, %378 : vector<8x8xf32>
    %380 = vector.extract_strided_slice %342 {offsets = [0, 16], sizes = [8, 8], strides = [1, 1]} : vector<8x32xf32> to vector<8x8xf32>
    %381 = vector.extract_strided_slice %347 {offsets = [0, 16], sizes = [10, 8], strides = [1, 1]} : vector<10x64xf32> to vector<10x8xf32>
    %382 = vector.extract_strided_slice %347 {offsets = [0, 48], sizes = [10, 8], strides = [1, 1]} : vector<10x64xf32> to vector<10x8xf32>
    %cst_138 = arith.constant dense<0.000000e+00> : vector<8x10xf32>
    %383 = tpu.matmul %380, %381, %cst_138 {dimension_numbers = #tpu.dot_dimension_numbers<[1], [1], [0], [0], [0, 0, 1, 0], [], []>} : vector<8x8xf32>, vector<10x8xf32>, vector<8x10xf32> -> vector<8x10xf32>
    %cst_139 = arith.constant dense<0xFF800000> : vector<8xf32>
    %384 = vector.multi_reduction <maximumf>, %383, %cst_139 [1] : vector<8x10xf32> to vector<8xf32>
    %385 = vector.shape_cast %384 : vector<8xf32> to vector<8x1xf32>
    %386 = vector.broadcast %385 : vector<8x1xf32> to vector<8x10xf32>
    %387 = arith.subf %383, %386 : vector<8x10xf32>
    %388 = math.exp %387 : vector<8x10xf32>
    %cst_140 = arith.constant dense<0.000000e+00> : vector<8xf32>
    %389 = vector.multi_reduction <add>, %388, %cst_140 [1] : vector<8x10xf32> to vector<8xf32>
    %390 = vector.shape_cast %389 : vector<8xf32> to vector<8x1xf32>
    %cst_141 = arith.constant 1.000000e+00 : f32
    %391 = vector.broadcast %cst_141 : f32 to vector<8x1xf32>
    %392 = arith.divf %391, %390 : vector<8x1xf32>
    %cst_142 = arith.constant dense<0.000000e+00> : vector<8x8xf32>
    %393 = tpu.matmul %388, %382, %cst_142 {dimension_numbers = #tpu.dot_dimension_numbers<[1], [0], [0], [1], [0, 0, 1, 1], [], []>} : vector<8x10xf32>, vector<10x8xf32>, vector<8x8xf32> -> vector<8x8xf32>
    %394 = vector.broadcast %392 : vector<8x1xf32> to vector<8x8xf32>
    %395 = arith.mulf %393, %394 : vector<8x8xf32>
    %396 = vector.extract_strided_slice %342 {offsets = [0, 24], sizes = [8, 8], strides = [1, 1]} : vector<8x32xf32> to vector<8x8xf32>
    %397 = vector.extract_strided_slice %347 {offsets = [0, 24], sizes = [10, 8], strides = [1, 1]} : vector<10x64xf32> to vector<10x8xf32>
    %398 = vector.extract_strided_slice %347 {offsets = [0, 56], sizes = [10, 8], strides = [1, 1]} : vector<10x64xf32> to vector<10x8xf32>
    %cst_143 = arith.constant dense<0.000000e+00> : vector<8x10xf32>
    %399 = tpu.matmul %396, %397, %cst_143 {dimension_numbers = #tpu.dot_dimension_numbers<[1], [1], [0], [0], [0, 0, 1, 0], [], []>} : vector<8x8xf32>, vector<10x8xf32>, vector<8x10xf32> -> vector<8x10xf32>
    %cst_144 = arith.constant dense<0xFF800000> : vector<8xf32>
    %400 = vector.multi_reduction <maximumf>, %399, %cst_144 [1] : vector<8x10xf32> to vector<8xf32>
    %401 = vector.shape_cast %400 : vector<8xf32> to vector<8x1xf32>
    %402 = vector.broadcast %401 : vector<8x1xf32> to vector<8x10xf32>
    %403 = arith.subf %399, %402 : vector<8x10xf32>
    %404 = math.exp %403 : vector<8x10xf32>
    %cst_145 = arith.constant dense<0.000000e+00> : vector<8xf32>
    %405 = vector.multi_reduction <add>, %404, %cst_145 [1] : vector<8x10xf32> to vector<8xf32>
    %406 = vector.shape_cast %405 : vector<8xf32> to vector<8x1xf32>
    %cst_146 = arith.constant 1.000000e+00 : f32
    %407 = vector.broadcast %cst_146 : f32 to vector<8x1xf32>
    %408 = arith.divf %407, %406 : vector<8x1xf32>
    %cst_147 = arith.constant dense<0.000000e+00> : vector<8x8xf32>
    %409 = tpu.matmul %404, %398, %cst_147 {dimension_numbers = #tpu.dot_dimension_numbers<[1], [0], [0], [1], [0, 0, 1, 1], [], []>} : vector<8x10xf32>, vector<10x8xf32>, vector<8x8xf32> -> vector<8x8xf32>
    %410 = vector.broadcast %408 : vector<8x1xf32> to vector<8x8xf32>
    %411 = arith.mulf %409, %410 : vector<8x8xf32>
    %412 = tpu.concatenate %363, %379, %395, %411 in 1 : vector<8x8xf32>, vector<8x8xf32>, vector<8x8xf32>, vector<8x8xf32> -> vector<8x32xf32>
    %c448 = arith.constant 448 : index
    %c0_148 = arith.constant 0 : index
    %413 = vector.load %arg3[%c448, %c0_148] : memref<576x96xf32, #tpu.memory_space<vmem>>, vector<32x32xf32>
    %cst_149 = arith.constant dense<0.000000e+00> : vector<8x32xf32>
    %414 = tpu.matmul %412, %413, %cst_149 {dimension_numbers = #tpu.dot_dimension_numbers<[1], [0], [0], [1], [0, 0, 1, 1], [], []>} : vector<8x32xf32>, vector<32x32xf32>, vector<8x32xf32> -> vector<8x32xf32>
    %c17 = arith.constant 17 : index
    %c0_150 = arith.constant 0 : index
    %415 = vector.load %arg4[%c17, %c0_150] : memref<26x96xf32, #tpu.memory_space<vmem>>, vector<1x32xf32>
    %416 = vector.broadcast %415 : vector<1x32xf32> to vector<8x32xf32>
    %417 = arith.addf %414, %416 : vector<8x32xf32>
    %c22 = arith.constant 22 : index
    %c0_151 = arith.constant 0 : index
    %418 = vector.load %arg4[%c22, %c0_151] : memref<26x96xf32, #tpu.memory_space<vmem>>, vector<1x32xf32>
    %c23 = arith.constant 23 : index
    %c0_152 = arith.constant 0 : index
    %419 = vector.load %arg4[%c23, %c0_152] : memref<26x96xf32, #tpu.memory_space<vmem>>, vector<1x32xf32>
    %420 = arith.addf %337, %417 : vector<8x32xf32>
    %cst_153 = arith.constant dense<0.000000e+00> : vector<8xf32>
    %421 = vector.multi_reduction <add>, %420, %cst_153 [1] : vector<8x32xf32> to vector<8xf32>
    %422 = vector.shape_cast %421 : vector<8xf32> to vector<8x1xf32>
    %cst_154 = arith.constant 3.200000e+01 : f32
    %423 = vector.broadcast %cst_154 : f32 to vector<8x1xf32>
    %424 = arith.divf %422, %423 : vector<8x1xf32>
    %425 = vector.broadcast %424 : vector<8x1xf32> to vector<8x32xf32>
    %426 = arith.subf %420, %425 : vector<8x32xf32>
    %427 = arith.mulf %426, %426 : vector<8x32xf32>
    %cst_155 = arith.constant dense<0.000000e+00> : vector<8xf32>
    %428 = vector.multi_reduction <add>, %427, %cst_155 [1] : vector<8x32xf32> to vector<8xf32>
    %429 = vector.shape_cast %428 : vector<8xf32> to vector<8x1xf32>
    %cst_156 = arith.constant 3.200000e+01 : f32
    %430 = vector.broadcast %cst_156 : f32 to vector<8x1xf32>
    %431 = arith.divf %429, %430 : vector<8x1xf32>
    %cst_157 = arith.constant 9.99999974E-6 : f32
    %432 = vector.broadcast %cst_157 : f32 to vector<8x1xf32>
    %433 = arith.addf %431, %432 : vector<8x1xf32>
    %434 = math.rsqrt %433 : vector<8x1xf32>
    %435 = vector.broadcast %434 : vector<8x1xf32> to vector<8x32xf32>
    %436 = arith.mulf %426, %435 : vector<8x32xf32>
    %437 = vector.broadcast %418 : vector<1x32xf32> to vector<8x32xf32>
    %438 = arith.mulf %436, %437 : vector<8x32xf32>
    %439 = vector.broadcast %419 : vector<1x32xf32> to vector<8x32xf32>
    %440 = arith.addf %438, %439 : vector<8x32xf32>
    %c480 = arith.constant 480 : index
    %c0_158 = arith.constant 0 : index
    %441 = vector.load %arg3[%c480, %c0_158] : memref<576x96xf32, #tpu.memory_space<vmem>>, vector<32x64xf32>
    %cst_159 = arith.constant dense<0.000000e+00> : vector<8x64xf32>
    %442 = tpu.matmul %440, %441, %cst_159 {dimension_numbers = #tpu.dot_dimension_numbers<[1], [0], [0], [1], [0, 0, 1, 1], [], []>} : vector<8x32xf32>, vector<32x64xf32>, vector<8x64xf32> -> vector<8x64xf32>
    %c18 = arith.constant 18 : index
    %c0_160 = arith.constant 0 : index
    %443 = vector.load %arg4[%c18, %c0_160] : memref<26x96xf32, #tpu.memory_space<vmem>>, vector<1x64xf32>
    %444 = vector.broadcast %443 : vector<1x64xf32> to vector<8x64xf32>
    %445 = arith.addf %442, %444 : vector<8x64xf32>
    %cst_161 = arith.constant 0.000000e+00 : f32
    %446 = vector.broadcast %cst_161 : f32 to vector<8x64xf32>
    %447 = arith.maximumf %445, %446 : vector<8x64xf32>
    %c512 = arith.constant 512 : index
    %c0_162 = arith.constant 0 : index
    %448 = vector.load %arg3[%c512, %c0_162] : memref<576x96xf32, #tpu.memory_space<vmem>>, vector<64x32xf32>
    %cst_163 = arith.constant dense<0.000000e+00> : vector<8x32xf32>
    %449 = tpu.matmul %447, %448, %cst_163 {dimension_numbers = #tpu.dot_dimension_numbers<[1], [0], [0], [1], [0, 0, 1, 1], [], []>} : vector<8x64xf32>, vector<64x32xf32>, vector<8x32xf32> -> vector<8x32xf32>
    %c19 = arith.constant 19 : index
    %c0_164 = arith.constant 0 : index
    %450 = vector.load %arg4[%c19, %c0_164] : memref<26x96xf32, #tpu.memory_space<vmem>>, vector<1x32xf32>
    %451 = vector.broadcast %450 : vector<1x32xf32> to vector<8x32xf32>
    %452 = arith.addf %449, %451 : vector<8x32xf32>
    %c24 = arith.constant 24 : index
    %c0_165 = arith.constant 0 : index
    %453 = vector.load %arg4[%c24, %c0_165] : memref<26x96xf32, #tpu.memory_space<vmem>>, vector<1x32xf32>
    %c25 = arith.constant 25 : index
    %c0_166 = arith.constant 0 : index
    %454 = vector.load %arg4[%c25, %c0_166] : memref<26x96xf32, #tpu.memory_space<vmem>>, vector<1x32xf32>
    %455 = arith.addf %440, %452 : vector<8x32xf32>
    %cst_167 = arith.constant dense<0.000000e+00> : vector<8xf32>
    %456 = vector.multi_reduction <add>, %455, %cst_167 [1] : vector<8x32xf32> to vector<8xf32>
    %457 = vector.shape_cast %456 : vector<8xf32> to vector<8x1xf32>
    %cst_168 = arith.constant 3.200000e+01 : f32
    %458 = vector.broadcast %cst_168 : f32 to vector<8x1xf32>
    %459 = arith.divf %457, %458 : vector<8x1xf32>
    %460 = vector.broadcast %459 : vector<8x1xf32> to vector<8x32xf32>
    %461 = arith.subf %455, %460 : vector<8x32xf32>
    %462 = arith.mulf %461, %461 : vector<8x32xf32>
    %cst_169 = arith.constant dense<0.000000e+00> : vector<8xf32>
    %463 = vector.multi_reduction <add>, %462, %cst_169 [1] : vector<8x32xf32> to vector<8xf32>
    %464 = vector.shape_cast %463 : vector<8xf32> to vector<8x1xf32>
    %cst_170 = arith.constant 3.200000e+01 : f32
    %465 = vector.broadcast %cst_170 : f32 to vector<8x1xf32>
    %466 = arith.divf %464, %465 : vector<8x1xf32>
    %cst_171 = arith.constant 9.99999974E-6 : f32
    %467 = vector.broadcast %cst_171 : f32 to vector<8x1xf32>
    %468 = arith.addf %466, %467 : vector<8x1xf32>
    %469 = math.rsqrt %468 : vector<8x1xf32>
    %470 = vector.broadcast %469 : vector<8x1xf32> to vector<8x32xf32>
    %471 = arith.mulf %461, %470 : vector<8x32xf32>
    %472 = vector.broadcast %453 : vector<1x32xf32> to vector<8x32xf32>
    %473 = arith.mulf %471, %472 : vector<8x32xf32>
    %474 = vector.broadcast %454 : vector<1x32xf32> to vector<8x32xf32>
    %475 = arith.addf %473, %474 : vector<8x32xf32>
    %476 = vector.shape_cast %475 : vector<8x32xf32> to vector<1x8x32xf32>
    %c0_172 = arith.constant 0 : index
    %c0_173 = arith.constant 0 : index
    %c0_174 = arith.constant 0 : index
    %477 = vector.load %arg5[%c0_172, %c0_173, %c0_174] : memref<1x8x32xf32, #tpu.memory_space<vmem>>, vector<1x8x32xf32>
    tpu.vector_store %arg5[%c0_172, %c0_173, %c0_174], %476 {strides = array<i32>} : memref<1x8x32xf32, #tpu.memory_space<vmem>>, vector<1x8x32xf32>,
    return
  }
  func.func @transform_0(%arg0: i32) -> (i32, i32, i32) {
    %c0_i32 = arith.constant 0 : i32
    %c0_i32_0 = arith.constant 0 : i32
    %c0_i32_1 = arith.constant 0 : i32
    return %arg0, %c0_i32, %c0_i32_0 : i32, i32, i32
  }
  func.func @transform_1(%arg0: i32) -> (i32, i32, i32) {
    %c0_i32 = arith.constant 0 : i32
    %c0_i32_0 = arith.constant 0 : i32
    %c0_i32_1 = arith.constant 0 : i32
    return %arg0, %c0_i32, %c0_i32_0 : i32, i32, i32
  }
  func.func @transform_2(%arg0: i32) -> (i32, i32) {
    %c0_i32 = arith.constant 0 : i32
    %c0_i32_0 = arith.constant 0 : i32
    %c0_i32_1 = arith.constant 0 : i32
    return %c0_i32, %c0_i32_0 : i32, i32
  }
  func.func @transform_3(%arg0: i32) -> (i32, i32) {
    %c0_i32 = arith.constant 0 : i32
    %c0_i32_0 = arith.constant 0 : i32
    %c0_i32_1 = arith.constant 0 : i32
    return %c0_i32, %c0_i32_0 : i32, i32
  }
  func.func @transform_4(%arg0: i32) -> (i32, i32, i32) {
    %c0_i32 = arith.constant 0 : i32
    %c0_i32_0 = arith.constant 0 : i32
    %c0_i32_1 = arith.constant 0 : i32
    return %arg0, %c0_i32, %c0_i32_0 : i32, i32, i32
  }
}

</mosaic_0001>

<llo_original>
// kernel: tpu_custom_call.1
$region0: #{tpu_custom_call.1}
  #allocation0 [shape = 'u32[]', space=smem, size = 0x4, offset = 0x4, fixed_abs, tag = 'smem constant byte address 0x4 - core index']
  #allocation1 [shape = 'u32[144,128]{1,0:T(1,128)}', space=vmem, size = 0x12000, scoped, tag = 'internal scratch']
  %s0 = inlined_call_operand.vmem [shape: f32[2,8,32], index: 0, kind: input, shape index: {}]
  %s1 = inlined_call_operand.vmem [shape: f32[2,10,64], index: 1, kind: input, shape index: {}]
  %s2 = inlined_call_operand.vmem [shape: f32[576,96], index: 2, kind: input, shape index: {}]
  %s3 = inlined_call_operand.vmem [shape: f32[26,96], index: 3, kind: input, shape index: {}]
  %s4 = inlined_call_operand.hbm [shape: f32[2,8,32], index: 4, kind: output, shape index: {}]
  %s5 = sld [smem:[#allocation0]]
  $region49: #{tpu_custom_call.1} parent=0
    _
  %s7 = ssub.s32 1, %s5
  %s8 = scalar_select 0, %s7, %s5
  $region1: #{tpu_custom_call.1} parent=0
    #allocation2 [shape = 'u8[8192]{0}', space=vmem, size = 0x2000, scoped, tag = 'output window, operand 0']
    #allocation3 [shape = 's32[2]{0}', space=sflag, size = 0x8, scoped, tag = 'scoped memory for tpu_custom_call.1']
    %9 = vsyncpa [#allocation3], 0
    %s10 = scalar_lea.sflag [#allocation3], 1
    %11 = vsyncpa %s10, 0
    loop: start=0, step=1, limit=4
    $region2: #{tpu_custom_call.1} parent=1 // loop_pre_header
      _
    $region3: #{tpu_custom_call.1} parent=1 // loop_header
      %s13 = sphi 0, %s17
      %p14 = scmp.ge.s32.totalorder %s13, 4
      %s23 = sphi 0, %s25
      %s26 = sphi 0, %s23
      %s27 = sphi 0, %s26
      %s43 = sphi 0, %s27
      %s49 = sphi 0, %s51
      %s52 = sphi 0, %s49
      %s53 = sphi 0, %s52
      %s69 = sphi 0, %s53
      %s73 = sphi 0, %s73
      %s75 = sphi 0, %s73
      %s76 = sphi 0, %s75
      %s90 = sphi 0, %s76
      %s94 = sphi 0, %s94
      %s96 = sphi 0, %s94
      %s97 = sphi 0, %s96
      %s111 = sphi 0, %s97
      %s117 = sphi 0, %s119
      %s120 = sphi 0, %s117
      %s121 = sphi 0, %s120
      %s137 = sphi 0, %s121
    $region4: #{tpu_custom_call.1} parent=1 // loop_header_branch
      %16 = sbr.rel (%p14) target = $region8
    $region5: #{tpu_custom_call.1} parent=1 // loop_body
      %s18 = ssub.s32 %s13, 1
      %s19 = ssub.s32 %s13, 2
      %s20 = sadd.s32 %s13, 1
      %s21 = ssub.s32 %s13, %s20
      %p22 = scmp.eq.s32.totalorder %s21, 0
      %s24 = sadd.s32 %s23, 1
      %s25 = scalar_select %p22, %s23, %s24
      %p28 = pneg %p22
      %p29 = scmp.eq.s32.totalorder %s13, 1
      %p30 = por %p28, %p29
      %p31 = scmp.ne.s32.totalorder %s23, %s26
      %p32 = scmp.eq.s32.totalorder %s13, 0
      %p33 = por %p31, %p32
      %p34 = scmp.ne.s32.totalorder %s23, %s26
      %p35 = scmp.eq.s32.totalorder %s18, 1
      %p36 = por %p34, %p35
      %p37 = scmp.ne.s32.totalorder %s26, %s27
      %p38 = scmp.eq.s32.totalorder %s18, 0
      %p39 = por %p37, %p38
      %p40 = scmp.ne.s32.totalorder %s26, %s27
      %p41 = scmp.eq.s32.totalorder %s19, 1
      %p42 = por %p40, %p41
      %p44 = scmp.ne.s32.totalorder %s27, %s43
      %p45 = scmp.eq.s32.totalorder %s19, 0
      %p46 = por %p44, %p45
      %s47 = ssub.s32 %s13, %s20
      %p48 = scmp.eq.s32.totalorder %s47, 0
      %s50 = sadd.s32 %s49, 1
      %s51 = scalar_select %p48, %s49, %s50
      %p54 = pneg %p48
      %p55 = scmp.eq.s32.totalorder %s13, 1
      %p56 = por %p54, %p55
      %p57 = scmp.ne.s32.totalorder %s49, %s52
      %p58 = scmp.eq.s32.totalorder %s13, 0
      %p59 = por %p57, %p58
      %p60 = scmp.ne.s32.totalorder %s49, %s52
      %p61 = scmp.eq.s32.totalorder %s18, 1
      %p62 = por %p60, %p61
      %p63 = scmp.ne.s32.totalorder %s52, %s53
      %p64 = scmp.eq.s32.totalorder %s18, 0
      %p65 = por %p63, %p64
      %p66 = scmp.ne.s32.totalorder %s52, %s53
      %p67 = scmp.eq.s32.totalorder %s19, 1
      %p68 = por %p66, %p67
      %p70 = scmp.ne.s32.totalorder %s53, %s69
      %p71 = scmp.eq.s32.totalorder %s19, 0
      %p72 = por %p70, %p71
      %s74 = sadd.s32 %s73, 1
      %p77 = scmp.eq.s32.totalorder %s13, 1
      %p78 = scmp.ne.s32.totalorder %s73, %s75
      %p79 = scmp.eq.s32.totalorder %s13, 0
      %p80 = por %p78, %p79
      %p81 = scmp.ne.s32.totalorder %s73, %s75
      %p82 = scmp.eq.s32.totalorder %s18, 1
      %p83 = por %p81, %p82
      %p84 = scmp.ne.s32.totalorder %s75, %s76
      %p85 = scmp.eq.s32.totalorder %s18, 0
      %p86 = por %p84, %p85
      %p87 = scmp.ne.s32.totalorder %s75, %s76
      %p88 = scmp.eq.s32.totalorder %s19, 1
      %p89 = por %p87, %p88
      %p91 = scmp.ne.s32.totalorder %s76, %s90
      %p92 = scmp.eq.s32.totalorder %s19, 0
      %p93 = por %p91, %p92
      %s95 = sadd.s32 %s94, 1
      %p98 = scmp.eq.s32.totalorder %s13, 1
      %p99 = scmp.ne.s32.totalorder %s94, %s96
      %p100 = scmp.eq.s32.totalorder %s13, 0
      %p101 = por %p99, %p100
      %p102 = scmp.ne.s32.totalorder %s94, %s96
      %p103 = scmp.eq.s32.totalorder %s18, 1
      %p104 = por %p102, %p103
      %p105 = scmp.ne.s32.totalorder %s96, %s97
      %p106 = scmp.eq.s32.totalorder %s18, 0
      %p107 = por %p105, %p106
      %p108 = scmp.ne.s32.totalorder %s96, %s97
      %p109 = scmp.eq.s32.totalorder %s19, 1
      %p110 = por %p108, %p109
      %p112 = scmp.ne.s32.totalorder %s97, %s111
      %p113 = scmp.eq.s32.totalorder %s19, 0
      %p114 = por %p112, %p113
      %s115 = ssub.s32 %s13, %s20
      %p116 = scmp.eq.s32.totalorder %s115, 0
      %s118 = sadd.s32 %s117, 1
      %s119 = scalar_select %p116, %s117, %s118
      %p122 = pneg %p116
      %p123 = scmp.eq.s32.totalorder %s13, 1
      %p124 = por %p122, %p123
      %p125 = scmp.ne.s32.totalorder %s117, %s120
      %p126 = scmp.eq.s32.totalorder %s13, 0
      %p127 = por %p125, %p126
      %p128 = scmp.ne.s32.totalorder %s117, %s120
      %p129 = scmp.eq.s32.totalorder %s18, 1
      %p130 = por %p128, %p129
      %p131 = scmp.ne.s32.totalorder %s120, %s121
      %p132 = scmp.eq.s32.totalorder %s18, 0
      %p133 = por %p131, %p132
      %p134 = scmp.ne.s32.totalorder %s120, %s121
      %p135 = scmp.eq.s32.totalorder %s19, 1
      %p136 = por %p134, %p135
      %p138 = scmp.ne.s32.totalorder %s121, %s137
      %p139 = scmp.eq.s32.totalorder %s19, 0
      %p140 = por %p138, %p139
      %p141 = scmp.le.s32.totalorder 1, %s13
      %p142 = scmp.lt.s32.totalorder %s13, 3
      %p143 = pnand %p141, %p142
      %p144 = pneg %p143
      // Predicated region
      $region9: #{tpu_custom_call.1} parent=5 // pred_check
        _
      $region10: #{tpu_custom_call.1} parent=5 // pred_check_branch
        %146 = sbr.rel (%p143) target = $region12
      $region11: #{tpu_custom_call.1} parent=5 // pred_region
        %s147 = ssub.s32 %s13, 1
        // Predicated region
        $region13: #{tpu_custom_call.1} parent=11 // pred_check
          %p148 = pneg %p86
        $region14: #{tpu_custom_call.1} parent=11 // pred_check_branch
          %150 = sbr.rel (%p148) target = $region16
        $region15: #{tpu_custom_call.1} parent=11 // pred_region
          _
        $region16: #{tpu_custom_call.1} parent=11 // pred_fallthru
          _
        // Predicated region
        $region17: #{tpu_custom_call.1} parent=11 // pred_check
          %p151 = pneg %p107
        $region18: #{tpu_custom_call.1} parent=11 // pred_check_branch
          %153 = sbr.rel (%p151) target = $region20
        $region19: #{tpu_custom_call.1} parent=11 // pred_region
          _
        $region20: #{tpu_custom_call.1} parent=11 // pred_fallthru
          _
      $region12: #{tpu_custom_call.1} parent=5 // pred_fallthru
        _
      %p154 = scmp.lt.s32.totalorder %s13, 2
      // Predicated region
      $region21: #{tpu_custom_call.1} parent=5 // pred_check
        %p155 = pneg %p154
      $region22: #{tpu_custom_call.1} parent=5 // pred_check_branch
        %157 = sbr.rel (%p155) target = $region24
      $region23: #{tpu_custom_call.1} parent=5 // pred_region
        // Predicated region
        $region25: #{tpu_custom_call.1} parent=23 // pred_check
          %p158 = pneg %p33
        $region26: #{tpu_custom_call.1} parent=23 // pred_check_branch
          %160 = sbr.rel (%p158) target = $region28
        $region27: #{tpu_custom_call.1} parent=23 // pred_region
          %p161 = scmp.lt.s32.totalorder %s13, 1
          %s162 = scalar_select %p161, %s13, 1
          %s163 = smul.addr %s162, 8
          %s164 = scalar_lea.vmem %s0, %s163
        $region28: #{tpu_custom_call.1} parent=23 // pred_fallthru
          _
        // Predicated region
        $region29: #{tpu_custom_call.1} parent=23 // pred_check
          %p165 = pneg %p59
        $region30: #{tpu_custom_call.1} parent=23 // pred_check_branch
          %167 = sbr.rel (%p165) target = $region32
        $region31: #{tpu_custom_call.1} parent=23 // pred_region
          %p168 = scmp.lt.s32.totalorder %s13, 1
          %s169 = scalar_select %p168, %s13, 1
          %s170 = smul.addr %s169, 2
          %s171 = smul.addr %s170, 8
          %s172 = scalar_lea.vmem %s1, %s171
        $region32: #{tpu_custom_call.1} parent=23 // pred_fallthru
          _
      $region24: #{tpu_custom_call.1} parent=5 // pred_fallthru
        _
      %p173 = scmp.le.s32.totalorder 1, %s13
      %p174 = scmp.lt.s32.totalorder %s13, 3
      %p175 = pnand %p173, %p174
      %p176 = pneg %p175
      // Predicated region
      $region33: #{tpu_custom_call.1} parent=5 // pred_check
        _
      $region34: #{tpu_custom_call.1} parent=5 // pred_check_branch
        %178 = sbr.rel (%p175) target = $region36
      $region35: #{tpu_custom_call.1} parent=5 // pred_region
        %s179 = ssub.s32 %s13, 1
        %p180 = scmp.lt.s32.totalorder %s18, 1
        %s181 = scalar_select %p180, %s18, 1
        %s182 = smul.addr %s181, 8
        %s183 = scalar_lea.vmem %s0, %s182
        %p184 = pneg %p39
        %p185 = pneg %p36
        %p186 = scmp.lt.s32.totalorder %s18, 1
        %s187 = scalar_select %p186, %s18, 1
        %s188 = smul.addr %s187, 2
        %s189 = smul.addr %s188, 8
        %s190 = scalar_lea.vmem %s1, %s189
        %p191 = pneg %p65
        %p192 = pneg %p62
        %p193 = pneg %p86
        %p194 = pneg %p83
        %p195 = pneg %p107
        %p196 = pneg %p104
        %p197 = pneg %p133
        %p198 = pneg %p130
        %s199 = sand.u32 %s120, 1
        %s200 = scalar_lea.sflag [#allocation3], %s199
        %s201 = sand.u32 %s120, 1
        %s202 = smul.addr %s201, 8
        %s203 = scalar_lea.vmem [#allocation2], %s202
        %p204 = scmp.lt.s32.totalorder %s18, 1
        %s205 = scalar_select %p204, %s18, 1
        %s206 = smul.addr %s205, 8
        %s207 = scalar_lea.vmem %s0, %s206
        %p208 = scmp.lt.s32.totalorder %s18, 1
        %s209 = scalar_select %p208, %s18, 1
        %s210 = smul.addr %s209, 2
        %s211 = smul.addr %s210, 8
        %s212 = scalar_lea.vmem %s1, %s211
        %v213 = vld [vmem:[%s207] sm:$0xff]
        %v214 = vld [vmem:[%s212] sm:$0xff]
        %v215 = vld [vmem:[%s212 + $0x8] sm:$0x3]
        %v216 = vld [vmem:[%s2] sm:$0xff]
        %v217 = vld [vmem:[%s2 + $0x8] sm:$0xff]
        %v218 = vld [vmem:[%s2 + $0x10] sm:$0xff]
        %v219 = vld [vmem:[%s2 + $0x18] sm:$0xff]
        %v220 = vld [vmem:[%s3] sm:$0x1]
        %v221 = vlaneseq
        %v222 = vshrl.u32 %v221, 7
        %v223 = vsub.s32 0, %v222
        %v224 = vrot.slane %v220, %v223
        %vm225 = vcmask 261120
        %v227 = vsel %vm225, %v213, 0
        %229 = vmatprep.subr.mxu0 0.0
        %230 = vmatpush1.msra.mxu0 %v216
        %231 = vmatprep.subr.mxu0 0.0
        %232 = vmatpush1.msra.mxu0 %v217
        %233 = vmatprep.subr.mxu0 0.0
        %234 = vmatpush1.msra.mxu0 %v218
        %235 = vmatprep.subr.mxu0 0.0
        %236 = vmatpush1.msra.mxu0 %v219
        %237 = vmatprep.subr.mxu0 0.0
        %238 = vmatpush1.msra.mxu0 0.0
        %239 = vmatprep.subr.mxu0 0.0
        %240 = vmatpush1.msra.mxu0 0.0
        %241 = vmatprep.subr.mxu0 0.0
        %242 = vmatpush1.msra.mxu0 0.0
        %243 = vmatprep.subr.mxu0 0.0
        %244 = vmatpush1.msra.mxu0 0.0
        %245 = vmatprep.subr.mxu0 0.0
        %246 = vmatpush1.msra.mxu0 0.0
        %247 = vmatprep.subr.mxu0 0.0
        %248 = vmatpush1.msra.mxu0 0.0
        %249 = vmatprep.subr.mxu0 0.0
        %250 = vmatpush1.msra.mxu0 0.0
        %251 = vmatprep.subr.mxu0 0.0
        %252 = vmatpush1.msra.mxu0 0.0
        %253 = vmatprep.subr.mxu0 0.0
        %254 = vmatpush1.msra.mxu0 0.0
        %255 = vmatprep.subr.mxu0 0.0
        %256 = vmatpush1.msra.mxu0 0.0
        %257 = vmatprep.subr.mxu0 0.0
        %258 = vmatpush1.msra.mxu0 0.0
        %259 = vmatprep.subr.mxu0 0.0
        %260 = vmatpush1.msra.mxu0 0.0
        %261 = vmatprep.subr.mxu0 0.0
        %262 = vmatpush1.msra.mxu0 0.0
        %263 = vmatprep.subr.mxu0 0.0
        %264 = vmatpush1.msra.mxu0 0.0
        %265 = vmatprep.subr.mxu0 0.0
        %266 = vmatpush1.msra.mxu0 0.0
        %267 = vmatprep.subr.mxu0 0.0
        %268 = vmatpush1.msra.mxu0 0.0
        %269 = vmatprep.subr.mxu0 0.0
        %270 = vmatpush1.msra.mxu0 0.0
        %271 = vmatprep.subr.mxu0 0.0
        %272 = vmatpush1.msra.mxu0 0.0
        %273 = vmatprep.subr.mxu0 0.0
        %274 = vmatpush1.msra.mxu0 0.0
        %275 = vmatprep.subr.mxu0 0.0
        %276 = vmatpush1.msra.mxu0 0.0
        %277 = vmatprep.subr.mxu0 0.0
        %278 = vmatpush1.msra.mxu0 0.0
        %279 = vmatprep.subr.mxu0 0.0
        %280 = vmatpush1.msra.mxu0 0.0
        %281 = vmatprep.subr.mxu0 0.0
        %282 = vmatpush1.msra.mxu0 0.0
        %283 = vmatprep.subr.mxu0 0.0
        %284 = vmatpush1.msra.mxu0 0.0
        %285 = vmatprep.subr.mxu0 0.0
        %286 = vmatpush1.msra.mxu0 0.0
        %287 = vmatprep.subr.mxu0 0.0
        %288 = vmatpush1.msra.mxu0 0.0
        %289 = vmatprep.subr.mxu0 0.0
        %290 = vmatpush1.msra.mxu0 0.0
        %291 = vmatprep.subr.mxu0 0.0
        %292 = vmatpush1.msra.mxu0 0.0
        %293 = vmatprep.mubr.f32.mxu0 0.0
        %294 = vmatmul.mubr.f32.gmra.mrb[0].mxu0 %v227
        %v295 = vpop.f32.mrb[0].mxu0
        %v296 = vadd.f32 %v224, %v295
        %v297 = vpop.f32.mrb[0].mxu0
        %298 = vdwg.mxu0
        %300 = vrot.lane.b32.xlu0 %v296, 96
        %v301 = vpop.permute.xlu0 %300
        %vm302 = vcmask 64512
        %v303 = vsel %vm302, %v296, 0
        %v305 = vsel %vm302, %v301, 0
        %307 = vmatprep.subr.mxu0 0.0
        %308 = vmatpush1.xpose.msra.mxu0 %v305
        %309 = vmatprep.subr.mxu0 0.0
        %310 = vmatpush1.xpose.msra.mxu0 0.0
        %311 = vmatprep.subr.mxu0 0.0
        %312 = vmatpush1.xpose.msra.mxu0 0.0
        %313 = vmatprep.subr.mxu0 0.0
        %314 = vmatpush1.xpose.msra.mxu0 0.0
        %315 = vmatprep.subr.mxu0 0.0
        %316 = vmatpush1.xpose.msra.mxu0 0.0
        %317 = vmatprep.subr.mxu0 0.0
        %318 = vmatpush1.xpose.msra.mxu0 0.0
        %319 = vmatprep.subr.mxu0 0.0
        %320 = vmatpush1.xpose.msra.mxu0 0.0
        %321 = vmatprep.subr.mxu0 0.0
        %322 = vmatpush1.xpose.msra.mxu0 0.0
        %323 = vmatprep.subr.mxu0 0.0
        %324 = vmatpush1.xpose.msra.mxu0 0.0
        %325 = vmatprep.subr.mxu0 0.0
        %326 = vmatpush1.xpose.msra.mxu0 0.0
        %327 = vmatprep.subr.mxu0 0.0
        %328 = vmatpush1.xpose.msra.mxu0 0.0
        %329 = vmatprep.subr.mxu0 0.0
        %330 = vmatpush1.xpose.msra.mxu0 0.0
        %331 = vmatprep.subr.mxu0 0.0
        %332 = vmatpush1.xpose.msra.mxu0 0.0
        %333 = vmatprep.subr.mxu0 0.0
        %334 = vmatpush1.xpose.msra.mxu0 0.0
        %335 = vmatprep.subr.mxu0 0.0
        %336 = vmatpush1.xpose.msra.mxu0 0.0
        %337 = vmatprep.subr.mxu0 0.0
        %338 = vmatpush1.xpose.msra.mxu0 0.0
        %339 = vmatprep.subr.mxu0 0.0
        %340 = vmatpush1.xpose.msra.mxu0 0.0
        %341 = vmatprep.subr.mxu0 0.0
        %342 = vmatpush1.xpose.msra.mxu0 0.0
        %343 = vmatprep.subr.mxu0 0.0
        %344 = vmatpush1.xpose.msra.mxu0 0.0
        %345 = vmatprep.subr.mxu0 0.0
        %346 = vmatpush1.xpose.msra.mxu0 0.0
        %347 = vmatprep.subr.mxu0 0.0
        %348 = vmatpush1.xpose.msra.mxu0 0.0
        %349 = vmatprep.subr.mxu0 0.0
        %350 = vmatpush1.xpose.msra.mxu0 0.0
        %351 = vmatprep.subr.mxu0 0.0
        %352 = vmatpush1.xpose.msra.mxu0 0.0
        %353 = vmatprep.subr.mxu0 0.0
        %354 = vmatpush1.xpose.msra.mxu0 0.0
        %355 = vmatprep.subr.mxu0 0.0
        %356 = vmatpush1.xpose.msra.mxu0 0.0
        %357 = vmatprep.subr.mxu0 0.0
        %358 = vmatpush1.xpose.msra.mxu0 0.0
        %359 = vmatprep.subr.mxu0 0.0
        %360 = vmatpush1.xpose.msra.mxu0 0.0
        %361 = vmatprep.subr.mxu0 0.0
        %362 = vmatpush1.xpose.msra.mxu0 0.0
        %363 = vmatprep.subr.mxu0 0.0
        %364 = vmatpush1.xpose.msra.mxu0 0.0
        %365 = vmatprep.subr.mxu0 0.0
        %366 = vmatpush1.xpose.msra.mxu0 0.0
        %367 = vmatprep.subr.mxu0 0.0
        %368 = vmatpush1.xpose.msra.mxu0 0.0
        %369 = vmatprep.subr.mxu0 0.0
        %370 = vmatpush1.xpose.msra.mxu0 0.0
        %371 = vmatprep.mubr.f32.mxu0 0.0
        %372 = vmatmul.mubr.f32.gmra.mrb[0].mxu0 %v303
        %v373 = vpop.f32.mrb[0].mxu0
        %v374 = vadd.f32 0.0, %v373
        %v375 = vpop.f32.mrb[0].mxu0
        %376 = vdwg.mxu0
        %v377 = vsel %vm302, %v374, -inf
        %378 = vmax.xlane.f32.xlu0 %v377
        %v379 = vpop.xlane.xlu0 %378
        %v380 = vsub.f32 %v374, %v379
        %v381 = vmul.f32 %v380, 1.442695
        %v382 = vpow.pop %v381
        %v383 = vsel %vm302, %v382, 0.0
        %384 = vadd.xlane.f32.xlu0 %v383
        %v385 = vpop.xlane.xlu0 %384
        %v386 = vrcp.pop %v385
        %v387 = vmul.f32 1.0, %v386
        %388 = vrot.lane.b32.xlu0 %v296, 64
        %v389 = vpop.permute.xlu0 %388
        %v392 = vsel %vm302, %v382, 0
        %394 = vmatprep.subr.mxu0 0.0
        %395 = vmatpush1.msra.mxu0 %v389
        %396 = vmatprep.subr.mxu0 0.0
        %397 = vmatpush1.msra.mxu0 0.0
        %398 = vmatprep.subr.mxu0 0.0
        %399 = vmatpush1.msra.mxu0 0.0
        %400 = vmatprep.subr.mxu0 0.0
        %401 = vmatpush1.msra.mxu0 0.0
        %402 = vmatprep.subr.mxu0 0.0
        %403 = vmatpush1.msra.mxu0 0.0
        %404 = vmatprep.subr.mxu0 0.0
        %405 = vmatpush1.msra.mxu0 0.0
        %406 = vmatprep.subr.mxu0 0.0
        %407 = vmatpush1.msra.mxu0 0.0
        %408 = vmatprep.subr.mxu0 0.0
        %409 = vmatpush1.msra.mxu0 0.0
        %410 = vmatprep.subr.mxu0 0.0
        %411 = vmatpush1.msra.mxu0 0.0
        %412 = vmatprep.subr.mxu0 0.0
        %413 = vmatpush1.msra.mxu0 0.0
        %414 = vmatprep.subr.mxu0 0.0
        %415 = vmatpush1.msra.mxu0 0.0
        %416 = vmatprep.subr.mxu0 0.0
        %417 = vmatpush1.msra.mxu0 0.0
        %418 = vmatprep.subr.mxu0 0.0
        %419 = vmatpush1.msra.mxu0 0.0
        %420 = vmatprep.subr.mxu0 0.0
        %421 = vmatpush1.msra.mxu0 0.0
        %422 = vmatprep.subr.mxu0 0.0
        %423 = vmatpush1.msra.mxu0 0.0
        %424 = vmatprep.subr.mxu0 0.0
        %425 = vmatpush1.msra.mxu0 0.0
        %426 = vmatprep.subr.mxu0 0.0
        %427 = vmatpush1.msra.mxu0 0.0
        %428 = vmatprep.subr.mxu0 0.0
        %429 = vmatpush1.msra.mxu0 0.0
        %430 = vmatprep.subr.mxu0 0.0
        %431 = vmatpush1.msra.mxu0 0.0
        %432 = vmatprep.subr.mxu0 0.0
        %433 = vmatpush1.msra.mxu0 0.0
        %434 = vmatprep.subr.mxu0 0.0
        %435 = vmatpush1.msra.mxu0 0.0
        %436 = vmatprep.subr.mxu0 0.0
        %437 = vmatpush1.msra.mxu0 0.0
        %438 = vmatprep.subr.mxu0 0.0
        %439 = vmatpush1.msra.mxu0 0.0
        %440 = vmatprep.subr.mxu0 0.0
        %441 = vmatpush1.msra.mxu0 0.0
        %442 = vmatprep.subr.mxu0 0.0
        %443 = vmatpush1.msra.mxu0 0.0
        %444 = vmatprep.subr.mxu0 0.0
        %445 = vmatpush1.msra.mxu0 0.0
        %446 = vmatprep.subr.mxu0 0.0
        %447 = vmatpush1.msra.mxu0 0.0
        %448 = vmatprep.subr.mxu0 0.0
        %449 = vmatpush1.msra.mxu0 0.0
        %450 = vmatprep.subr.mxu0 0.0
        %451 = vmatpush1.msra.mxu0 0.0
        %452 = vmatprep.subr.mxu0 0.0
        %453 = vmatpush1.msra.mxu0 0.0
        %454 = vmatprep.subr.mxu0 0.0
        %455 = vmatpush1.msra.mxu0 0.0
        %456 = vmatprep.subr.mxu0 0.0
        %457 = vmatpush1.msra.mxu0 0.0
        %458 = vmatprep.mubr.f32.mxu0 0.0
        %459 = vmatmul.mubr.f32.gmra.mrb[0].mxu0 %v392
        %v460 = vpop.f32.mrb[0].mxu0
        %v461 = vadd.f32 0.0, %v460
        %v462 = vpop.f32.mrb[0].mxu0
        %463 = vdwg.mxu0
        %v464 = vmul.f32 %v461, %v387
        %465 = vrot.lane.b32.xlu0 %v296, 120
        %v466 = vpop.permute.xlu0 %465
        %467 = vrot.lane.b32.xlu0 %v296, 88
        %v468 = vpop.permute.xlu0 %467
        %v469 = vsel %vm302, %v466, 0
        %v471 = vsel %vm302, %v468, 0
        %473 = vmatprep.subr.mxu0 0.0
        %474 = vmatpush1.xpose.msra.mxu0 %v471
        %475 = vmatprep.subr.mxu0 0.0
        %476 = vmatpush1.xpose.msra.mxu0 0.0
        %477 = vmatprep.subr.mxu0 0.0
        %478 = vmatpush1.xpose.msra.mxu0 0.0
        %479 = vmatprep.subr.mxu0 0.0
        %480 = vmatpush1.xpose.msra.mxu0 0.0
        %481 = vmatprep.subr.mxu0 0.0
        %482 = vmatpush1.xpose.msra.mxu0 0.0
        %483 = vmatprep.subr.mxu0 0.0
        %484 = vmatpush1.xpose.msra.mxu0 0.0
        %485 = vmatprep.subr.mxu0 0.0
        %486 = vmatpush1.xpose.msra.mxu0 0.0
        %487 = vmatprep.subr.mxu0 0.0
        %488 = vmatpush1.xpose.msra.mxu0 0.0
        %489 = vmatprep.subr.mxu0 0.0
        %490 = vmatpush1.xpose.msra.mxu0 0.0
        %491 = vmatprep.subr.mxu0 0.0
        %492 = vmatpush1.xpose.msra.mxu0 0.0
        %493 = vmatprep.subr.mxu0 0.0
        %494 = vmatpush1.xpose.msra.mxu0 0.0
        %495 = vmatprep.subr.mxu0 0.0
        %496 = vmatpush1.xpose.msra.mxu0 0.0
        %497 = vmatprep.subr.mxu0 0.0
        %498 = vmatpush1.xpose.msra.mxu0 0.0
        %499 = vmatprep.subr.mxu0 0.0
        %500 = vmatpush1.xpose.msra.mxu0 0.0
        %501 = vmatprep.subr.mxu0 0.0
        %502 = vmatpush1.xpose.msra.mxu0 0.0
        %503 = vmatprep.subr.mxu0 0.0
        %504 = vmatpush1.xpose.msra.mxu0 0.0
        %505 = vmatprep.subr.mxu0 0.0
        %506 = vmatpush1.xpose.msra.mxu0 0.0
        %507 = vmatprep.subr.mxu0 0.0
        %508 = vmatpush1.xpose.msra.mxu0 0.0
        %509 = vmatprep.subr.mxu0 0.0
        %510 = vmatpush1.xpose.msra.mxu0 0.0
        %511 = vmatprep.subr.mxu0 0.0
        %512 = vmatpush1.xpose.msra.mxu0 0.0
        %513 = vmatprep.subr.mxu0 0.0
        %514 = vmatpush1.xpose.msra.mxu0 0.0
        %515 = vmatprep.subr.mxu0 0.0
        %516 = vmatpush1.xpose.msra.mxu0 0.0
        %517 = vmatprep.subr.mxu0 0.0
        %518 = vmatpush1.xpose.msra.mxu0 0.0
        %519 = vmatprep.subr.mxu0 0.0
        %520 = vmatpush1.xpose.msra.mxu0 0.0
        %521 = vmatprep.subr.mxu0 0.0
        %522 = vmatpush1.xpose.msra.mxu0 0.0
        %523 = vmatprep.subr.mxu0 0.0
        %524 = vmatpush1.xpose.msra.mxu0 0.0
        %525 = vmatprep.subr.mxu0 0.0
        %526 = vmatpush1.xpose.msra.mxu0 0.0
        %527 = vmatprep.subr.mxu0 0.0
        %528 = vmatpush1.xpose.msra.mxu0 0.0
        %529 = vmatprep.subr.mxu0 0.0
        %530 = vmatpush1.xpose.msra.mxu0 0.0
        %531 = vmatprep.subr.mxu0 0.0
        %532 = vmatpush1.xpose.msra.mxu0 0.0
        %533 = vmatprep.subr.mxu0 0.0
        %534 = vmatpush1.xpose.msra.mxu0 0.0
        %535 = vmatprep.subr.mxu0 0.0
        %536 = vmatpush1.xpose.msra.mxu0 0.0
        %537 = vmatprep.mubr.f32.mxu0 0.0
        %538 = vmatmul.mubr.f32.gmra.mrb[0].mxu0 %v469
        %v539 = vpop.f32.mrb[0].mxu0
        %v540 = vadd.f32 0.0, %v539
        %v541 = vpop.f32.mrb[0].mxu0
        %542 = vdwg.mxu0
        %v543 = vsel %vm302, %v540, -inf
        %544 = vmax.xlane.f32.xlu0 %v543
        %v545 = vpop.xlane.xlu0 %544
        %v546 = vsub.f32 %v540, %v545
        %v547 = vmul.f32 %v546, 1.442695
        %v548 = vpow.pop %v547
        %v549 = vsel %vm302, %v548, 0.0
        %550 = vadd.xlane.f32.xlu0 %v549
        %v551 = vpop.xlane.xlu0 %550
        %v552 = vrcp.pop %v551
        %v553 = vmul.f32 1.0, %v552
        %554 = vrot.lane.b32.xlu0 %v296, 56
        %v555 = vpop.permute.xlu0 %554
        %v558 = vsel %vm302, %v548, 0
        %560 = vmatprep.subr.mxu0 0.0
        %561 = vmatpush1.msra.mxu0 %v555
        %562 = vmatprep.subr.mxu0 0.0
        %563 = vmatpush1.msra.mxu0 0.0
        %564 = vmatprep.subr.mxu0 0.0
        %565 = vmatpush1.msra.mxu0 0.0
        %566 = vmatprep.subr.mxu0 0.0
        %567 = vmatpush1.msra.mxu0 0.0
        %568 = vmatprep.subr.mxu0 0.0
        %569 = vmatpush1.msra.mxu0 0.0
        %570 = vmatprep.subr.mxu0 0.0
        %571 = vmatpush1.msra.mxu0 0.0
        %572 = vmatprep.subr.mxu0 0.0
        %573 = vmatpush1.msra.mxu0 0.0
        %574 = vmatprep.subr.mxu0 0.0
        %575 = vmatpush1.msra.mxu0 0.0
        %576 = vmatprep.subr.mxu0 0.0
        %577 = vmatpush1.msra.mxu0 0.0
        %578 = vmatprep.subr.mxu0 0.0
        %579 = vmatpush1.msra.mxu0 0.0
        %580 = vmatprep.subr.mxu0 0.0
        %581 = vmatpush1.msra.mxu0 0.0
        %582 = vmatprep.subr.mxu0 0.0
        %583 = vmatpush1.msra.mxu0 0.0
        %584 = vmatprep.subr.mxu0 0.0
        %585 = vmatpush1.msra.mxu0 0.0
        %586 = vmatprep.subr.mxu0 0.0
        %587 = vmatpush1.msra.mxu0 0.0
        %588 = vmatprep.subr.mxu0 0.0
        %589 = vmatpush1.msra.mxu0 0.0
        %590 = vmatprep.subr.mxu0 0.0
        %591 = vmatpush1.msra.mxu0 0.0
        %592 = vmatprep.subr.mxu0 0.0
        %593 = vmatpush1.msra.mxu0 0.0
        %594 = vmatprep.subr.mxu0 0.0
        %595 = vmatpush1.msra.mxu0 0.0
        %596 = vmatprep.subr.mxu0 0.0
        %597 = vmatpush1.msra.mxu0 0.0
        %598 = vmatprep.subr.mxu0 0.0
        %599 = vmatpush1.msra.mxu0 0.0
        %600 = vmatprep.subr.mxu0 0.0
        %601 = vmatpush1.msra.mxu0 0.0
        %602 = vmatprep.subr.mxu0 0.0
        %603 = vmatpush1.msra.mxu0 0.0
        %604 = vmatprep.subr.mxu0 0.0
        %605 = vmatpush1.msra.mxu0 0.0
        %606 = vmatprep.subr.mxu0 0.0
        %607 = vmatpush1.msra.mxu0 0.0
        %608 = vmatprep.subr.mxu0 0.0
        %609 = vmatpush1.msra.mxu0 0.0
        %610 = vmatprep.subr.mxu0 0.0
        %611 = vmatpush1.msra.mxu0 0.0
        %612 = vmatprep.subr.mxu0 0.0
        %613 = vmatpush1.msra.mxu0 0.0
        %614 = vmatprep.subr.mxu0 0.0
        %615 = vmatpush1.msra.mxu0 0.0
        %616 = vmatprep.subr.mxu0 0.0
        %617 = vmatpush1.msra.mxu0 0.0
        %618 = vmatprep.subr.mxu0 0.0
        %619 = vmatpush1.msra.mxu0 0.0
        %620 = vmatprep.subr.mxu0 0.0
        %621 = vmatpush1.msra.mxu0 0.0
        %622 = vmatprep.subr.mxu0 0.0
        %623 = vmatpush1.msra.mxu0 0.0
        %624 = vmatprep.mubr.f32.mxu0 0.0
        %625 = vmatmul.mubr.f32.gmra.mrb[0].mxu0 %v558
        %v626 = vpop.f32.mrb[0].mxu0
        %v627 = vadd.f32 0.0, %v626
        %v628 = vpop.f32.mrb[0].mxu0
        %629 = vdwg.mxu0
        %v630 = vmul.f32 %v627, %v553
        %631 = vrot.lane.b32.xlu0 %v296, 112
        %v632 = vpop.permute.xlu0 %631
        %633 = vrot.lane.b32.xlu0 %v296, 80
        %v634 = vpop.permute.xlu0 %633
        %v635 = vsel %vm302, %v632, 0
        %v637 = vsel %vm302, %v634, 0
        %639 = vmatprep.subr.mxu0 0.0
        %640 = vmatpush1.xpose.msra.mxu0 %v637
        %641 = vmatprep.subr.mxu0 0.0
        %642 = vmatpush1.xpose.msra.mxu0 0.0
        %643 = vmatprep.subr.mxu0 0.0
        %644 = vmatpush1.xpose.msra.mxu0 0.0
        %645 = vmatprep.subr.mxu0 0.0
        %646 = vmatpush1.xpose.msra.mxu0 0.0
        %647 = vmatprep.subr.mxu0 0.0
        %648 = vmatpush1.xpose.msra.mxu0 0.0
        %649 = vmatprep.subr.mxu0 0.0
        %650 = vmatpush1.xpose.msra.mxu0 0.0
        %651 = vmatprep.subr.mxu0 0.0
        %652 = vmatpush1.xpose.msra.mxu0 0.0
        %653 = vmatprep.subr.mxu0 0.0
        %654 = vmatpush1.xpose.msra.mxu0 0.0
        %655 = vmatprep.subr.mxu0 0.0
        %656 = vmatpush1.xpose.msra.mxu0 0.0
        %657 = vmatprep.subr.mxu0 0.0
        %658 = vmatpush1.xpose.msra.mxu0 0.0
        %659 = vmatprep.subr.mxu0 0.0
        %660 = vmatpush1.xpose.msra.mxu0 0.0
        %661 = vmatprep.subr.mxu0 0.0
        %662 = vmatpush1.xpose.msra.mxu0 0.0
        %663 = vmatprep.subr.mxu0 0.0
        %664 = vmatpush1.xpose.msra.mxu0 0.0
        %665 = vmatprep.subr.mxu0 0.0
        %666 = vmatpush1.xpose.msra.mxu0 0.0
        %667 = vmatprep.subr.mxu0 0.0
        %668 = vmatpush1.xpose.msra.mxu0 0.0
        %669 = vmatprep.subr.mxu0 0.0
        %670 = vmatpush1.xpose.msra.mxu0 0.0
        %671 = vmatprep.subr.mxu0 0.0
        %672 = vmatpush1.xpose.msra.mxu0 0.0
        %673 = vmatprep.subr.mxu0 0.0
        %674 = vmatpush1.xpose.msra.mxu0 0.0
        %675 = vmatprep.subr.mxu0 0.0
        %676 = vmatpush1.xpose.msra.mxu0 0.0
        %677 = vmatprep.subr.mxu0 0.0
        %678 = vmatpush1.xpose.msra.mxu0 0.0
        %679 = vmatprep.subr.mxu0 0.0
        %680 = vmatpush1.xpose.msra.mxu0 0.0
        %681 = vmatprep.subr.mxu0 0.0
        %682 = vmatpush1.xpose.msra.mxu0 0.0
        %683 = vmatprep.subr.mxu0 0.0
        %684 = vmatpush1.xpose.msra.mxu0 0.0
        %685 = vmatprep.subr.mxu0 0.0
        %686 = vmatpush1.xpose.msra.mxu0 0.0
        %687 = vmatprep.subr.mxu0 0.0
        %688 = vmatpush1.xpose.msra.mxu0 0.0
        %689 = vmatprep.subr.mxu0 0.0
        %690 = vmatpush1.xpose.msra.mxu0 0.0
        %691 = vmatprep.subr.mxu0 0.0
        %692 = vmatpush1.xpose.msra.mxu0 0.0
        %693 = vmatprep.subr.mxu0 0.0
        %694 = vmatpush1.xpose.msra.mxu0 0.0
        %695 = vmatprep.subr.mxu0 0.0
        %696 = vmatpush1.xpose.msra.mxu0 0.0
        %697 = vmatprep.subr.mxu0 0.0
        %698 = vmatpush1.xpose.msra.mxu0 0.0
        %699 = vmatprep.subr.mxu0 0.0
        %700 = vmatpush1.xpose.msra.mxu0 0.0
        %701 = vmatprep.subr.mxu0 0.0
        %702 = vmatpush1.xpose.msra.mxu0 0.0
        %703 = vmatprep.mubr.f32.mxu0 0.0
        %704 = vmatmul.mubr.f32.gmra.mrb[0].mxu0 %v635
        %v705 = vpop.f32.mrb[0].mxu0
        %v706 = vadd.f32 0.0, %v705
        %v707 = vpop.f32.mrb[0].mxu0
        %708 = vdwg.mxu0
        %v709 = vsel %vm302, %v706, -inf
        %710 = vmax.xlane.f32.xlu0 %v709
        %v711 = vpop.xlane.xlu0 %710
        %v712 = vsub.f32 %v706, %v711
        %v713 = vmul.f32 %v712, 1.442695
        %v714 = vpow.pop %v713
        %v715 = vsel %vm302, %v714, 0.0
        %716 = vadd.xlane.f32.xlu0 %v715
        %v717 = vpop.xlane.xlu0 %716
        %v718 = vrcp.pop %v717
        %v719 = vmul.f32 1.0, %v718
        %720 = vrot.lane.b32.xlu0 %v296, 48
        %v721 = vpop.permute.xlu0 %720
        %v724 = vsel %vm302, %v714, 0
        %726 = vmatprep.subr.mxu0 0.0
        %727 = vmatpush1.msra.mxu0 %v721
        %728 = vmatprep.subr.mxu0 0.0
        %729 = vmatpush1.msra.mxu0 0.0
        %730 = vmatprep.subr.mxu0 0.0
        %731 = vmatpush1.msra.mxu0 0.0
        %732 = vmatprep.subr.mxu0 0.0
        %733 = vmatpush1.msra.mxu0 0.0
        %734 = vmatprep.subr.mxu0 0.0
        %735 = vmatpush1.msra.mxu0 0.0
        %736 = vmatprep.subr.mxu0 0.0
        %737 = vmatpush1.msra.mxu0 0.0
        %738 = vmatprep.subr.mxu0 0.0
        %739 = vmatpush1.msra.mxu0 0.0
        %740 = vmatprep.subr.mxu0 0.0
        %741 = vmatpush1.msra.mxu0 0.0
        %742 = vmatprep.subr.mxu0 0.0
        %743 = vmatpush1.msra.mxu0 0.0
        %744 = vmatprep.subr.mxu0 0.0
        %745 = vmatpush1.msra.mxu0 0.0
        %746 = vmatprep.subr.mxu0 0.0
        %747 = vmatpush1.msra.mxu0 0.0
        %748 = vmatprep.subr.mxu0 0.0
        %749 = vmatpush1.msra.mxu0 0.0
        %750 = vmatprep.subr.mxu0 0.0
        %751 = vmatpush1.msra.mxu0 0.0
        %752 = vmatprep.subr.mxu0 0.0
        %753 = vmatpush1.msra.mxu0 0.0
        %754 = vmatprep.subr.mxu0 0.0
        %755 = vmatpush1.msra.mxu0 0.0
        %756 = vmatprep.subr.mxu0 0.0
        %757 = vmatpush1.msra.mxu0 0.0
        %758 = vmatprep.subr.mxu0 0.0
        %759 = vmatpush1.msra.mxu0 0.0
        %760 = vmatprep.subr.mxu0 0.0
        %761 = vmatpush1.msra.mxu0 0.0
        %762 = vmatprep.subr.mxu0 0.0
        %763 = vmatpush1.msra.mxu0 0.0
        %764 = vmatprep.subr.mxu0 0.0
        %765 = vmatpush1.msra.mxu0 0.0
        %766 = vmatprep.subr.mxu0 0.0
        %767 = vmatpush1.msra.mxu0 0.0
        %768 = vmatprep.subr.mxu0 0.0
        %769 = vmatpush1.msra.mxu0 0.0
        %770 = vmatprep.subr.mxu0 0.0
        %771 = vmatpush1.msra.mxu0 0.0
        %772 = vmatprep.subr.mxu0 0.0
        %773 = vmatpush1.msra.mxu0 0.0
        %774 = vmatprep.subr.mxu0 0.0
        %775 = vmatpush1.msra.mxu0 0.0
        %776 = vmatprep.subr.mxu0 0.0
        %777 = vmatpush1.msra.mxu0 0.0
        %778 = vmatprep.subr.mxu0 0.0
        %779 = vmatpush1.msra.mxu0 0.0
        %780 = vmatprep.subr.mxu0 0.0
        %781 = vmatpush1.msra.mxu0 0.0
        %782 = vmatprep.subr.mxu0 0.0
        %783 = vmatpush1.msra.mxu0 0.0
        %784 = vmatprep.subr.mxu0 0.0
        %785 = vmatpush1.msra.mxu0 0.0
        %786 = vmatprep.subr.mxu0 0.0
        %787 = vmatpush1.msra.mxu0 0.0
        %788 = vmatprep.subr.mxu0 0.0
        %789 = vmatpush1.msra.mxu0 0.0
        %790 = vmatprep.mubr.f32.mxu0 0.0
        %791 = vmatmul.mubr.f32.gmra.mrb[0].mxu0 %v724
        %v792 = vpop.f32.mrb[0].mxu0
        %v793 = vadd.f32 0.0, %v792
        %v794 = vpop.f32.mrb[0].mxu0
        %795 = vdwg.mxu0
        %v796 = vmul.f32 %v793, %v719
        %797 = vrot.lane.b32.xlu0 %v296, 104
        %v798 = vpop.permute.xlu0 %797
        %799 = vrot.lane.b32.xlu0 %v296, 72
        %v800 = vpop.permute.xlu0 %799
        %v801 = vsel %vm302, %v798, 0
        %v803 = vsel %vm302, %v800, 0
        %805 = vmatprep.subr.mxu0 0.0
        %806 = vmatpush1.xpose.msra.mxu0 %v803
        %807 = vmatprep.subr.mxu0 0.0
        %808 = vmatpush1.xpose.msra.mxu0 0.0
        %809 = vmatprep.subr.mxu0 0.0
        %810 = vmatpush1.xpose.msra.mxu0 0.0
        %811 = vmatprep.subr.mxu0 0.0
        %812 = vmatpush1.xpose.msra.mxu0 0.0
        %813 = vmatprep.subr.mxu0 0.0
        %814 = vmatpush1.xpose.msra.mxu0 0.0
        %815 = vmatprep.subr.mxu0 0.0
        %816 = vmatpush1.xpose.msra.mxu0 0.0
        %817 = vmatprep.subr.mxu0 0.0
        %818 = vmatpush1.xpose.msra.mxu0 0.0
        %819 = vmatprep.subr.mxu0 0.0
        %820 = vmatpush1.xpose.msra.mxu0 0.0
        %821 = vmatprep.subr.mxu0 0.0
        %822 = vmatpush1.xpose.msra.mxu0 0.0
        %823 = vmatprep.subr.mxu0 0.0
        %824 = vmatpush1.xpose.msra.mxu0 0.0
        %825 = vmatprep.subr.mxu0 0.0
        %826 = vmatpush1.xpose.msra.mxu0 0.0
        %827 = vmatprep.subr.mxu0 0.0
        %828 = vmatpush1.xpose.msra.mxu0 0.0
        %829 = vmatprep.subr.mxu0 0.0
        %830 = vmatpush1.xpose.msra.mxu0 0.0
        %831 = vmatprep.subr.mxu0 0.0
        %832 = vmatpush1.xpose.msra.mxu0 0.0
        %833 = vmatprep.subr.mxu0 0.0
        %834 = vmatpush1.xpose.msra.mxu0 0.0
        %835 = vmatprep.subr.mxu0 0.0
        %836 = vmatpush1.xpose.msra.mxu0 0.0
        %837 = vmatprep.subr.mxu0 0.0
        %838 = vmatpush1.xpose.msra.mxu0 0.0
        %839 = vmatprep.subr.mxu0 0.0
        %840 = vmatpush1.xpose.msra.mxu0 0.0
        %841 = vmatprep.subr.mxu0 0.0
        %842 = vmatpush1.xpose.msra.mxu0 0.0
        %843 = vmatprep.subr.mxu0 0.0
        %844 = vmatpush1.xpose.msra.mxu0 0.0
        %845 = vmatprep.subr.mxu0 0.0
        %846 = vmatpush1.xpose.msra.mxu0 0.0
        %847 = vmatprep.subr.mxu0 0.0
        %848 = vmatpush1.xpose.msra.mxu0 0.0
        %849 = vmatprep.subr.mxu0 0.0
        %850 = vmatpush1.xpose.msra.mxu0 0.0
        %851 = vmatprep.subr.mxu0 0.0
        %852 = vmatpush1.xpose.msra.mxu0 0.0
        %853 = vmatprep.subr.mxu0 0.0
        %854 = vmatpush1.xpose.msra.mxu0 0.0
        %855 = vmatprep.subr.mxu0 0.0
        %856 = vmatpush1.xpose.msra.mxu0 0.0
        %857 = vmatprep.subr.mxu0 0.0
        %858 = vmatpush1.xpose.msra.mxu0 0.0
        %859 = vmatprep.subr.mxu0 0.0
        %860 = vmatpush1.xpose.msra.mxu0 0.0
        %861 = vmatprep.subr.mxu0 0.0
        %862 = vmatpush1.xpose.msra.mxu0 0.0
        %863 = vmatprep.subr.mxu0 0.0
        %864 = vmatpush1.xpose.msra.mxu0 0.0
        %865 = vmatprep.subr.mxu0 0.0
        %866 = vmatpush1.xpose.msra.mxu0 0.0
        %867 = vmatprep.subr.mxu0 0.0
        %868 = vmatpush1.xpose.msra.mxu0 0.0
        %869 = vmatprep.mubr.f32.mxu0 0.0
        %870 = vmatmul.mubr.f32.gmra.mrb[0].mxu0 %v801
        %v871 = vpop.f32.mrb[0].mxu0
        %v872 = vadd.f32 0.0, %v871
        %v873 = vpop.f32.mrb[0].mxu0
        %874 = vdwg.mxu0
        %v875 = vsel %vm302, %v872, -inf
        %876 = vmax.xlane.f32.xlu0 %v875
        %v877 = vpop.xlane.xlu0 %876
        %v878 = vsub.f32 %v872, %v877
        %v879 = vmul.f32 %v878, 1.442695
        %v880 = vpow.pop %v879
        %v881 = vsel %vm302, %v880, 0.0
        %882 = vadd.xlane.f32.xlu0 %v881
        %v883 = vpop.xlane.xlu0 %882
        %v884 = vrcp.pop %v883
        %v885 = vmul.f32 1.0, %v884
        %886 = vrot.lane.b32.xlu0 %v296, 40
        %v887 = vpop.permute.xlu0 %886
        %v890 = vsel %vm302, %v880, 0
        %892 = vmatprep.subr.mxu0 0.0
        %893 = vmatpush1.msra.mxu0 %v887
        %894 = vmatprep.subr.mxu0 0.0
        %895 = vmatpush1.msra.mxu0 0.0
        %896 = vmatprep.subr.mxu0 0.0
        %897 = vmatpush1.msra.mxu0 0.0
        %898 = vmatprep.subr.mxu0 0.0
        %899 = vmatpush1.msra.mxu0 0.0
        %900 = vmatprep.subr.mxu0 0.0
        %901 = vmatpush1.msra.mxu0 0.0
        %902 = vmatprep.subr.mxu0 0.0
        %903 = vmatpush1.msra.mxu0 0.0
        %904 = vmatprep.subr.mxu0 0.0
        %905 = vmatpush1.msra.mxu0 0.0
        %906 = vmatprep.subr.mxu0 0.0
        %907 = vmatpush1.msra.mxu0 0.0
        %908 = vmatprep.subr.mxu0 0.0
        %909 = vmatpush1.msra.mxu0 0.0
        %910 = vmatprep.subr.mxu0 0.0
        %911 = vmatpush1.msra.mxu0 0.0
        %912 = vmatprep.subr.mxu0 0.0
        %913 = vmatpush1.msra.mxu0 0.0
        %914 = vmatprep.subr.mxu0 0.0
        %915 = vmatpush1.msra.mxu0 0.0
        %916 = vmatprep.subr.mxu0 0.0
        %917 = vmatpush1.msra.mxu0 0.0
        %918 = vmatprep.subr.mxu0 0.0
        %919 = vmatpush1.msra.mxu0 0.0
        %920 = vmatprep.subr.mxu0 0.0
        %921 = vmatpush1.msra.mxu0 0.0
        %922 = vmatprep.subr.mxu0 0.0
        %923 = vmatpush1.msra.mxu0 0.0
        %924 = vmatprep.subr.mxu0 0.0
        %925 = vmatpush1.msra.mxu0 0.0
        %926 = vmatprep.subr.mxu0 0.0
        %927 = vmatpush1.msra.mxu0 0.0
        %928 = vmatprep.subr.mxu0 0.0
        %929 = vmatpush1.msra.mxu0 0.0
        %930 = vmatprep.subr.mxu0 0.0
        %931 = vmatpush1.msra.mxu0 0.0
        %932 = vmatprep.subr.mxu0 0.0
        %933 = vmatpush1.msra.mxu0 0.0
        %934 = vmatprep.subr.mxu0 0.0
        %935 = vmatpush1.msra.mxu0 0.0
        %936 = vmatprep.subr.mxu0 0.0
        %937 = vmatpush1.msra.mxu0 0.0
        %938 = vmatprep.subr.mxu0 0.0
        %939 = vmatpush1.msra.mxu0 0.0
        %940 = vmatprep.subr.mxu0 0.0
        %941 = vmatpush1.msra.mxu0 0.0
        %942 = vmatprep.subr.mxu0 0.0
        %943 = vmatpush1.msra.mxu0 0.0
        %944 = vmatprep.subr.mxu0 0.0
        %945 = vmatpush1.msra.mxu0 0.0
        %946 = vmatprep.subr.mxu0 0.0
        %947 = vmatpush1.msra.mxu0 0.0
        %948 = vmatprep.subr.mxu0 0.0
        %949 = vmatpush1.msra.mxu0 0.0
        %950 = vmatprep.subr.mxu0 0.0
        %951 = vmatpush1.msra.mxu0 0.0
        %952 = vmatprep.subr.mxu0 0.0
        %953 = vmatpush1.msra.mxu0 0.0
        %954 = vmatprep.subr.mxu0 0.0
        %955 = vmatpush1.msra.mxu0 0.0
        %956 = vmatprep.mubr.f32.mxu0 0.0
        %957 = vmatmul.mubr.f32.gmra.mrb[0].mxu0 %v890
        %v958 = vpop.f32.mrb[0].mxu0
        %v959 = vadd.f32 0.0, %v958
        %v960 = vpop.f32.mrb[0].mxu0
        %961 = vdwg.mxu0
        %v962 = vmul.f32 %v959, %v885
        %964 = vrot.lane.b32.xlu0 %v630, 8
        %v965 = vpop.permute.xlu0 %964
        %968 = vrot.lane.b32.xlu0 %v796, 16
        %v969 = vpop.permute.xlu0 %968
        %972 = vrot.lane.b32.xlu0 %v962, 24
        %v973 = vpop.permute.xlu0 %972
        %v975 = vsel %vm302, %v464, %v965
        %vm976 = vcmask 130048
        %v977 = vsel %vm976, %v975, %v969
        %vm978 = vcmask 195584
        %v979 = vsel %vm978, %v977, %v973
        %v980 = vld [vmem:[%s2 + $0x20] sm:$0xff]
        %v981 = vld [vmem:[%s2 + $0x28] sm:$0xff]
        %v982 = vld [vmem:[%s2 + $0x30] sm:$0xff]
        %v983 = vld [vmem:[%s2 + $0x38] sm:$0xff]
        %v984 = vld [vmem:[%s3 + $0x1] sm:$0x1]
        %v985 = vlaneseq
        %v986 = vshrl.u32 %v985, 7
        %v987 = vsub.s32 0, %v986
        %v988 = vrot.slane %v984, %v987
        %v990 = vsel %vm225, %v979, 0
        %992 = vmatprep.subr.mxu0 0.0
        %993 = vmatpush1.msra.mxu0 %v980
        %994 = vmatprep.subr.mxu0 0.0
        %995 = vmatpush1.msra.mxu0 %v981
        %996 = vmatprep.subr.mxu0 0.0
        %997 = vmatpush1.msra.mxu0 %v982
        %998 = vmatprep.subr.mxu0 0.0
        %999 = vmatpush1.msra.mxu0 %v983
        %1000 = vmatprep.subr.mxu0 0.0
        %1001 = vmatpush1.msra.mxu0 0.0
        %1002 = vmatprep.subr.mxu0 0.0
        %1003 = vmatpush1.msra.mxu0 0.0
        %1004 = vmatprep.subr.mxu0 0.0
        %1005 = vmatpush1.msra.mxu0 0.0
        %1006 = vmatprep.subr.mxu0 0.0
        %1007 = vmatpush1.msra.mxu0 0.0
        %1008 = vmatprep.subr.mxu0 0.0
        %1009 = vmatpush1.msra.mxu0 0.0
        %1010 = vmatprep.subr.mxu0 0.0
        %1011 = vmatpush1.msra.mxu0 0.0
        %1012 = vmatprep.subr.mxu0 0.0
        %1013 = vmatpush1.msra.mxu0 0.0
        %1014 = vmatprep.subr.mxu0 0.0
        %1015 = vmatpush1.msra.mxu0 0.0
        %1016 = vmatprep.subr.mxu0 0.0
        %1017 = vmatpush1.msra.mxu0 0.0
        %1018 = vmatprep.subr.mxu0 0.0
        %1019 = vmatpush1.msra.mxu0 0.0
        %1020 = vmatprep.subr.mxu0 0.0
        %1021 = vmatpush1.msra.mxu0 0.0
        %1022 = vmatprep.subr.mxu0 0.0
        %1023 = vmatpush1.msra.mxu0 0.0
        %1024 = vmatprep.subr.mxu0 0.0
        %1025 = vmatpush1.msra.mxu0 0.0
        %1026 = vmatprep.subr.mxu0 0.0
        %1027 = vmatpush1.msra.mxu0 0.0
        %1028 = vmatprep.subr.mxu0 0.0
        %1029 = vmatpush1.msra.mxu0 0.0
        %1030 = vmatprep.subr.mxu0 0.0
        %1031 = vmatpush1.msra.mxu0 0.0
        %1032 = vmatprep.subr.mxu0 0.0
        %1033 = vmatpush1.msra.mxu0 0.0
        %1034 = vmatprep.subr.mxu0 0.0
        %1035 = vmatpush1.msra.mxu0 0.0
        %1036 = vmatprep.subr.mxu0 0.0
        %1037 = vmatpush1.msra.mxu0 0.0
        %1038 = vmatprep.subr.mxu0 0.0
        %1039 = vmatpush1.msra.mxu0 0.0
        %1040 = vmatprep.subr.mxu0 0.0
        %1041 = vmatpush1.msra.mxu0 0.0
        %1042 = vmatprep.subr.mxu0 0.0
        %1043 = vmatpush1.msra.mxu0 0.0
        %1044 = vmatprep.subr.mxu0 0.0
        %1045 = vmatpush1.msra.mxu0 0.0
        %1046 = vmatprep.subr.mxu0 0.0
        %1047 = vmatpush1.msra.mxu0 0.0
        %1048 = vmatprep.subr.mxu0 0.0
        %1049 = vmatpush1.msra.mxu0 0.0
        %1050 = vmatprep.subr.mxu0 0.0
        %1051 = vmatpush1.msra.mxu0 0.0
        %1052 = vmatprep.subr.mxu0 0.0
        %1053 = vmatpush1.msra.mxu0 0.0
        %1054 = vmatprep.subr.mxu0 0.0
        %1055 = vmatpush1.msra.mxu0 0.0
        %1056 = vmatprep.mubr.f32.mxu0 0.0
        %1057 = vmatmul.mubr.f32.gmra.mrb[0].mxu0 %v990
        %v1058 = vpop.f32.mrb[0].mxu0
        %v1059 = vadd.f32 %v988, %v1058
        %v1060 = vpop.f32.mrb[0].mxu0
        %1061 = vdwg.mxu0
        %v1062 = vld [vmem:[%s3 + $0x7] sm:$0x1]
        %v1063 = vld [vmem:[%s3 + $0x8] sm:$0x1]
        %v1064 = vadd.f32 %v213, %v1059
        %v1065 = vsel %vm225, %v1064, 0.0
        %1066 = vadd.xlane.f32.xlu0 %v1065
        %v1067 = vpop.xlane.xlu0 %1066
        %v1068 = vrcp.pop 32.0
        %v1069 = vmul.f32 %v1067, %v1068
        %v1070 = vsub.f32 %v1064, %v1069
        %v1071 = vmul.f32 %v1070, %v1070
        %v1072 = vsel %vm225, %v1071, 0.0
        %1073 = vadd.xlane.f32.xlu0 %v1072
        %v1074 = vpop.xlane.xlu0 %1073
        %v1075 = vmul.f32 %v1074, %v1068
        %v1076 = vadd.f32 %v1075, 1e-05
        %v1077 = vrsqrt.pop %v1076
        %v1078 = vmul.f32 %v1070, %v1077
        %v1079 = vlaneseq
        %v1080 = vshrl.u32 %v1079, 7
        %v1081 = vsub.s32 0, %v1080
        %v1082 = vrot.slane %v1062, %v1081
        %v1083 = vmul.f32 %v1078, %v1082
        %v1084 = vlaneseq
        %v1085 = vshrl.u32 %v1084, 7
        %v1086 = vsub.s32 0, %v1085
        %v1087 = vrot.slane %v1063, %v1086
        %v1088 = vadd.f32 %v1083, %v1087
        %v1089 = vld [vmem:[%s2 + $0x40] sm:$0xff]
        %v1090 = vld [vmem:[%s2 + $0x48] sm:$0xff]
        %v1091 = vld [vmem:[%s2 + $0x50] sm:$0xff]
        %v1092 = vld [vmem:[%s2 + $0x58] sm:$0xff]
        %v1093 = vld [vmem:[%s3 + $0x2] sm:$0x1]
        %v1094 = vlaneseq
        %v1095 = vshrl.u32 %v1094, 7
        %v1096 = vsub.s32 0, %v1095
        %v1097 = vrot.slane %v1093, %v1096
        %v1099 = vsel %vm225, %v1088, 0
        %1101 = vmatprep.subr.mxu0 0.0
        %1102 = vmatpush1.msra.mxu0 %v1089
        %1103 = vmatprep.subr.mxu0 0.0
        %1104 = vmatpush1.msra.mxu0 %v1090
        %1105 = vmatprep.subr.mxu0 0.0
        %1106 = vmatpush1.msra.mxu0 %v1091
        %1107 = vmatprep.subr.mxu0 0.0
        %1108 = vmatpush1.msra.mxu0 %v1092
        %1109 = vmatprep.subr.mxu0 0.0
        %1110 = vmatpush1.msra.mxu0 0.0
        %1111 = vmatprep.subr.mxu0 0.0
        %1112 = vmatpush1.msra.mxu0 0.0
        %1113 = vmatprep.subr.mxu0 0.0
        %1114 = vmatpush1.msra.mxu0 0.0
        %1115 = vmatprep.subr.mxu0 0.0
        %1116 = vmatpush1.msra.mxu0 0.0
        %1117 = vmatprep.subr.mxu0 0.0
        %1118 = vmatpush1.msra.mxu0 0.0
        %1119 = vmatprep.subr.mxu0 0.0
        %1120 = vmatpush1.msra.mxu0 0.0
        %1121 = vmatprep.subr.mxu0 0.0
        %1122 = vmatpush1.msra.mxu0 0.0
        %1123 = vmatprep.subr.mxu0 0.0
        %1124 = vmatpush1.msra.mxu0 0.0
        %1125 = vmatprep.subr.mxu0 0.0
        %1126 = vmatpush1.msra.mxu0 0.0
        %1127 = vmatprep.subr.mxu0 0.0
        %1128 = vmatpush1.msra.mxu0 0.0
        %1129 = vmatprep.subr.mxu0 0.0
        %1130 = vmatpush1.msra.mxu0 0.0
        %1131 = vmatprep.subr.mxu0 0.0
        %1132 = vmatpush1.msra.mxu0 0.0
        %1133 = vmatprep.subr.mxu0 0.0
        %1134 = vmatpush1.msra.mxu0 0.0
        %1135 = vmatprep.subr.mxu0 0.0
        %1136 = vmatpush1.msra.mxu0 0.0
        %1137 = vmatprep.subr.mxu0 0.0
        %1138 = vmatpush1.msra.mxu0 0.0
        %1139 = vmatprep.subr.mxu0 0.0
        %1140 = vmatpush1.msra.mxu0 0.0
        %1141 = vmatprep.subr.mxu0 0.0
        %1142 = vmatpush1.msra.mxu0 0.0
        %1143 = vmatprep.subr.mxu0 0.0
        %1144 = vmatpush1.msra.mxu0 0.0
        %1145 = vmatprep.subr.mxu0 0.0
        %1146 = vmatpush1.msra.mxu0 0.0
        %1147 = vmatprep.subr.mxu0 0.0
        %1148 = vmatpush1.msra.mxu0 0.0
        %1149 = vmatprep.subr.mxu0 0.0
        %1150 = vmatpush1.msra.mxu0 0.0
        %1151 = vmatprep.subr.mxu0 0.0
        %1152 = vmatpush1.msra.mxu0 0.0
        %1153 = vmatprep.subr.mxu0 0.0
        %1154 = vmatpush1.msra.mxu0 0.0
        %1155 = vmatprep.subr.mxu0 0.0
        %1156 = vmatpush1.msra.mxu0 0.0
        %1157 = vmatprep.subr.mxu0 0.0
        %1158 = vmatpush1.msra.mxu0 0.0
        %1159 = vmatprep.subr.mxu0 0.0
        %1160 = vmatpush1.msra.mxu0 0.0
        %1161 = vmatprep.subr.mxu0 0.0
        %1162 = vmatpush1.msra.mxu0 0.0
        %1163 = vmatprep.subr.mxu0 0.0
        %1164 = vmatpush1.msra.mxu0 0.0
        %1165 = vmatprep.mubr.f32.mxu0 0.0
        %1166 = vmatmul.mubr.f32.gmra.mrb[0].mxu0 %v1099
        %v1167 = vpop.f32.mrb[0].mxu0
        %v1168 = vadd.f32 %v1097, %v1167
        %v1169 = vpop.f32.mrb[0].mxu0
        %1170 = vdwg.mxu0
        %v1171 = vld [vmem:[%s2 + $0x60] sm:$0xff]
        %v1172 = vld [vmem:[%s2 + $0x68] sm:$0xff]
        %v1173 = vld [vmem:[%s2 + $0x70] sm:$0xff]
        %v1174 = vld [vmem:[%s2 + $0x78] sm:$0xff]
        %v1175 = vld [vmem:[%s2 + $0x80] sm:$0xff]
        %v1176 = vld [vmem:[%s2 + $0x88] sm:$0xff]
        %v1177 = vld [vmem:[%s2 + $0x90] sm:$0xff]
        %v1178 = vld [vmem:[%s2 + $0x98] sm:$0xff]
        %v1179 = vld [vmem:[%s3 + $0x3] sm:$0x1]
        %v1180 = vlaneseq
        %v1181 = vshrl.u32 %v1180, 7
        %v1182 = vsub.s32 0, %v1181
        %v1183 = vrot.slane %v1179, %v1182
        %vm1184 = vcmask 523264
        %v1186 = vsel %vm1184, %v214, 0
        %v1189 = vsel %vm1184, %v215, 0
        %1191 = vmatprep.subr.mxu0 0.0
        %1192 = vmatpush1.msra.mxu0 %v1171
        %1193 = vmatprep.subr.mxu0 0.0
        %1194 = vmatpush1.msra.mxu0 %v1172
        %1195 = vmatprep.subr.mxu0 0.0
        %1196 = vmatpush1.msra.mxu0 %v1173
        %1197 = vmatprep.subr.mxu0 0.0
        %1198 = vmatpush1.msra.mxu0 %v1174
        %1199 = vmatprep.subr.mxu0 0.0
        %1200 = vmatpush1.msra.mxu0 %v1175
        %1201 = vmatprep.subr.mxu0 0.0
        %1202 = vmatpush1.msra.mxu0 %v1176
        %1203 = vmatprep.subr.mxu0 0.0
        %1204 = vmatpush1.msra.mxu0 %v1177
        %1205 = vmatprep.subr.mxu0 0.0
        %1206 = vmatpush1.msra.mxu0 %v1178
        %1207 = vmatprep.subr.mxu0 0.0
        %1208 = vmatpush1.msra.mxu0 0.0
        %1209 = vmatprep.subr.mxu0 0.0
        %1210 = vmatpush1.msra.mxu0 0.0
        %1211 = vmatprep.subr.mxu0 0.0
        %1212 = vmatpush1.msra.mxu0 0.0
        %1213 = vmatprep.subr.mxu0 0.0
        %1214 = vmatpush1.msra.mxu0 0.0
        %1215 = vmatprep.subr.mxu0 0.0
        %1216 = vmatpush1.msra.mxu0 0.0
        %1217 = vmatprep.subr.mxu0 0.0
        %1218 = vmatpush1.msra.mxu0 0.0
        %1219 = vmatprep.subr.mxu0 0.0
        %1220 = vmatpush1.msra.mxu0 0.0
        %1221 = vmatprep.subr.mxu0 0.0
        %1222 = vmatpush1.msra.mxu0 0.0
        %1223 = vmatprep.subr.mxu0 0.0
        %1224 = vmatpush1.msra.mxu0 0.0
        %1225 = vmatprep.subr.mxu0 0.0
        %1226 = vmatpush1.msra.mxu0 0.0
        %1227 = vmatprep.subr.mxu0 0.0
        %1228 = vmatpush1.msra.mxu0 0.0
        %1229 = vmatprep.subr.mxu0 0.0
        %1230 = vmatpush1.msra.mxu0 0.0
        %1231 = vmatprep.subr.mxu0 0.0
        %1232 = vmatpush1.msra.mxu0 0.0
        %1233 = vmatprep.subr.mxu0 0.0
        %1234 = vmatpush1.msra.mxu0 0.0
        %1235 = vmatprep.subr.mxu0 0.0
        %1236 = vmatpush1.msra.mxu0 0.0
        %1237 = vmatprep.subr.mxu0 0.0
        %1238 = vmatpush1.msra.mxu0 0.0
        %1239 = vmatprep.subr.mxu0 0.0
        %1240 = vmatpush1.msra.mxu0 0.0
        %1241 = vmatprep.subr.mxu0 0.0
        %1242 = vmatpush1.msra.mxu0 0.0
        %1243 = vmatprep.subr.mxu0 0.0
        %1244 = vmatpush1.msra.mxu0 0.0
        %1245 = vmatprep.subr.mxu0 0.0
        %1246 = vmatpush1.msra.mxu0 0.0
        %1247 = vmatprep.subr.mxu0 0.0
        %1248 = vmatpush1.msra.mxu0 0.0
        %1249 = vmatprep.subr.mxu0 0.0
        %1250 = vmatpush1.msra.mxu0 0.0
        %1251 = vmatprep.subr.mxu0 0.0
        %1252 = vmatpush1.msra.mxu0 0.0
        %1253 = vmatprep.subr.mxu0 0.0
        %1254 = vmatpush1.msra.mxu0 0.0
        %1255 = vmatprep.mubr.f32.mxu0 0.0
        %1256 = vmatmul.mubr.f32.gmra.mrb[0].mxu0 %v1186
        %v1257 = vpop.f32.mrb[0].mxu0
        %v1258 = vadd.f32 %v1183, %v1257
        %v1259 = vpop.f32.mrb[0].mxu0
        %1260 = vmatprep.mubr.f32.mxu0 0.0
        %1261 = vmatmul.mubr.f32.gmra.mrb[0].mxu0 %v1189
        %v1262 = vpop.f32.mrb[0].mxu0
        %v1263 = vadd.f32 %v1183, %v1262
        %v1264 = vpop.f32.mrb[0].mxu0
        %1265 = vdwg.mxu0
        %v1267 = vsel %vm302, %v1168, 0
        %v1270 = vsel %vm302, %v1258, 0
        %v1273 = vsel %vm302, %v1263, 0
        %1275 = vmatprep.subr.mxu0 0.0
        %1276 = vmatpush1.xpose.msra.mxu0 %v1270
        %1277 = vmatprep.subr.mxu0 0.0
        %1278 = vmatpush1.xpose.msra.mxu0 %v1273
        %1279 = vmatprep.subr.mxu0 0.0
        %1280 = vmatpush1.xpose.msra.mxu0 0.0
        %1281 = vmatprep.subr.mxu0 0.0
        %1282 = vmatpush1.xpose.msra.mxu0 0.0
        %1283 = vmatprep.subr.mxu0 0.0
        %1284 = vmatpush1.xpose.msra.mxu0 0.0
        %1285 = vmatprep.subr.mxu0 0.0
        %1286 = vmatpush1.xpose.msra.mxu0 0.0
        %1287 = vmatprep.subr.mxu0 0.0
        %1288 = vmatpush1.xpose.msra.mxu0 0.0
        %1289 = vmatprep.subr.mxu0 0.0
        %1290 = vmatpush1.xpose.msra.mxu0 0.0
        %1291 = vmatprep.subr.mxu0 0.0
        %1292 = vmatpush1.xpose.msra.mxu0 0.0
        %1293 = vmatprep.subr.mxu0 0.0
        %1294 = vmatpush1.xpose.msra.mxu0 0.0
        %1295 = vmatprep.subr.mxu0 0.0
        %1296 = vmatpush1.xpose.msra.mxu0 0.0
        %1297 = vmatprep.subr.mxu0 0.0
        %1298 = vmatpush1.xpose.msra.mxu0 0.0
        %1299 = vmatprep.subr.mxu0 0.0
        %1300 = vmatpush1.xpose.msra.mxu0 0.0
        %1301 = vmatprep.subr.mxu0 0.0
        %1302 = vmatpush1.xpose.msra.mxu0 0.0
        %1303 = vmatprep.subr.mxu0 0.0
        %1304 = vmatpush1.xpose.msra.mxu0 0.0
        %1305 = vmatprep.subr.mxu0 0.0
        %1306 = vmatpush1.xpose.msra.mxu0 0.0
        %1307 = vmatprep.subr.mxu0 0.0
        %1308 = vmatpush1.xpose.msra.mxu0 0.0
        %1309 = vmatprep.subr.mxu0 0.0
        %1310 = vmatpush1.xpose.msra.mxu0 0.0
        %1311 = vmatprep.subr.mxu0 0.0
        %1312 = vmatpush1.xpose.msra.mxu0 0.0
        %1313 = vmatprep.subr.mxu0 0.0
        %1314 = vmatpush1.xpose.msra.mxu0 0.0
        %1315 = vmatprep.subr.mxu0 0.0
        %1316 = vmatpush1.xpose.msra.mxu0 0.0
        %1317 = vmatprep.subr.mxu0 0.0
        %1318 = vmatpush1.xpose.msra.mxu0 0.0
        %1319 = vmatprep.subr.mxu0 0.0
        %1320 = vmatpush1.xpose.msra.mxu0 0.0
        %1321 = vmatprep.subr.mxu0 0.0
        %1322 = vmatpush1.xpose.msra.mxu0 0.0
        %1323 = vmatprep.subr.mxu0 0.0
        %1324 = vmatpush1.xpose.msra.mxu0 0.0
        %1325 = vmatprep.subr.mxu0 0.0
        %1326 = vmatpush1.xpose.msra.mxu0 0.0
        %1327 = vmatprep.subr.mxu0 0.0
        %1328 = vmatpush1.xpose.msra.mxu0 0.0
        %1329 = vmatprep.subr.mxu0 0.0
        %1330 = vmatpush1.xpose.msra.mxu0 0.0
        %1331 = vmatprep.subr.mxu0 0.0
        %1332 = vmatpush1.xpose.msra.mxu0 0.0
        %1333 = vmatprep.subr.mxu0 0.0
        %1334 = vmatpush1.xpose.msra.mxu0 0.0
        %1335 = vmatprep.subr.mxu0 0.0
        %1336 = vmatpush1.xpose.msra.mxu0 0.0
        %1337 = vmatprep.subr.mxu0 0.0
        %1338 = vmatpush1.xpose.msra.mxu0 0.0
        %1339 = vmatprep.mubr.f32.mxu0 0.0
        %1340 = vmatmul.mubr.f32.gmra.mrb[0].mxu0 %v1267
        %v1341 = vpop.f32.mrb[0].mxu0
        %v1342 = vadd.f32 0.0, %v1341
        %v1343 = vpop.f32.mrb[0].mxu0
        %1344 = vdwg.mxu0
        %vm1345 = vcmask 80896
        %v1346 = vsel %vm1345, %v1342, -inf
        %1347 = vmax.xlane.f32.xlu0 %v1346
        %v1348 = vpop.xlane.xlu0 %1347
        %v1349 = vsub.f32 %v1342, %v1348
        %v1350 = vmul.f32 %v1349, 1.442695
        %v1351 = vpow.pop %v1350
        %v1352 = vsel %vm1345, %v1351, 0.0
        %1353 = vadd.xlane.f32.xlu0 %v1352
        %v1354 = vpop.xlane.xlu0 %1353
        %v1355 = vrcp.pop %v1354
        %v1356 = vmul.f32 1.0, %v1355
        %1357 = vrot.lane.b32.xlu0 %v1258, 96
        %v1358 = vpop.permute.xlu0 %1357
        %1359 = vrot.lane.b32.xlu0 %v1263, 96
        %v1360 = vpop.permute.xlu0 %1359
        %v1363 = vsel %vm1345, %v1351, 0
        %vm1365 = vcmask 1041408
        %v1366 = vsel %vm1365, %v1360, 0
        %1368 = vmatprep.subr.mxu0 0.0
        %1369 = vmatpush1.msra.mxu0 %v1358
        %1370 = vmatprep.subr.mxu0 0.0
        %1371 = vmatpush1.msra.mxu0 %v1366
        %1372 = vmatprep.subr.mxu0 0.0
        %1373 = vmatpush1.msra.mxu0 0.0
        %1374 = vmatprep.subr.mxu0 0.0
        %1375 = vmatpush1.msra.mxu0 0.0
        %1376 = vmatprep.subr.mxu0 0.0
        %1377 = vmatpush1.msra.mxu0 0.0
        %1378 = vmatprep.subr.mxu0 0.0
        %1379 = vmatpush1.msra.mxu0 0.0
        %1380 = vmatprep.subr.mxu0 0.0
        %1381 = vmatpush1.msra.mxu0 0.0
        %1382 = vmatprep.subr.mxu0 0.0
        %1383 = vmatpush1.msra.mxu0 0.0
        %1384 = vmatprep.subr.mxu0 0.0
        %1385 = vmatpush1.msra.mxu0 0.0
        %1386 = vmatprep.subr.mxu0 0.0
        %1387 = vmatpush1.msra.mxu0 0.0
        %1388 = vmatprep.subr.mxu0 0.0
        %1389 = vmatpush1.msra.mxu0 0.0
        %1390 = vmatprep.subr.mxu0 0.0
        %1391 = vmatpush1.msra.mxu0 0.0
        %1392 = vmatprep.subr.mxu0 0.0
        %1393 = vmatpush1.msra.mxu0 0.0
        %1394 = vmatprep.subr.mxu0 0.0
        %1395 = vmatpush1.msra.mxu0 0.0
        %1396 = vmatprep.subr.mxu0 0.0
        %1397 = vmatpush1.msra.mxu0 0.0
        %1398 = vmatprep.subr.mxu0 0.0
        %1399 = vmatpush1.msra.mxu0 0.0
        %1400 = vmatprep.subr.mxu0 0.0
        %1401 = vmatpush1.msra.mxu0 0.0
        %1402 = vmatprep.subr.mxu0 0.0
        %1403 = vmatpush1.msra.mxu0 0.0
        %1404 = vmatprep.subr.mxu0 0.0
        %1405 = vmatpush1.msra.mxu0 0.0
        %1406 = vmatprep.subr.mxu0 0.0
        %1407 = vmatpush1.msra.mxu0 0.0
        %1408 = vmatprep.subr.mxu0 0.0
        %1409 = vmatpush1.msra.mxu0 0.0
        %1410 = vmatprep.subr.mxu0 0.0
        %1411 = vmatpush1.msra.mxu0 0.0
        %1412 = vmatprep.subr.mxu0 0.0
        %1413 = vmatpush1.msra.mxu0 0.0
        %1414 = vmatprep.subr.mxu0 0.0
        %1415 = vmatpush1.msra.mxu0 0.0
        %1416 = vmatprep.subr.mxu0 0.0
        %1417 = vmatpush1.msra.mxu0 0.0
        %1418 = vmatprep.subr.mxu0 0.0
        %1419 = vmatpush1.msra.mxu0 0.0
        %1420 = vmatprep.subr.mxu0 0.0
        %1421 = vmatpush1.msra.mxu0 0.0
        %1422 = vmatprep.subr.mxu0 0.0
        %1423 = vmatpush1.msra.mxu0 0.0
        %1424 = vmatprep.subr.mxu0 0.0
        %1425 = vmatpush1.msra.mxu0 0.0
        %1426 = vmatprep.subr.mxu0 0.0
        %1427 = vmatpush1.msra.mxu0 0.0
        %1428 = vmatprep.subr.mxu0 0.0
        %1429 = vmatpush1.msra.mxu0 0.0
        %1430 = vmatprep.subr.mxu0 0.0
        %1431 = vmatpush1.msra.mxu0 0.0
        %1432 = vmatprep.mubr.f32.mxu0 0.0
        %1433 = vmatmul.mubr.f32.gmra.mrb[0].mxu0 %v1363
        %v1434 = vpop.f32.mrb[0].mxu0
        %v1435 = vadd.f32 0.0, %v1434
        %v1436 = vpop.f32.mrb[0].mxu0
        %1437 = vdwg.mxu0
        %v1438 = vmul.f32 %v1435, %v1356
        %1439 = vrot.lane.b32.xlu0 %v1168, 120
        %v1440 = vpop.permute.xlu0 %1439
        %1441 = vrot.lane.b32.xlu0 %v1258, 120
        %v1442 = vpop.permute.xlu0 %1441
        %1443 = vrot.lane.b32.xlu0 %v1263, 120
        %v1444 = vpop.permute.xlu0 %1443
        %v1445 = vsel %vm302, %v1440, 0
        %v1447 = vsel %vm302, %v1442, 0
        %v1449 = vsel %vm302, %v1444, 0
        %1451 = vmatprep.subr.mxu0 0.0
        %1452 = vmatpush1.xpose.msra.mxu0 %v1447
        %1453 = vmatprep.subr.mxu0 0.0
        %1454 = vmatpush1.xpose.msra.mxu0 %v1449
        %1455 = vmatprep.subr.mxu0 0.0
        %1456 = vmatpush1.xpose.msra.mxu0 0.0
        %1457 = vmatprep.subr.mxu0 0.0
        %1458 = vmatpush1.xpose.msra.mxu0 0.0
        %1459 = vmatprep.subr.mxu0 0.0
        %1460 = vmatpush1.xpose.msra.mxu0 0.0
        %1461 = vmatprep.subr.mxu0 0.0
        %1462 = vmatpush1.xpose.msra.mxu0 0.0
        %1463 = vmatprep.subr.mxu0 0.0
        %1464 = vmatpush1.xpose.msra.mxu0 0.0
        %1465 = vmatprep.subr.mxu0 0.0
        %1466 = vmatpush1.xpose.msra.mxu0 0.0
        %1467 = vmatprep.subr.mxu0 0.0
        %1468 = vmatpush1.xpose.msra.mxu0 0.0
        %1469 = vmatprep.subr.mxu0 0.0
        %1470 = vmatpush1.xpose.msra.mxu0 0.0
        %1471 = vmatprep.subr.mxu0 0.0
        %1472 = vmatpush1.xpose.msra.mxu0 0.0
        %1473 = vmatprep.subr.mxu0 0.0
        %1474 = vmatpush1.xpose.msra.mxu0 0.0
        %1475 = vmatprep.subr.mxu0 0.0
        %1476 = vmatpush1.xpose.msra.mxu0 0.0
        %1477 = vmatprep.subr.mxu0 0.0
        %1478 = vmatpush1.xpose.msra.mxu0 0.0
        %1479 = vmatprep.subr.mxu0 0.0
        %1480 = vmatpush1.xpose.msra.mxu0 0.0
        %1481 = vmatprep.subr.mxu0 0.0
        %1482 = vmatpush1.xpose.msra.mxu0 0.0
        %1483 = vmatprep.subr.mxu0 0.0
        %1484 = vmatpush1.xpose.msra.mxu0 0.0
        %1485 = vmatprep.subr.mxu0 0.0
        %1486 = vmatpush1.xpose.msra.mxu0 0.0
        %1487 = vmatprep.subr.mxu0 0.0
        %1488 = vmatpush1.xpose.msra.mxu0 0.0
        %1489 = vmatprep.subr.mxu0 0.0
        %1490 = vmatpush1.xpose.msra.mxu0 0.0
        %1491 = vmatprep.subr.mxu0 0.0
        %1492 = vmatpush1.xpose.msra.mxu0 0.0
        %1493 = vmatprep.subr.mxu0 0.0
        %1494 = vmatpush1.xpose.msra.mxu0 0.0
        %1495 = vmatprep.subr.mxu0 0.0
        %1496 = vmatpush1.xpose.msra.mxu0 0.0
        %1497 = vmatprep.subr.mxu0 0.0
        %1498 = vmatpush1.xpose.msra.mxu0 0.0
        %1499 = vmatprep.subr.mxu0 0.0
        %1500 = vmatpush1.xpose.msra.mxu0 0.0
        %1501 = vmatprep.subr.mxu0 0.0
        %1502 = vmatpush1.xpose.msra.mxu0 0.0
        %1503 = vmatprep.subr.mxu0 0.0
        %1504 = vmatpush1.xpose.msra.mxu0 0.0
        %1505 = vmatprep.subr.mxu0 0.0
        %1506 = vmatpush1.xpose.msra.mxu0 0.0
        %1507 = vmatprep.subr.mxu0 0.0
        %1508 = vmatpush1.xpose.msra.mxu0 0.0
        %1509 = vmatprep.subr.mxu0 0.0
        %1510 = vmatpush1.xpose.msra.mxu0 0.0
        %1511 = vmatprep.subr.mxu0 0.0
        %1512 = vmatpush1.xpose.msra.mxu0 0.0
        %1513 = vmatprep.subr.mxu0 0.0
        %1514 = vmatpush1.xpose.msra.mxu0 0.0
        %1515 = vmatprep.mubr.f32.mxu0 0.0
        %1516 = vmatmul.mubr.f32.gmra.mrb[0].mxu0 %v1445
        %v1517 = vpop.f32.mrb[0].mxu0
        %v1518 = vadd.f32 0.0, %v1517
        %v1519 = vpop.f32.mrb[0].mxu0
        %1520 = vdwg.mxu0
        %v1521 = vsel %vm1345, %v1518, -inf
        %1522 = vmax.xlane.f32.xlu0 %v1521
        %v1523 = vpop.xlane.xlu0 %1522
        %v1524 = vsub.f32 %v1518, %v1523
        %v1525 = vmul.f32 %v1524, 1.442695
        %v1526 = vpow.pop %v1525
        %v1527 = vsel %vm1345, %v1526, 0.0
        %1528 = vadd.xlane.f32.xlu0 %v1527
        %v1529 = vpop.xlane.xlu0 %1528
        %v1530 = vrcp.pop %v1529
        %v1531 = vmul.f32 1.0, %v1530
        %1532 = vrot.lane.b32.xlu0 %v1258, 88
        %v1533 = vpop.permute.xlu0 %1532
        %1534 = vrot.lane.b32.xlu0 %v1263, 88
        %v1535 = vpop.permute.xlu0 %1534
        %v1538 = vsel %vm1345, %v1526, 0
        %v1540 = vsel %vm1365, %v1535, 0
        %1542 = vmatprep.subr.mxu0 0.0
        %1543 = vmatpush1.msra.mxu0 %v1533
        %1544 = vmatprep.subr.mxu0 0.0
        %1545 = vmatpush1.msra.mxu0 %v1540
        %1546 = vmatprep.subr.mxu0 0.0
        %1547 = vmatpush1.msra.mxu0 0.0
        %1548 = vmatprep.subr.mxu0 0.0
        %1549 = vmatpush1.msra.mxu0 0.0
        %1550 = vmatprep.subr.mxu0 0.0
        %1551 = vmatpush1.msra.mxu0 0.0
        %1552 = vmatprep.subr.mxu0 0.0
        %1553 = vmatpush1.msra.mxu0 0.0
        %1554 = vmatprep.subr.mxu0 0.0
        %1555 = vmatpush1.msra.mxu0 0.0
        %1556 = vmatprep.subr.mxu0 0.0
        %1557 = vmatpush1.msra.mxu0 0.0
        %1558 = vmatprep.subr.mxu0 0.0
        %1559 = vmatpush1.msra.mxu0 0.0
        %1560 = vmatprep.subr.mxu0 0.0
        %1561 = vmatpush1.msra.mxu0 0.0
        %1562 = vmatprep.subr.mxu0 0.0
        %1563 = vmatpush1.msra.mxu0 0.0
        %1564 = vmatprep.subr.mxu0 0.0
        %1565 = vmatpush1.msra.mxu0 0.0
        %1566 = vmatprep.subr.mxu0 0.0
        %1567 = vmatpush1.msra.mxu0 0.0
        %1568 = vmatprep.subr.mxu0 0.0
        %1569 = vmatpush1.msra.mxu0 0.0
        %1570 = vmatprep.subr.mxu0 0.0
        %1571 = vmatpush1.msra.mxu0 0.0
        %1572 = vmatprep.subr.mxu0 0.0
        %1573 = vmatpush1.msra.mxu0 0.0
        %1574 = vmatprep.subr.mxu0 0.0
        %1575 = vmatpush1.msra.mxu0 0.0
        %1576 = vmatprep.subr.mxu0 0.0
        %1577 = vmatpush1.msra.mxu0 0.0
        %1578 = vmatprep.subr.mxu0 0.0
        %1579 = vmatpush1.msra.mxu0 0.0
        %1580 = vmatprep.subr.mxu0 0.0
        %1581 = vmatpush1.msra.mxu0 0.0
        %1582 = vmatprep.subr.mxu0 0.0
        %1583 = vmatpush1.msra.mxu0 0.0
        %1584 = vmatprep.subr.mxu0 0.0
        %1585 = vmatpush1.msra.mxu0 0.0
        %1586 = vmatprep.subr.mxu0 0.0
        %1587 = vmatpush1.msra.mxu0 0.0
        %1588 = vmatprep.subr.mxu0 0.0
        %1589 = vmatpush1.msra.mxu0 0.0
        %1590 = vmatprep.subr.mxu0 0.0
        %1591 = vmatpush1.msra.mxu0 0.0
        %1592 = vmatprep.subr.mxu0 0.0
        %1593 = vmatpush1.msra.mxu0 0.0
        %1594 = vmatprep.subr.mxu0 0.0
        %1595 = vmatpush1.msra.mxu0 0.0
        %1596 = vmatprep.subr.mxu0 0.0
        %1597 = vmatpush1.msra.mxu0 0.0
        %1598 = vmatprep.subr.mxu0 0.0
        %1599 = vmatpush1.msra.mxu0 0.0
        %1600 = vmatprep.subr.mxu0 0.0
        %1601 = vmatpush1.msra.mxu0 0.0
        %1602 = vmatprep.subr.mxu0 0.0
        %1603 = vmatpush1.msra.mxu0 0.0
        %1604 = vmatprep.subr.mxu0 0.0
        %1605 = vmatpush1.msra.mxu0 0.0
        %1606 = vmatprep.mubr.f32.mxu0 0.0
        %1607 = vmatmul.mubr.f32.gmra.mrb[0].mxu0 %v1538
        %v1608 = vpop.f32.mrb[0].mxu0
        %v1609 = vadd.f32 0.0, %v1608
        %v1610 = vpop.f32.mrb[0].mxu0
        %1611 = vdwg.mxu0
        %v1612 = vmul.f32 %v1609, %v1531
        %1613 = vrot.lane.b32.xlu0 %v1168, 112
        %v1614 = vpop.permute.xlu0 %1613
        %1615 = vrot.lane.b32.xlu0 %v1258, 112
        %v1616 = vpop.permute.xlu0 %1615
        %1617 = vrot.lane.b32.xlu0 %v1263, 112
        %v1618 = vpop.permute.xlu0 %1617
        %v1619 = vsel %vm302, %v1614, 0
        %v1621 = vsel %vm302, %v1616, 0
        %v1623 = vsel %vm302, %v1618, 0
        %1625 = vmatprep.subr.mxu0 0.0
        %1626 = vmatpush1.xpose.msra.mxu0 %v1621
        %1627 = vmatprep.subr.mxu0 0.0
        %1628 = vmatpush1.xpose.msra.mxu0 %v1623
        %1629 = vmatprep.subr.mxu0 0.0
        %1630 = vmatpush1.xpose.msra.mxu0 0.0
        %1631 = vmatprep.subr.mxu0 0.0
        %1632 = vmatpush1.xpose.msra.mxu0 0.0
        %1633 = vmatprep.subr.mxu0 0.0
        %1634 = vmatpush1.xpose.msra.mxu0 0.0
        %1635 = vmatprep.subr.mxu0 0.0
        %1636 = vmatpush1.xpose.msra.mxu0 0.0
        %1637 = vmatprep.subr.mxu0 0.0
        %1638 = vmatpush1.xpose.msra.mxu0 0.0
        %1639 = vmatprep.subr.mxu0 0.0
        %1640 = vmatpush1.xpose.msra.mxu0 0.0
        %1641 = vmatprep.subr.mxu0 0.0
        %1642 = vmatpush1.xpose.msra.mxu0 0.0
        %1643 = vmatprep.subr.mxu0 0.0
        %1644 = vmatpush1.xpose.msra.mxu0 0.0
        %1645 = vmatprep.subr.mxu0 0.0
        %1646 = vmatpush1.xpose.msra.mxu0 0.0
        %1647 = vmatprep.subr.mxu0 0.0
        %1648 = vmatpush1.xpose.msra.mxu0 0.0
        %1649 = vmatprep.subr.mxu0 0.0
        %1650 = vmatpush1.xpose.msra.mxu0 0.0
        %1651 = vmatprep.subr.mxu0 0.0
        %1652 = vmatpush1.xpose.msra.mxu0 0.0
        %1653 = vmatprep.subr.mxu0 0.0
        %1654 = vmatpush1.xpose.msra.mxu0 0.0
        %1655 = vmatprep.subr.mxu0 0.0
        %1656 = vmatpush1.xpose.msra.mxu0 0.0
        %1657 = vmatprep.subr.mxu0 0.0
        %1658 = vmatpush1.xpose.msra.mxu0 0.0
        %1659 = vmatprep.subr.mxu0 0.0
        %1660 = vmatpush1.xpose.msra.mxu0 0.0
        %1661 = vmatprep.subr.mxu0 0.0
        %1662 = vmatpush1.xpose.msra.mxu0 0.0
        %1663 = vmatprep.subr.mxu0 0.0
        %1664 = vmatpush1.xpose.msra.mxu0 0.0
        %1665 = vmatprep.subr.mxu0 0.0
        %1666 = vmatpush1.xpose.msra.mxu0 0.0
        %1667 = vmatprep.subr.mxu0 0.0
        %1668 = vmatpush1.xpose.msra.mxu0 0.0
        %1669 = vmatprep.subr.mxu0 0.0
        %1670 = vmatpush1.xpose.msra.mxu0 0.0
        %1671 = vmatprep.subr.mxu0 0.0
        %1672 = vmatpush1.xpose.msra.mxu0 0.0
        %1673 = vmatprep.subr.mxu0 0.0
        %1674 = vmatpush1.xpose.msra.mxu0 0.0
        %1675 = vmatprep.subr.mxu0 0.0
        %1676 = vmatpush1.xpose.msra.mxu0 0.0
        %1677 = vmatprep.subr.mxu0 0.0
        %1678 = vmatpush1.xpose.msra.mxu0 0.0
        %1679 = vmatprep.subr.mxu0 0.0
        %1680 = vmatpush1.xpose.msra.mxu0 0.0
        %1681 = vmatprep.subr.mxu0 0.0
        %1682 = vmatpush1.xpose.msra.mxu0 0.0
        %1683 = vmatprep.subr.mxu0 0.0
        %1684 = vmatpush1.xpose.msra.mxu0 0.0
        %1685 = vmatprep.subr.mxu0 0.0
        %1686 = vmatpush1.xpose.msra.mxu0 0.0
        %1687 = vmatprep.subr.mxu0 0.0
        %1688 = vmatpush1.xpose.msra.mxu0 0.0
        %1689 = vmatprep.mubr.f32.mxu0 0.0
        %1690 = vmatmul.mubr.f32.gmra.mrb[0].mxu0 %v1619
        %v1691 = vpop.f32.mrb[0].mxu0
        %v1692 = vadd.f32 0.0, %v1691
        %v1693 = vpop.f32.mrb[0].mxu0
        %1694 = vdwg.mxu0
        %v1695 = vsel %vm1345, %v1692, -inf
        %1696 = vmax.xlane.f32.xlu0 %v1695
        %v1697 = vpop.xlane.xlu0 %1696
        %v1698 = vsub.f32 %v1692, %v1697
        %v1699 = vmul.f32 %v1698, 1.442695
        %v1700 = vpow.pop %v1699
        %v1701 = vsel %vm1345, %v1700, 0.0
        %1702 = vadd.xlane.f32.xlu0 %v1701
        %v1703 = vpop.xlane.xlu0 %1702
        %v1704 = vrcp.pop %v1703
        %v1705 = vmul.f32 1.0, %v1704
        %1706 = vrot.lane.b32.xlu0 %v1258, 80
        %v1707 = vpop.permute.xlu0 %1706
        %1708 = vrot.lane.b32.xlu0 %v1263, 80
        %v1709 = vpop.permute.xlu0 %1708
        %v1712 = vsel %vm1345, %v1700, 0
        %v1714 = vsel %vm1365, %v1709, 0
        %1716 = vmatprep.subr.mxu0 0.0
        %1717 = vmatpush1.msra.mxu0 %v1707
        %1718 = vmatprep.subr.mxu0 0.0
        %1719 = vmatpush1.msra.mxu0 %v1714
        %1720 = vmatprep.subr.mxu0 0.0
        %1721 = vmatpush1.msra.mxu0 0.0
        %1722 = vmatprep.subr.mxu0 0.0
        %1723 = vmatpush1.msra.mxu0 0.0
        %1724 = vmatprep.subr.mxu0 0.0
        %1725 = vmatpush1.msra.mxu0 0.0
        %1726 = vmatprep.subr.mxu0 0.0
        %1727 = vmatpush1.msra.mxu0 0.0
        %1728 = vmatprep.subr.mxu0 0.0
        %1729 = vmatpush1.msra.mxu0 0.0
        %1730 = vmatprep.subr.mxu0 0.0
        %1731 = vmatpush1.msra.mxu0 0.0
        %1732 = vmatprep.subr.mxu0 0.0
        %1733 = vmatpush1.msra.mxu0 0.0
        %1734 = vmatprep.subr.mxu0 0.0
        %1735 = vmatpush1.msra.mxu0 0.0
        %1736 = vmatprep.subr.mxu0 0.0
        %1737 = vmatpush1.msra.mxu0 0.0
        %1738 = vmatprep.subr.mxu0 0.0
        %1739 = vmatpush1.msra.mxu0 0.0
        %1740 = vmatprep.subr.mxu0 0.0
        %1741 = vmatpush1.msra.mxu0 0.0
        %1742 = vmatprep.subr.mxu0 0.0
        %1743 = vmatpush1.msra.mxu0 0.0
        %1744 = vmatprep.subr.mxu0 0.0
        %1745 = vmatpush1.msra.mxu0 0.0
        %1746 = vmatprep.subr.mxu0 0.0
        %1747 = vmatpush1.msra.mxu0 0.0
        %1748 = vmatprep.subr.mxu0 0.0
        %1749 = vmatpush1.msra.mxu0 0.0
        %1750 = vmatprep.subr.mxu0 0.0
        %1751 = vmatpush1.msra.mxu0 0.0
        %1752 = vmatprep.subr.mxu0 0.0
        %1753 = vmatpush1.msra.mxu0 0.0
        %1754 = vmatprep.subr.mxu0 0.0
        %1755 = vmatpush1.msra.mxu0 0.0
        %1756 = vmatprep.subr.mxu0 0.0
        %1757 = vmatpush1.msra.mxu0 0.0
        %1758 = vmatprep.subr.mxu0 0.0
        %1759 = vmatpush1.msra.mxu0 0.0
        %1760 = vmatprep.subr.mxu0 0.0
        %1761 = vmatpush1.msra.mxu0 0.0
        %1762 = vmatprep.subr.mxu0 0.0
        %1763 = vmatpush1.msra.mxu0 0.0
        %1764 = vmatprep.subr.mxu0 0.0
        %1765 = vmatpush1.msra.mxu0 0.0
        %1766 = vmatprep.subr.mxu0 0.0
        %1767 = vmatpush1.msra.mxu0 0.0
        %1768 = vmatprep.subr.mxu0 0.0
        %1769 = vmatpush1.msra.mxu0 0.0
        %1770 = vmatprep.subr.mxu0 0.0
        %1771 = vmatpush1.msra.mxu0 0.0
        %1772 = vmatprep.subr.mxu0 0.0
        %1773 = vmatpush1.msra.mxu0 0.0
        %1774 = vmatprep.subr.mxu0 0.0
        %1775 = vmatpush1.msra.mxu0 0.0
        %1776 = vmatprep.subr.mxu0 0.0
        %1777 = vmatpush1.msra.mxu0 0.0
        %1778 = vmatprep.subr.mxu0 0.0
        %1779 = vmatpush1.msra.mxu0 0.0
        %1780 = vmatprep.mubr.f32.mxu0 0.0
        %1781 = vmatmul.mubr.f32.gmra.mrb[0].mxu0 %v1712
        %v1782 = vpop.f32.mrb[0].mxu0
        %v1783 = vadd.f32 0.0, %v1782
        %v1784 = vpop.f32.mrb[0].mxu0
        %1785 = vdwg.mxu0
        %v1786 = vmul.f32 %v1783, %v1705
        %1787 = vrot.lane.b32.xlu0 %v1168, 104
        %v1788 = vpop.permute.xlu0 %1787
        %1789 = vrot.lane.b32.xlu0 %v1258, 104
        %v1790 = vpop.permute.xlu0 %1789
        %1791 = vrot.lane.b32.xlu0 %v1263, 104
        %v1792 = vpop.permute.xlu0 %1791
        %v1793 = vsel %vm302, %v1788, 0
        %v1795 = vsel %vm302, %v1790, 0
        %v1797 = vsel %vm302, %v1792, 0
        %1799 = vmatprep.subr.mxu0 0.0
        %1800 = vmatpush1.xpose.msra.mxu0 %v1795
        %1801 = vmatprep.subr.mxu0 0.0
        %1802 = vmatpush1.xpose.msra.mxu0 %v1797
        %1803 = vmatprep.subr.mxu0 0.0
        %1804 = vmatpush1.xpose.msra.mxu0 0.0
        %1805 = vmatprep.subr.mxu0 0.0
        %1806 = vmatpush1.xpose.msra.mxu0 0.0
        %1807 = vmatprep.subr.mxu0 0.0
        %1808 = vmatpush1.xpose.msra.mxu0 0.0
        %1809 = vmatprep.subr.mxu0 0.0
        %1810 = vmatpush1.xpose.msra.mxu0 0.0
        %1811 = vmatprep.subr.mxu0 0.0
        %1812 = vmatpush1.xpose.msra.mxu0 0.0
        %1813 = vmatprep.subr.mxu0 0.0
        %1814 = vmatpush1.xpose.msra.mxu0 0.0
        %1815 = vmatprep.subr.mxu0 0.0
        %1816 = vmatpush1.xpose.msra.mxu0 0.0
        %1817 = vmatprep.subr.mxu0 0.0
        %1818 = vmatpush1.xpose.msra.mxu0 0.0
        %1819 = vmatprep.subr.mxu0 0.0
        %1820 = vmatpush1.xpose.msra.mxu0 0.0
        %1821 = vmatprep.subr.mxu0 0.0
        %1822 = vmatpush1.xpose.msra.mxu0 0.0
        %1823 = vmatprep.subr.mxu0 0.0
        %1824 = vmatpush1.xpose.msra.mxu0 0.0
        %1825 = vmatprep.subr.mxu0 0.0
        %1826 = vmatpush1.xpose.msra.mxu0 0.0
        %1827 = vmatprep.subr.mxu0 0.0
        %1828 = vmatpush1.xpose.msra.mxu0 0.0
        %1829 = vmatprep.subr.mxu0 0.0
        %1830 = vmatpush1.xpose.msra.mxu0 0.0
        %1831 = vmatprep.subr.mxu0 0.0
        %1832 = vmatpush1.xpose.msra.mxu0 0.0
        %1833 = vmatprep.subr.mxu0 0.0
        %1834 = vmatpush1.xpose.msra.mxu0 0.0
        %1835 = vmatprep.subr.mxu0 0.0
        %1836 = vmatpush1.xpose.msra.mxu0 0.0
        %1837 = vmatprep.subr.mxu0 0.0
        %1838 = vmatpush1.xpose.msra.mxu0 0.0
        %1839 = vmatprep.subr.mxu0 0.0
        %1840 = vmatpush1.xpose.msra.mxu0 0.0
        %1841 = vmatprep.subr.mxu0 0.0
        %1842 = vmatpush1.xpose.msra.mxu0 0.0
        %1843 = vmatprep.subr.mxu0 0.0
        %1844 = vmatpush1.xpose.msra.mxu0 0.0
        %1845 = vmatprep.subr.mxu0 0.0
        %1846 = vmatpush1.xpose.msra.mxu0 0.0
        %1847 = vmatprep.subr.mxu0 0.0
        %1848 = vmatpush1.xpose.msra.mxu0 0.0
        %1849 = vmatprep.subr.mxu0 0.0
        %1850 = vmatpush1.xpose.msra.mxu0 0.0
        %1851 = vmatprep.subr.mxu0 0.0
        %1852 = vmatpush1.xpose.msra.mxu0 0.0
        %1853 = vmatprep.subr.mxu0 0.0
        %1854 = vmatpush1.xpose.msra.mxu0 0.0
        %1855 = vmatprep.subr.mxu0 0.0
        %1856 = vmatpush1.xpose.msra.mxu0 0.0
        %1857 = vmatprep.subr.mxu0 0.0
        %1858 = vmatpush1.xpose.msra.mxu0 0.0
        %1859 = vmatprep.subr.mxu0 0.0
        %1860 = vmatpush1.xpose.msra.mxu0 0.0
        %1861 = vmatprep.subr.mxu0 0.0
        %1862 = vmatpush1.xpose.msra.mxu0 0.0
        %1863 = vmatprep.mubr.f32.mxu0 0.0
        %1864 = vmatmul.mubr.f32.gmra.mrb[0].mxu0 %v1793
        %v1865 = vpop.f32.mrb[0].mxu0
        %v1866 = vadd.f32 0.0, %v1865
        %v1867 = vpop.f32.mrb[0].mxu0
        %1868 = vdwg.mxu0
        %v1869 = vsel %vm1345, %v1866, -inf
        %1870 = vmax.xlane.f32.xlu0 %v1869
        %v1871 = vpop.xlane.xlu0 %1870
        %v1872 = vsub.f32 %v1866, %v1871
        %v1873 = vmul.f32 %v1872, 1.442695
        %v1874 = vpow.pop %v1873
        %v1875 = vsel %vm1345, %v1874, 0.0
        %1876 = vadd.xlane.f32.xlu0 %v1875
        %v1877 = vpop.xlane.xlu0 %1876
        %v1878 = vrcp.pop %v1877
        %v1879 = vmul.f32 1.0, %v1878
        %1880 = vrot.lane.b32.xlu0 %v1258, 72
        %v1881 = vpop.permute.xlu0 %1880
        %1882 = vrot.lane.b32.xlu0 %v1263, 72
        %v1883 = vpop.permute.xlu0 %1882
        %v1886 = vsel %vm1345, %v1874, 0
        %v1888 = vsel %vm1365, %v1883, 0
        %1890 = vmatprep.subr.mxu0 0.0
        %1891 = vmatpush1.msra.mxu0 %v1881
        %1892 = vmatprep.subr.mxu0 0.0
        %1893 = vmatpush1.msra.mxu0 %v1888
        %1894 = vmatprep.subr.mxu0 0.0
        %1895 = vmatpush1.msra.mxu0 0.0
        %1896 = vmatprep.subr.mxu0 0.0
        %1897 = vmatpush1.msra.mxu0 0.0
        %1898 = vmatprep.subr.mxu0 0.0
        %1899 = vmatpush1.msra.mxu0 0.0
        %1900 = vmatprep.subr.mxu0 0.0
        %1901 = vmatpush1.msra.mxu0 0.0
        %1902 = vmatprep.subr.mxu0 0.0
        %1903 = vmatpush1.msra.mxu0 0.0
        %1904 = vmatprep.subr.mxu0 0.0
        %1905 = vmatpush1.msra.mxu0 0.0
        %1906 = vmatprep.subr.mxu0 0.0
        %1907 = vmatpush1.msra.mxu0 0.0
        %1908 = vmatprep.subr.mxu0 0.0
        %1909 = vmatpush1.msra.mxu0 0.0
        %1910 = vmatprep.subr.mxu0 0.0
        %1911 = vmatpush1.msra.mxu0 0.0
        %1912 = vmatprep.subr.mxu0 0.0
        %1913 = vmatpush1.msra.mxu0 0.0
        %1914 = vmatprep.subr.mxu0 0.0
        %1915 = vmatpush1.msra.mxu0 0.0
        %1916 = vmatprep.subr.mxu0 0.0
        %1917 = vmatpush1.msra.mxu0 0.0
        %1918 = vmatprep.subr.mxu0 0.0
        %1919 = vmatpush1.msra.mxu0 0.0
        %1920 = vmatprep.subr.mxu0 0.0
        %1921 = vmatpush1.msra.mxu0 0.0
        %1922 = vmatprep.subr.mxu0 0.0
        %1923 = vmatpush1.msra.mxu0 0.0
        %1924 = vmatprep.subr.mxu0 0.0
        %1925 = vmatpush1.msra.mxu0 0.0
        %1926 = vmatprep.subr.mxu0 0.0
        %1927 = vmatpush1.msra.mxu0 0.0
        %1928 = vmatprep.subr.mxu0 0.0
        %1929 = vmatpush1.msra.mxu0 0.0
        %1930 = vmatprep.subr.mxu0 0.0
        %1931 = vmatpush1.msra.mxu0 0.0
        %1932 = vmatprep.subr.mxu0 0.0
        %1933 = vmatpush1.msra.mxu0 0.0
        %1934 = vmatprep.subr.mxu0 0.0
        %1935 = vmatpush1.msra.mxu0 0.0
        %1936 = vmatprep.subr.mxu0 0.0
        %1937 = vmatpush1.msra.mxu0 0.0
        %1938 = vmatprep.subr.mxu0 0.0
        %1939 = vmatpush1.msra.mxu0 0.0
        %1940 = vmatprep.subr.mxu0 0.0
        %1941 = vmatpush1.msra.mxu0 0.0
        %1942 = vmatprep.subr.mxu0 0.0
        %1943 = vmatpush1.msra.mxu0 0.0
        %1944 = vmatprep.subr.mxu0 0.0
        %1945 = vmatpush1.msra.mxu0 0.0
        %1946 = vmatprep.subr.mxu0 0.0
        %1947 = vmatpush1.msra.mxu0 0.0
        %1948 = vmatprep.subr.mxu0 0.0
        %1949 = vmatpush1.msra.mxu0 0.0
        %1950 = vmatprep.subr.mxu0 0.0
        %1951 = vmatpush1.msra.mxu0 0.0
        %1952 = vmatprep.subr.mxu0 0.0
        %1953 = vmatpush1.msra.mxu0 0.0
        %1954 = vmatprep.mubr.f32.mxu0 0.0
        %1955 = vmatmul.mubr.f32.gmra.mrb[0].mxu0 %v1886
        %v1956 = vpop.f32.mrb[0].mxu0
        %v1957 = vadd.f32 0.0, %v1956
        %v1958 = vpop.f32.mrb[0].mxu0
        %1959 = vdwg.mxu0
        %v1960 = vmul.f32 %v1957, %v1879
        %1962 = vrot.lane.b32.xlu0 %v1612, 8
        %v1963 = vpop.permute.xlu0 %1962
        %1966 = vrot.lane.b32.xlu0 %v1786, 16
        %v1967 = vpop.permute.xlu0 %1966
        %1970 = vrot.lane.b32.xlu0 %v1960, 24
        %v1971 = vpop.permute.xlu0 %1970
        %v1973 = vsel %vm302, %v1438, %v1963
        %v1974 = vsel %vm976, %v1973, %v1967
        %v1975 = vsel %vm978, %v1974, %v1971
        %v1976 = vld [vmem:[%s2 + $0xa0] sm:$0xff]
        %v1977 = vld [vmem:[%s2 + $0xa8] sm:$0xff]
        %v1978 = vld [vmem:[%s2 + $0xb0] sm:$0xff]
        %v1979 = vld [vmem:[%s2 + $0xb8] sm:$0xff]
        %v1980 = vld [vmem:[%s3 + $0x4] sm:$0x1]
        %v1981 = vlaneseq
        %v1982 = vshrl.u32 %v1981, 7
        %v1983 = vsub.s32 0, %v1982
        %v1984 = vrot.slane %v1980, %v1983
        %v1986 = vsel %vm225, %v1975, 0
        %1988 = vmatprep.subr.mxu0 0.0
        %1989 = vmatpush1.msra.mxu0 %v1976
        %1990 = vmatprep.subr.mxu0 0.0
        %1991 = vmatpush1.msra.mxu0 %v1977
        %1992 = vmatprep.subr.mxu0 0.0
        %1993 = vmatpush1.msra.mxu0 %v1978
        %1994 = vmatprep.subr.mxu0 0.0
        %1995 = vmatpush1.msra.mxu0 %v1979
        %1996 = vmatprep.subr.mxu0 0.0
        %1997 = vmatpush1.msra.mxu0 0.0
        %1998 = vmatprep.subr.mxu0 0.0
        %1999 = vmatpush1.msra.mxu0 0.0
        %2000 = vmatprep.subr.mxu0 0.0
        %2001 = vmatpush1.msra.mxu0 0.0
        %2002 = vmatprep.subr.mxu0 0.0
        %2003 = vmatpush1.msra.mxu0 0.0
        %2004 = vmatprep.subr.mxu0 0.0
        %2005 = vmatpush1.msra.mxu0 0.0
        %2006 = vmatprep.subr.mxu0 0.0
        %2007 = vmatpush1.msra.mxu0 0.0
        %2008 = vmatprep.subr.mxu0 0.0
        %2009 = vmatpush1.msra.mxu0 0.0
        %2010 = vmatprep.subr.mxu0 0.0
        %2011 = vmatpush1.msra.mxu0 0.0
        %2012 = vmatprep.subr.mxu0 0.0
        %2013 = vmatpush1.msra.mxu0 0.0
        %2014 = vmatprep.subr.mxu0 0.0
        %2015 = vmatpush1.msra.mxu0 0.0
        %2016 = vmatprep.subr.mxu0 0.0
        %2017 = vmatpush1.msra.mxu0 0.0
        %2018 = vmatprep.subr.mxu0 0.0
        %2019 = vmatpush1.msra.mxu0 0.0
        %2020 = vmatprep.subr.mxu0 0.0
        %2021 = vmatpush1.msra.mxu0 0.0
        %2022 = vmatprep.subr.mxu0 0.0
        %2023 = vmatpush1.msra.mxu0 0.0
        %2024 = vmatprep.subr.mxu0 0.0
        %2025 = vmatpush1.msra.mxu0 0.0
        %2026 = vmatprep.subr.mxu0 0.0
        %2027 = vmatpush1.msra.mxu0 0.0
        %2028 = vmatprep.subr.mxu0 0.0
        %2029 = vmatpush1.msra.mxu0 0.0
        %2030 = vmatprep.subr.mxu0 0.0
        %2031 = vmatpush1.msra.mxu0 0.0
        %2032 = vmatprep.subr.mxu0 0.0
        %2033 = vmatpush1.msra.mxu0 0.0
        %2034 = vmatprep.subr.mxu0 0.0
        %2035 = vmatpush1.msra.mxu0 0.0
        %2036 = vmatprep.subr.mxu0 0.0
        %2037 = vmatpush1.msra.mxu0 0.0
        %2038 = vmatprep.subr.mxu0 0.0
        %2039 = vmatpush1.msra.mxu0 0.0
        %2040 = vmatprep.subr.mxu0 0.0
        %2041 = vmatpush1.msra.mxu0 0.0
        %2042 = vmatprep.subr.mxu0 0.0
        %2043 = vmatpush1.msra.mxu0 0.0
        %2044 = vmatprep.subr.mxu0 0.0
        %2045 = vmatpush1.msra.mxu0 0.0
        %2046 = vmatprep.subr.mxu0 0.0
        %2047 = vmatpush1.msra.mxu0 0.0
        %2048 = vmatprep.subr.mxu0 0.0
        %2049 = vmatpush1.msra.mxu0 0.0
        %2050 = vmatprep.subr.mxu0 0.0
        %2051 = vmatpush1.msra.mxu0 0.0
        %2052 = vmatprep.mubr.f32.mxu0 0.0
        %2053 = vmatmul.mubr.f32.gmra.mrb[0].mxu0 %v1986
        %v2054 = vpop.f32.mrb[0].mxu0
        %v2055 = vadd.f32 %v1984, %v2054
        %v2056 = vpop.f32.mrb[0].mxu0
        %2057 = vdwg.mxu0
        %v2058 = vld [vmem:[%s3 + $0x9] sm:$0x1]
        %v2059 = vld [vmem:[%s3 + $0xa] sm:$0x1]
        %v2060 = vadd.f32 %v1088, %v2055
        %v2061 = vsel %vm225, %v2060, 0.0
        %2062 = vadd.xlane.f32.xlu0 %v2061
        %v2063 = vpop.xlane.xlu0 %2062
        %v2064 = vmul.f32 %v2063, %v1068
        %v2065 = vsub.f32 %v2060, %v2064
        %v2066 = vmul.f32 %v2065, %v2065
        %v2067 = vsel %vm225, %v2066, 0.0
        %2068 = vadd.xlane.f32.xlu0 %v2067
        %v2069 = vpop.xlane.xlu0 %2068
        %v2070 = vmul.f32 %v2069, %v1068
        %v2071 = vadd.f32 %v2070, 1e-05
        %v2072 = vrsqrt.pop %v2071
        %v2073 = vmul.f32 %v2065, %v2072
        %v2074 = vlaneseq
        %v2075 = vshrl.u32 %v2074, 7
        %v2076 = vsub.s32 0, %v2075
        %v2077 = vrot.slane %v2058, %v2076
        %v2078 = vmul.f32 %v2073, %v2077
        %v2079 = vlaneseq
        %v2080 = vshrl.u32 %v2079, 7
        %v2081 = vsub.s32 0, %v2080
        %v2082 = vrot.slane %v2059, %v2081
        %v2083 = vadd.f32 %v2078, %v2082
        %v2084 = vld [vmem:[%s2 + $0xc0] sm:$0xff]
        %v2085 = vld [vmem:[%s2 + $0xc8] sm:$0xff]
        %v2086 = vld [vmem:[%s2 + $0xd0] sm:$0xff]
        %v2087 = vld [vmem:[%s2 + $0xd8] sm:$0xff]
        %v2088 = vld [vmem:[%s3 + $0x5] sm:$0x1]
        %v2089 = vlaneseq
        %v2090 = vshrl.u32 %v2089, 7
        %v2091 = vsub.s32 0, %v2090
        %v2092 = vrot.slane %v2088, %v2091
        %v2094 = vsel %vm225, %v2083, 0
        %2096 = vmatprep.subr.mxu0 0.0
        %2097 = vmatpush1.msra.mxu0 %v2084
        %2098 = vmatprep.subr.mxu0 0.0
        %2099 = vmatpush1.msra.mxu0 %v2085
        %2100 = vmatprep.subr.mxu0 0.0
        %2101 = vmatpush1.msra.mxu0 %v2086
        %2102 = vmatprep.subr.mxu0 0.0
        %2103 = vmatpush1.msra.mxu0 %v2087
        %2104 = vmatprep.subr.mxu0 0.0
        %2105 = vmatpush1.msra.mxu0 0.0
        %2106 = vmatprep.subr.mxu0 0.0
        %2107 = vmatpush1.msra.mxu0 0.0
        %2108 = vmatprep.subr.mxu0 0.0
        %2109 = vmatpush1.msra.mxu0 0.0
        %2110 = vmatprep.subr.mxu0 0.0
        %2111 = vmatpush1.msra.mxu0 0.0
        %2112 = vmatprep.subr.mxu0 0.0
        %2113 = vmatpush1.msra.mxu0 0.0
        %2114 = vmatprep.subr.mxu0 0.0
        %2115 = vmatpush1.msra.mxu0 0.0
        %2116 = vmatprep.subr.mxu0 0.0
        %2117 = vmatpush1.msra.mxu0 0.0
        %2118 = vmatprep.subr.mxu0 0.0
        %2119 = vmatpush1.msra.mxu0 0.0
        %2120 = vmatprep.subr.mxu0 0.0
        %2121 = vmatpush1.msra.mxu0 0.0
        %2122 = vmatprep.subr.mxu0 0.0
        %2123 = vmatpush1.msra.mxu0 0.0
        %2124 = vmatprep.subr.mxu0 0.0
        %2125 = vmatpush1.msra.mxu0 0.0
        %2126 = vmatprep.subr.mxu0 0.0
        %2127 = vmatpush1.msra.mxu0 0.0
        %2128 = vmatprep.subr.mxu0 0.0
        %2129 = vmatpush1.msra.mxu0 0.0
        %2130 = vmatprep.subr.mxu0 0.0
        %2131 = vmatpush1.msra.mxu0 0.0
        %2132 = vmatprep.subr.mxu0 0.0
        %2133 = vmatpush1.msra.mxu0 0.0
        %2134 = vmatprep.subr.mxu0 0.0
        %2135 = vmatpush1.msra.mxu0 0.0
        %2136 = vmatprep.subr.mxu0 0.0
        %2137 = vmatpush1.msra.mxu0 0.0
        %2138 = vmatprep.subr.mxu0 0.0
        %2139 = vmatpush1.msra.mxu0 0.0
        %2140 = vmatprep.subr.mxu0 0.0
        %2141 = vmatpush1.msra.mxu0 0.0
        %2142 = vmatprep.subr.mxu0 0.0
        %2143 = vmatpush1.msra.mxu0 0.0
        %2144 = vmatprep.subr.mxu0 0.0
        %2145 = vmatpush1.msra.mxu0 0.0
        %2146 = vmatprep.subr.mxu0 0.0
        %2147 = vmatpush1.msra.mxu0 0.0
        %2148 = vmatprep.subr.mxu0 0.0
        %2149 = vmatpush1.msra.mxu0 0.0
        %2150 = vmatprep.subr.mxu0 0.0
        %2151 = vmatpush1.msra.mxu0 0.0
        %2152 = vmatprep.subr.mxu0 0.0
        %2153 = vmatpush1.msra.mxu0 0.0
        %2154 = vmatprep.subr.mxu0 0.0
        %2155 = vmatpush1.msra.mxu0 0.0
        %2156 = vmatprep.subr.mxu0 0.0
        %2157 = vmatpush1.msra.mxu0 0.0
        %2158 = vmatprep.subr.mxu0 0.0
        %2159 = vmatpush1.msra.mxu0 0.0
        %2160 = vmatprep.mubr.f32.mxu0 0.0
        %2161 = vmatmul.mubr.f32.gmra.mrb[0].mxu0 %v2094
        %v2162 = vpop.f32.mrb[0].mxu0
        %v2163 = vadd.f32 %v2092, %v2162
        %v2164 = vpop.f32.mrb[0].mxu0
        %2165 = vdwg.mxu0
        %v2166 = vmax.f32 %v2163, 0.0
        %v2167 = vld [vmem:[%s2 + $0xe0] sm:$0xff]
        %v2168 = vld [vmem:[%s2 + $0xe8] sm:$0xff]
        %v2169 = vld [vmem:[%s2 + $0xf0] sm:$0xff]
        %v2170 = vld [vmem:[%s2 + $0xf8] sm:$0xff]
        %v2171 = vld [vmem:[%s2 + $0x100] sm:$0xff]
        %v2172 = vld [vmem:[%s2 + $0x108] sm:$0xff]
        %v2173 = vld [vmem:[%s2 + $0x110] sm:$0xff]
        %v2174 = vld [vmem:[%s2 + $0x118] sm:$0xff]
        %v2175 = vld [vmem:[%s3 + $0x6] sm:$0x1]
        %v2176 = vlaneseq
        %v2177 = vshrl.u32 %v2176, 7
        %v2178 = vsub.s32 0, %v2177
        %v2179 = vrot.slane %v2175, %v2178
        %v2181 = vsel %vm1184, %v2166, 0
        %2183 = vmatprep.subr.mxu0 0.0
        %2184 = vmatpush1.msra.mxu0 %v2167
        %2185 = vmatprep.subr.mxu0 0.0
        %2186 = vmatpush1.msra.mxu0 %v2168
        %2187 = vmatprep.subr.mxu0 0.0
        %2188 = vmatpush1.msra.mxu0 %v2169
        %2189 = vmatprep.subr.mxu0 0.0
        %2190 = vmatpush1.msra.mxu0 %v2170
        %2191 = vmatprep.subr.mxu0 0.0
        %2192 = vmatpush1.msra.mxu0 %v2171
        %2193 = vmatprep.subr.mxu0 0.0
        %2194 = vmatpush1.msra.mxu0 %v2172
        %2195 = vmatprep.subr.mxu0 0.0
        %2196 = vmatpush1.msra.mxu0 %v2173
        %2197 = vmatprep.subr.mxu0 0.0
        %2198 = vmatpush1.msra.mxu0 %v2174
        %2199 = vmatprep.subr.mxu0 0.0
        %2200 = vmatpush1.msra.mxu0 0.0
        %2201 = vmatprep.subr.mxu0 0.0
        %2202 = vmatpush1.msra.mxu0 0.0
        %2203 = vmatprep.subr.mxu0 0.0
        %2204 = vmatpush1.msra.mxu0 0.0
        %2205 = vmatprep.subr.mxu0 0.0
        %2206 = vmatpush1.msra.mxu0 0.0
        %2207 = vmatprep.subr.mxu0 0.0
        %2208 = vmatpush1.msra.mxu0 0.0
        %2209 = vmatprep.subr.mxu0 0.0
        %2210 = vmatpush1.msra.mxu0 0.0
        %2211 = vmatprep.subr.mxu0 0.0
        %2212 = vmatpush1.msra.mxu0 0.0
        %2213 = vmatprep.subr.mxu0 0.0
        %2214 = vmatpush1.msra.mxu0 0.0
        %2215 = vmatprep.subr.mxu0 0.0
        %2216 = vmatpush1.msra.mxu0 0.0
        %2217 = vmatprep.subr.mxu0 0.0
        %2218 = vmatpush1.msra.mxu0 0.0
        %2219 = vmatprep.subr.mxu0 0.0
        %2220 = vmatpush1.msra.mxu0 0.0
        %2221 = vmatprep.subr.mxu0 0.0
        %2222 = vmatpush1.msra.mxu0 0.0
        %2223 = vmatprep.subr.mxu0 0.0
        %2224 = vmatpush1.msra.mxu0 0.0
        %2225 = vmatprep.subr.mxu0 0.0
        %2226 = vmatpush1.msra.mxu0 0.0
        %2227 = vmatprep.subr.mxu0 0.0
        %2228 = vmatpush1.msra.mxu0 0.0
        %2229 = vmatprep.subr.mxu0 0.0
        %2230 = vmatpush1.msra.mxu0 0.0
        %2231 = vmatprep.subr.mxu0 0.0
        %2232 = vmatpush1.msra.mxu0 0.0
        %2233 = vmatprep.subr.mxu0 0.0
        %2234 = vmatpush1.msra.mxu0 0.0
        %2235 = vmatprep.subr.mxu0 0.0
        %2236 = vmatpush1.msra.mxu0 0.0
        %2237 = vmatprep.subr.mxu0 0.0
        %2238 = vmatpush1.msra.mxu0 0.0
        %2239 = vmatprep.subr.mxu0 0.0
        %2240 = vmatpush1.msra.mxu0 0.0
        %2241 = vmatprep.subr.mxu0 0.0
        %2242 = vmatpush1.msra.mxu0 0.0
        %2243 = vmatprep.subr.mxu0 0.0
        %2244 = vmatpush1.msra.mxu0 0.0
        %2245 = vmatprep.subr.mxu0 0.0
        %2246 = vmatpush1.msra.mxu0 0.0
        %2247 = vmatprep.mubr.f32.mxu0 0.0
        %2248 = vmatmul.mubr.f32.gmra.mrb[0].mxu0 %v2181
        %v2249 = vpop.f32.mrb[0].mxu0
        %v2250 = vadd.f32 %v2179, %v2249
        %v2251 = vpop.f32.mrb[0].mxu0
        %2252 = vdwg.mxu0
        %v2253 = vld [vmem:[%s3 + $0xb] sm:$0x1]
        %v2254 = vld [vmem:[%s3 + $0xc] sm:$0x1]
        %v2255 = vadd.f32 %v2083, %v2250
        %v2256 = vsel %vm225, %v2255, 0.0
        %2257 = vadd.xlane.f32.xlu0 %v2256
        %v2258 = vpop.xlane.xlu0 %2257
        %v2259 = vmul.f32 %v2258, %v1068
        %v2260 = vsub.f32 %v2255, %v2259
        %v2261 = vmul.f32 %v2260, %v2260
        %v2262 = vsel %vm225, %v2261, 0.0
        %2263 = vadd.xlane.f32.xlu0 %v2262
        %v2264 = vpop.xlane.xlu0 %2263
        %v2265 = vmul.f32 %v2264, %v1068
        %v2266 = vadd.f32 %v2265, 1e-05
        %v2267 = vrsqrt.pop %v2266
        %v2268 = vmul.f32 %v2260, %v2267
        %v2269 = vlaneseq
        %v2270 = vshrl.u32 %v2269, 7
        %v2271 = vsub.s32 0, %v2270
        %v2272 = vrot.slane %v2253, %v2271
        %v2273 = vmul.f32 %v2268, %v2272
        %v2274 = vlaneseq
        %v2275 = vshrl.u32 %v2274, 7
        %v2276 = vsub.s32 0, %v2275
        %v2277 = vrot.slane %v2254, %v2276
        %v2278 = vadd.f32 %v2273, %v2277
        %v2279 = vld [vmem:[%s2 + $0x120] sm:$0xff]
        %v2280 = vld [vmem:[%s2 + $0x128] sm:$0xff]
        %v2281 = vld [vmem:[%s2 + $0x130] sm:$0xff]
        %v2282 = vld [vmem:[%s2 + $0x138] sm:$0xff]
        %v2283 = vld [vmem:[%s3 + $0xd] sm:$0x1]
        %v2284 = vlaneseq
        %v2285 = vshrl.u32 %v2284, 7
        %v2286 = vsub.s32 0, %v2285
        %v2287 = vrot.slane %v2283, %v2286
        %v2289 = vsel %vm225, %v2278, 0
        %2291 = vmatprep.subr.mxu0 0.0
        %2292 = vmatpush1.msra.mxu0 %v2279
        %2293 = vmatprep.subr.mxu0 0.0
        %2294 = vmatpush1.msra.mxu0 %v2280
        %2295 = vmatprep.subr.mxu0 0.0
        %2296 = vmatpush1.msra.mxu0 %v2281
        %2297 = vmatprep.subr.mxu0 0.0
        %2298 = vmatpush1.msra.mxu0 %v2282
        %2299 = vmatprep.subr.mxu0 0.0
        %2300 = vmatpush1.msra.mxu0 0.0
        %2301 = vmatprep.subr.mxu0 0.0
        %2302 = vmatpush1.msra.mxu0 0.0
        %2303 = vmatprep.subr.mxu0 0.0
        %2304 = vmatpush1.msra.mxu0 0.0
        %2305 = vmatprep.subr.mxu0 0.0
        %2306 = vmatpush1.msra.mxu0 0.0
        %2307 = vmatprep.subr.mxu0 0.0
        %2308 = vmatpush1.msra.mxu0 0.0
        %2309 = vmatprep.subr.mxu0 0.0
        %2310 = vmatpush1.msra.mxu0 0.0
        %2311 = vmatprep.subr.mxu0 0.0
        %2312 = vmatpush1.msra.mxu0 0.0
        %2313 = vmatprep.subr.mxu0 0.0
        %2314 = vmatpush1.msra.mxu0 0.0
        %2315 = vmatprep.subr.mxu0 0.0
        %2316 = vmatpush1.msra.mxu0 0.0
        %2317 = vmatprep.subr.mxu0 0.0
        %2318 = vmatpush1.msra.mxu0 0.0
        %2319 = vmatprep.subr.mxu0 0.0
        %2320 = vmatpush1.msra.mxu0 0.0
        %2321 = vmatprep.subr.mxu0 0.0
        %2322 = vmatpush1.msra.mxu0 0.0
        %2323 = vmatprep.subr.mxu0 0.0
        %2324 = vmatpush1.msra.mxu0 0.0
        %2325 = vmatprep.subr.mxu0 0.0
        %2326 = vmatpush1.msra.mxu0 0.0
        %2327 = vmatprep.subr.mxu0 0.0
        %2328 = vmatpush1.msra.mxu0 0.0
        %2329 = vmatprep.subr.mxu0 0.0
        %2330 = vmatpush1.msra.mxu0 0.0
        %2331 = vmatprep.subr.mxu0 0.0
        %2332 = vmatpush1.msra.mxu0 0.0
        %2333 = vmatprep.subr.mxu0 0.0
        %2334 = vmatpush1.msra.mxu0 0.0
        %2335 = vmatprep.subr.mxu0 0.0
        %2336 = vmatpush1.msra.mxu0 0.0
        %2337 = vmatprep.subr.mxu0 0.0
        %2338 = vmatpush1.msra.mxu0 0.0
        %2339 = vmatprep.subr.mxu0 0.0
        %2340 = vmatpush1.msra.mxu0 0.0
        %2341 = vmatprep.subr.mxu0 0.0
        %2342 = vmatpush1.msra.mxu0 0.0
        %2343 = vmatprep.subr.mxu0 0.0
        %2344 = vmatpush1.msra.mxu0 0.0
        %2345 = vmatprep.subr.mxu0 0.0
        %2346 = vmatpush1.msra.mxu0 0.0
        %2347 = vmatprep.subr.mxu0 0.0
        %2348 = vmatpush1.msra.mxu0 0.0
        %2349 = vmatprep.subr.mxu0 0.0
        %2350 = vmatpush1.msra.mxu0 0.0
        %2351 = vmatprep.subr.mxu0 0.0
        %2352 = vmatpush1.msra.mxu0 0.0
        %2353 = vmatprep.subr.mxu0 0.0
        %2354 = vmatpush1.msra.mxu0 0.0
        %2355 = vmatprep.mubr.f32.mxu0 0.0
        %2356 = vmatmul.mubr.f32.gmra.mrb[0].mxu0 %v2289
        %v2357 = vpop.f32.mrb[0].mxu0
        %v2358 = vadd.f32 %v2287, %v2357
        %v2359 = vpop.f32.mrb[0].mxu0
        %2360 = vdwg.mxu0
        %2362 = vrot.lane.b32.xlu0 %v2358, 96
        %v2363 = vpop.permute.xlu0 %2362
        %v2364 = vsel %vm302, %v2358, 0
        %v2366 = vsel %vm302, %v2363, 0
        %2368 = vmatprep.subr.mxu0 0.0
        %2369 = vmatpush1.xpose.msra.mxu0 %v2366
        %2370 = vmatprep.subr.mxu0 0.0
        %2371 = vmatpush1.xpose.msra.mxu0 0.0
        %2372 = vmatprep.subr.mxu0 0.0
        %2373 = vmatpush1.xpose.msra.mxu0 0.0
        %2374 = vmatprep.subr.mxu0 0.0
        %2375 = vmatpush1.xpose.msra.mxu0 0.0
        %2376 = vmatprep.subr.mxu0 0.0
        %2377 = vmatpush1.xpose.msra.mxu0 0.0
        %2378 = vmatprep.subr.mxu0 0.0
        %2379 = vmatpush1.xpose.msra.mxu0 0.0
        %2380 = vmatprep.subr.mxu0 0.0
        %2381 = vmatpush1.xpose.msra.mxu0 0.0
        %2382 = vmatprep.subr.mxu0 0.0
        %2383 = vmatpush1.xpose.msra.mxu0 0.0
        %2384 = vmatprep.subr.mxu0 0.0
        %2385 = vmatpush1.xpose.msra.mxu0 0.0
        %2386 = vmatprep.subr.mxu0 0.0
        %2387 = vmatpush1.xpose.msra.mxu0 0.0
        %2388 = vmatprep.subr.mxu0 0.0
        %2389 = vmatpush1.xpose.msra.mxu0 0.0
        %2390 = vmatprep.subr.mxu0 0.0
        %2391 = vmatpush1.xpose.msra.mxu0 0.0
        %2392 = vmatprep.subr.mxu0 0.0
        %2393 = vmatpush1.xpose.msra.mxu0 0.0
        %2394 = vmatprep.subr.mxu0 0.0
        %2395 = vmatpush1.xpose.msra.mxu0 0.0
        %2396 = vmatprep.subr.mxu0 0.0
        %2397 = vmatpush1.xpose.msra.mxu0 0.0
        %2398 = vmatprep.subr.mxu0 0.0
        %2399 = vmatpush1.xpose.msra.mxu0 0.0
        %2400 = vmatprep.subr.mxu0 0.0
        %2401 = vmatpush1.xpose.msra.mxu0 0.0
        %2402 = vmatprep.subr.mxu0 0.0
        %2403 = vmatpush1.xpose.msra.mxu0 0.0
        %2404 = vmatprep.subr.mxu0 0.0
        %2405 = vmatpush1.xpose.msra.mxu0 0.0
        %2406 = vmatprep.subr.mxu0 0.0
        %2407 = vmatpush1.xpose.msra.mxu0 0.0
        %2408 = vmatprep.subr.mxu0 0.0
        %2409 = vmatpush1.xpose.msra.mxu0 0.0
        %2410 = vmatprep.subr.mxu0 0.0
        %2411 = vmatpush1.xpose.msra.mxu0 0.0
        %2412 = vmatprep.subr.mxu0 0.0
        %2413 = vmatpush1.xpose.msra.mxu0 0.0
        %2414 = vmatprep.subr.mxu0 0.0
        %2415 = vmatpush1.xpose.msra.mxu0 0.0
        %2416 = vmatprep.subr.mxu0 0.0
        %2417 = vmatpush1.xpose.msra.mxu0 0.0
        %2418 = vmatprep.subr.mxu0 0.0
        %2419 = vmatpush1.xpose.msra.mxu0 0.0
        %2420 = vmatprep.subr.mxu0 0.0
        %2421 = vmatpush1.xpose.msra.mxu0 0.0
        %2422 = vmatprep.subr.mxu0 0.0
        %2423 = vmatpush1.xpose.msra.mxu0 0.0
        %2424 = vmatprep.subr.mxu0 0.0
        %2425 = vmatpush1.xpose.msra.mxu0 0.0
        %2426 = vmatprep.subr.mxu0 0.0
        %2427 = vmatpush1.xpose.msra.mxu0 0.0
        %2428 = vmatprep.subr.mxu0 0.0
        %2429 = vmatpush1.xpose.msra.mxu0 0.0
        %2430 = vmatprep.subr.mxu0 0.0
        %2431 = vmatpush1.xpose.msra.mxu0 0.0
        %2432 = vmatprep.mubr.f32.mxu0 0.0
        %2433 = vmatmul.mubr.f32.gmra.mrb[0].mxu0 %v2364
        %v2434 = vpop.f32.mrb[0].mxu0
        %v2435 = vadd.f32 0.0, %v2434
        %v2436 = vpop.f32.mrb[0].mxu0
        %2437 = vdwg.mxu0
        %v2438 = vsel %vm302, %v2435, -inf
        %2439 = vmax.xlane.f32.xlu0 %v2438
        %v2440 = vpop.xlane.xlu0 %2439
        %v2441 = vsub.f32 %v2435, %v2440
        %v2442 = vmul.f32 %v2441, 1.442695
        %v2443 = vpow.pop %v2442
        %v2444 = vsel %vm302, %v2443, 0.0
        %2445 = vadd.xlane.f32.xlu0 %v2444
        %v2446 = vpop.xlane.xlu0 %2445
        %v2447 = vrcp.pop %v2446
        %v2448 = vmul.f32 1.0, %v2447
        %2449 = vrot.lane.b32.xlu0 %v2358, 64
        %v2450 = vpop.permute.xlu0 %2449
        %v2453 = vsel %vm302, %v2443, 0
        %2455 = vmatprep.subr.mxu0 0.0
        %2456 = vmatpush1.msra.mxu0 %v2450
        %2457 = vmatprep.subr.mxu0 0.0
        %2458 = vmatpush1.msra.mxu0 0.0
        %2459 = vmatprep.subr.mxu0 0.0
        %2460 = vmatpush1.msra.mxu0 0.0
        %2461 = vmatprep.subr.mxu0 0.0
        %2462 = vmatpush1.msra.mxu0 0.0
        %2463 = vmatprep.subr.mxu0 0.0
        %2464 = vmatpush1.msra.mxu0 0.0
        %2465 = vmatprep.subr.mxu0 0.0
        %2466 = vmatpush1.msra.mxu0 0.0
        %2467 = vmatprep.subr.mxu0 0.0
        %2468 = vmatpush1.msra.mxu0 0.0
        %2469 = vmatprep.subr.mxu0 0.0
        %2470 = vmatpush1.msra.mxu0 0.0
        %2471 = vmatprep.subr.mxu0 0.0
        %2472 = vmatpush1.msra.mxu0 0.0
        %2473 = vmatprep.subr.mxu0 0.0
        %2474 = vmatpush1.msra.mxu0 0.0
        %2475 = vmatprep.subr.mxu0 0.0
        %2476 = vmatpush1.msra.mxu0 0.0
        %2477 = vmatprep.subr.mxu0 0.0
        %2478 = vmatpush1.msra.mxu0 0.0
        %2479 = vmatprep.subr.mxu0 0.0
        %2480 = vmatpush1.msra.mxu0 0.0
        %2481 = vmatprep.subr.mxu0 0.0
        %2482 = vmatpush1.msra.mxu0 0.0
        %2483 = vmatprep.subr.mxu0 0.0
        %2484 = vmatpush1.msra.mxu0 0.0
        %2485 = vmatprep.subr.mxu0 0.0
        %2486 = vmatpush1.msra.mxu0 0.0
        %2487 = vmatprep.subr.mxu0 0.0
        %2488 = vmatpush1.msra.mxu0 0.0
        %2489 = vmatprep.subr.mxu0 0.0
        %2490 = vmatpush1.msra.mxu0 0.0
        %2491 = vmatprep.subr.mxu0 0.0
        %2492 = vmatpush1.msra.mxu0 0.0
        %2493 = vmatprep.subr.mxu0 0.0
        %2494 = vmatpush1.msra.mxu0 0.0
        %2495 = vmatprep.subr.mxu0 0.0
        %2496 = vmatpush1.msra.mxu0 0.0
        %2497 = vmatprep.subr.mxu0 0.0
        %2498 = vmatpush1.msra.mxu0 0.0
        %2499 = vmatprep.subr.mxu0 0.0
        %2500 = vmatpush1.msra.mxu0 0.0
        %2501 = vmatprep.subr.mxu0 0.0
        %2502 = vmatpush1.msra.mxu0 0.0
        %2503 = vmatprep.subr.mxu0 0.0
        %2504 = vmatpush1.msra.mxu0 0.0
        %2505 = vmatprep.subr.mxu0 0.0
        %2506 = vmatpush1.msra.mxu0 0.0
        %2507 = vmatprep.subr.mxu0 0.0
        %2508 = vmatpush1.msra.mxu0 0.0
        %2509 = vmatprep.subr.mxu0 0.0
        %2510 = vmatpush1.msra.mxu0 0.0
        %2511 = vmatprep.subr.mxu0 0.0
        %2512 = vmatpush1.msra.mxu0 0.0
        %2513 = vmatprep.subr.mxu0 0.0
        %2514 = vmatpush1.msra.mxu0 0.0
        %2515 = vmatprep.subr.mxu0 0.0
        %2516 = vmatpush1.msra.mxu0 0.0
        %2517 = vmatprep.subr.mxu0 0.0
        %2518 = vmatpush1.msra.mxu0 0.0
        %2519 = vmatprep.mubr.f32.mxu0 0.0
        %2520 = vmatmul.mubr.f32.gmra.mrb[0].mxu0 %v2453
        %v2521 = vpop.f32.mrb[0].mxu0
        %v2522 = vadd.f32 0.0, %v2521
        %v2523 = vpop.f32.mrb[0].mxu0
        %2524 = vdwg.mxu0
        %v2525 = vmul.f32 %v2522, %v2448
        %2526 = vrot.lane.b32.xlu0 %v2358, 120
        %v2527 = vpop.permute.xlu0 %2526
        %2528 = vrot.lane.b32.xlu0 %v2358, 88
        %v2529 = vpop.permute.xlu0 %2528
        %v2530 = vsel %vm302, %v2527, 0
        %v2532 = vsel %vm302, %v2529, 0
        %2534 = vmatprep.subr.mxu0 0.0
        %2535 = vmatpush1.xpose.msra.mxu0 %v2532
        %2536 = vmatprep.subr.mxu0 0.0
        %2537 = vmatpush1.xpose.msra.mxu0 0.0
        %2538 = vmatprep.subr.mxu0 0.0
        %2539 = vmatpush1.xpose.msra.mxu0 0.0
        %2540 = vmatprep.subr.mxu0 0.0
        %2541 = vmatpush1.xpose.msra.mxu0 0.0
        %2542 = vmatprep.subr.mxu0 0.0
        %2543 = vmatpush1.xpose.msra.mxu0 0.0
        %2544 = vmatprep.subr.mxu0 0.0
        %2545 = vmatpush1.xpose.msra.mxu0 0.0
        %2546 = vmatprep.subr.mxu0 0.0
        %2547 = vmatpush1.xpose.msra.mxu0 0.0
        %2548 = vmatprep.subr.mxu0 0.0
        %2549 = vmatpush1.xpose.msra.mxu0 0.0
        %2550 = vmatprep.subr.mxu0 0.0
        %2551 = vmatpush1.xpose.msra.mxu0 0.0
        %2552 = vmatprep.subr.mxu0 0.0
        %2553 = vmatpush1.xpose.msra.mxu0 0.0
        %2554 = vmatprep.subr.mxu0 0.0
        %2555 = vmatpush1.xpose.msra.mxu0 0.0
        %2556 = vmatprep.subr.mxu0 0.0
        %2557 = vmatpush1.xpose.msra.mxu0 0.0
        %2558 = vmatprep.subr.mxu0 0.0
        %2559 = vmatpush1.xpose.msra.mxu0 0.0
        %2560 = vmatprep.subr.mxu0 0.0
        %2561 = vmatpush1.xpose.msra.mxu0 0.0
        %2562 = vmatprep.subr.mxu0 0.0
        %2563 = vmatpush1.xpose.msra.mxu0 0.0
        %2564 = vmatprep.subr.mxu0 0.0
        %2565 = vmatpush1.xpose.msra.mxu0 0.0
        %2566 = vmatprep.subr.mxu0 0.0
        %2567 = vmatpush1.xpose.msra.mxu0 0.0
        %2568 = vmatprep.subr.mxu0 0.0
        %2569 = vmatpush1.xpose.msra.mxu0 0.0
        %2570 = vmatprep.subr.mxu0 0.0
        %2571 = vmatpush1.xpose.msra.mxu0 0.0
        %2572 = vmatprep.subr.mxu0 0.0
        %2573 = vmatpush1.xpose.msra.mxu0 0.0
        %2574 = vmatprep.subr.mxu0 0.0
        %2575 = vmatpush1.xpose.msra.mxu0 0.0
        %2576 = vmatprep.subr.mxu0 0.0
        %2577 = vmatpush1.xpose.msra.mxu0 0.0
        %2578 = vmatprep.subr.mxu0 0.0
        %2579 = vmatpush1.xpose.msra.mxu0 0.0
        %2580 = vmatprep.subr.mxu0 0.0
        %2581 = vmatpush1.xpose.msra.mxu0 0.0
        %2582 = vmatprep.subr.mxu0 0.0
        %2583 = vmatpush1.xpose.msra.mxu0 0.0
        %2584 = vmatprep.subr.mxu0 0.0
        %2585 = vmatpush1.xpose.msra.mxu0 0.0
        %2586 = vmatprep.subr.mxu0 0.0
        %2587 = vmatpush1.xpose.msra.mxu0 0.0
        %2588 = vmatprep.subr.mxu0 0.0
        %2589 = vmatpush1.xpose.msra.mxu0 0.0
        %2590 = vmatprep.subr.mxu0 0.0
        %2591 = vmatpush1.xpose.msra.mxu0 0.0
        %2592 = vmatprep.subr.mxu0 0.0
        %2593 = vmatpush1.xpose.msra.mxu0 0.0
        %2594 = vmatprep.subr.mxu0 0.0
        %2595 = vmatpush1.xpose.msra.mxu0 0.0
        %2596 = vmatprep.subr.mxu0 0.0
        %2597 = vmatpush1.xpose.msra.mxu0 0.0
        %2598 = vmatprep.mubr.f32.mxu0 0.0
        %2599 = vmatmul.mubr.f32.gmra.mrb[0].mxu0 %v2530
        %v2600 = vpop.f32.mrb[0].mxu0
        %v2601 = vadd.f32 0.0, %v2600
        %v2602 = vpop.f32.mrb[0].mxu0
        %2603 = vdwg.mxu0
        %v2604 = vsel %vm302, %v2601, -inf
        %2605 = vmax.xlane.f32.xlu0 %v2604
        %v2606 = vpop.xlane.xlu0 %2605
        %v2607 = vsub.f32 %v2601, %v2606
        %v2608 = vmul.f32 %v2607, 1.442695
        %v2609 = vpow.pop %v2608
        %v2610 = vsel %vm302, %v2609, 0.0
        %2611 = vadd.xlane.f32.xlu0 %v2610
        %v2612 = vpop.xlane.xlu0 %2611
        %v2613 = vrcp.pop %v2612
        %v2614 = vmul.f32 1.0, %v2613
        %2615 = vrot.lane.b32.xlu0 %v2358, 56
        %v2616 = vpop.permute.xlu0 %2615
        %v2619 = vsel %vm302, %v2609, 0
        %2621 = vmatprep.subr.mxu0 0.0
        %2622 = vmatpush1.msra.mxu0 %v2616
        %2623 = vmatprep.subr.mxu0 0.0
        %2624 = vmatpush1.msra.mxu0 0.0
        %2625 = vmatprep.subr.mxu0 0.0
        %2626 = vmatpush1.msra.mxu0 0.0
        %2627 = vmatprep.subr.mxu0 0.0
        %2628 = vmatpush1.msra.mxu0 0.0
        %2629 = vmatprep.subr.mxu0 0.0
        %2630 = vmatpush1.msra.mxu0 0.0
        %2631 = vmatprep.subr.mxu0 0.0
        %2632 = vmatpush1.msra.mxu0 0.0
        %2633 = vmatprep.subr.mxu0 0.0
        %2634 = vmatpush1.msra.mxu0 0.0
        %2635 = vmatprep.subr.mxu0 0.0
        %2636 = vmatpush1.msra.mxu0 0.0
        %2637 = vmatprep.subr.mxu0 0.0
        %2638 = vmatpush1.msra.mxu0 0.0
        %2639 = vmatprep.subr.mxu0 0.0
        %2640 = vmatpush1.msra.mxu0 0.0
        %2641 = vmatprep.subr.mxu0 0.0
        %2642 = vmatpush1.msra.mxu0 0.0
        %2643 = vmatprep.subr.mxu0 0.0
        %2644 = vmatpush1.msra.mxu0 0.0
        %2645 = vmatprep.subr.mxu0 0.0
        %2646 = vmatpush1.msra.mxu0 0.0
        %2647 = vmatprep.subr.mxu0 0.0
        %2648 = vmatpush1.msra.mxu0 0.0
        %2649 = vmatprep.subr.mxu0 0.0
        %2650 = vmatpush1.msra.mxu0 0.0
        %2651 = vmatprep.subr.mxu0 0.0
        %2652 = vmatpush1.msra.mxu0 0.0
        %2653 = vmatprep.subr.mxu0 0.0
        %2654 = vmatpush1.msra.mxu0 0.0
        %2655 = vmatprep.subr.mxu0 0.0
        %2656 = vmatpush1.msra.mxu0 0.0
        %2657 = vmatprep.subr.mxu0 0.0
        %2658 = vmatpush1.msra.mxu0 0.0
        %2659 = vmatprep.subr.mxu0 0.0
        %2660 = vmatpush1.msra.mxu0 0.0
        %2661 = vmatprep.subr.mxu0 0.0
        %2662 = vmatpush1.msra.mxu0 0.0
        %2663 = vmatprep.subr.mxu0 0.0
        %2664 = vmatpush1.msra.mxu0 0.0
        %2665 = vmatprep.subr.mxu0 0.0
        %2666 = vmatpush1.msra.mxu0 0.0
        %2667 = vmatprep.subr.mxu0 0.0
        %2668 = vmatpush1.msra.mxu0 0.0
        %2669 = vmatprep.subr.mxu0 0.0
        %2670 = vmatpush1.msra.mxu0 0.0
        %2671 = vmatprep.subr.mxu0 0.0
        %2672 = vmatpush1.msra.mxu0 0.0
        %2673 = vmatprep.subr.mxu0 0.0
        %2674 = vmatpush1.msra.mxu0 0.0
        %2675 = vmatprep.subr.mxu0 0.0
        %2676 = vmatpush1.msra.mxu0 0.0
        %2677 = vmatprep.subr.mxu0 0.0
        %2678 = vmatpush1.msra.mxu0 0.0
        %2679 = vmatprep.subr.mxu0 0.0
        %2680 = vmatpush1.msra.mxu0 0.0
        %2681 = vmatprep.subr.mxu0 0.0
        %2682 = vmatpush1.msra.mxu0 0.0
        %2683 = vmatprep.subr.mxu0 0.0
        %2684 = vmatpush1.msra.mxu0 0.0
        %2685 = vmatprep.mubr.f32.mxu0 0.0
        %2686 = vmatmul.mubr.f32.gmra.mrb[0].mxu0 %v2619
        %v2687 = vpop.f32.mrb[0].mxu0
        %v2688 = vadd.f32 0.0, %v2687
        %v2689 = vpop.f32.mrb[0].mxu0
        %2690 = vdwg.mxu0
        %v2691 = vmul.f32 %v2688, %v2614
        %2692 = vrot.lane.b32.xlu0 %v2358, 112
        %v2693 = vpop.permute.xlu0 %2692
        %2694 = vrot.lane.b32.xlu0 %v2358, 80
        %v2695 = vpop.permute.xlu0 %2694
        %v2696 = vsel %vm302, %v2693, 0
        %v2698 = vsel %vm302, %v2695, 0
        %2700 = vmatprep.subr.mxu0 0.0
        %2701 = vmatpush1.xpose.msra.mxu0 %v2698
        %2702 = vmatprep.subr.mxu0 0.0
        %2703 = vmatpush1.xpose.msra.mxu0 0.0
        %2704 = vmatprep.subr.mxu0 0.0
        %2705 = vmatpush1.xpose.msra.mxu0 0.0
        %2706 = vmatprep.subr.mxu0 0.0
        %2707 = vmatpush1.xpose.msra.mxu0 0.0
        %2708 = vmatprep.subr.mxu0 0.0
        %2709 = vmatpush1.xpose.msra.mxu0 0.0
        %2710 = vmatprep.subr.mxu0 0.0
        %2711 = vmatpush1.xpose.msra.mxu0 0.0
        %2712 = vmatprep.subr.mxu0 0.0
        %2713 = vmatpush1.xpose.msra.mxu0 0.0
        %2714 = vmatprep.subr.mxu0 0.0
        %2715 = vmatpush1.xpose.msra.mxu0 0.0
        %2716 = vmatprep.subr.mxu0 0.0
        %2717 = vmatpush1.xpose.msra.mxu0 0.0
        %2718 = vmatprep.subr.mxu0 0.0
        %2719 = vmatpush1.xpose.msra.mxu0 0.0
        %2720 = vmatprep.subr.mxu0 0.0
        %2721 = vmatpush1.xpose.msra.mxu0 0.0
        %2722 = vmatprep.subr.mxu0 0.0
        %2723 = vmatpush1.xpose.msra.mxu0 0.0
        %2724 = vmatprep.subr.mxu0 0.0
        %2725 = vmatpush1.xpose.msra.mxu0 0.0
        %2726 = vmatprep.subr.mxu0 0.0
        %2727 = vmatpush1.xpose.msra.mxu0 0.0
        %2728 = vmatprep.subr.mxu0 0.0
        %2729 = vmatpush1.xpose.msra.mxu0 0.0
        %2730 = vmatprep.subr.mxu0 0.0
        %2731 = vmatpush1.xpose.msra.mxu0 0.0
        %2732 = vmatprep.subr.mxu0 0.0
        %2733 = vmatpush1.xpose.msra.mxu0 0.0
        %2734 = vmatprep.subr.mxu0 0.0
        %2735 = vmatpush1.xpose.msra.mxu0 0.0
        %2736 = vmatprep.subr.mxu0 0.0
        %2737 = vmatpush1.xpose.msra.mxu0 0.0
        %2738 = vmatprep.subr.mxu0 0.0
        %2739 = vmatpush1.xpose.msra.mxu0 0.0
        %2740 = vmatprep.subr.mxu0 0.0
        %2741 = vmatpush1.xpose.msra.mxu0 0.0
        %2742 = vmatprep.subr.mxu0 0.0
        %2743 = vmatpush1.xpose.msra.mxu0 0.0
        %2744 = vmatprep.subr.mxu0 0.0
        %2745 = vmatpush1.xpose.msra.mxu0 0.0
        %2746 = vmatprep.subr.mxu0 0.0
        %2747 = vmatpush1.xpose.msra.mxu0 0.0
        %2748 = vmatprep.subr.mxu0 0.0
        %2749 = vmatpush1.xpose.msra.mxu0 0.0
        %2750 = vmatprep.subr.mxu0 0.0
        %2751 = vmatpush1.xpose.msra.mxu0 0.0
        %2752 = vmatprep.subr.mxu0 0.0
        %2753 = vmatpush1.xpose.msra.mxu0 0.0
        %2754 = vmatprep.subr.mxu0 0.0
        %2755 = vmatpush1.xpose.msra.mxu0 0.0
        %2756 = vmatprep.subr.mxu0 0.0
        %2757 = vmatpush1.xpose.msra.mxu0 0.0
        %2758 = vmatprep.subr.mxu0 0.0
        %2759 = vmatpush1.xpose.msra.mxu0 0.0
        %2760 = vmatprep.subr.mxu0 0.0
        %2761 = vmatpush1.xpose.msra.mxu0 0.0
        %2762 = vmatprep.subr.mxu0 0.0
        %2763 = vmatpush1.xpose.msra.mxu0 0.0
        %2764 = vmatprep.mubr.f32.mxu0 0.0
        %2765 = vmatmul.mubr.f32.gmra.mrb[0].mxu0 %v2696
        %v2766 = vpop.f32.mrb[0].mxu0
        %v2767 = vadd.f32 0.0, %v2766
        %v2768 = vpop.f32.mrb[0].mxu0
        %2769 = vdwg.mxu0
        %v2770 = vsel %vm302, %v2767, -inf
        %2771 = vmax.xlane.f32.xlu0 %v2770
        %v2772 = vpop.xlane.xlu0 %2771
        %v2773 = vsub.f32 %v2767, %v2772
        %v2774 = vmul.f32 %v2773, 1.442695
        %v2775 = vpow.pop %v2774
        %v2776 = vsel %vm302, %v2775, 0.0
        %2777 = vadd.xlane.f32.xlu0 %v2776
        %v2778 = vpop.xlane.xlu0 %2777
        %v2779 = vrcp.pop %v2778
        %v2780 = vmul.f32 1.0, %v2779
        %2781 = vrot.lane.b32.xlu0 %v2358, 48
        %v2782 = vpop.permute.xlu0 %2781
        %v2785 = vsel %vm302, %v2775, 0
        %2787 = vmatprep.subr.mxu0 0.0
        %2788 = vmatpush1.msra.mxu0 %v2782
        %2789 = vmatprep.subr.mxu0 0.0
        %2790 = vmatpush1.msra.mxu0 0.0
        %2791 = vmatprep.subr.mxu0 0.0
        %2792 = vmatpush1.msra.mxu0 0.0
        %2793 = vmatprep.subr.mxu0 0.0
        %2794 = vmatpush1.msra.mxu0 0.0
        %2795 = vmatprep.subr.mxu0 0.0
        %2796 = vmatpush1.msra.mxu0 0.0
        %2797 = vmatprep.subr.mxu0 0.0
        %2798 = vmatpush1.msra.mxu0 0.0
        %2799 = vmatprep.subr.mxu0 0.0
        %2800 = vmatpush1.msra.mxu0 0.0
        %2801 = vmatprep.subr.mxu0 0.0
        %2802 = vmatpush1.msra.mxu0 0.0
        %2803 = vmatprep.subr.mxu0 0.0
        %2804 = vmatpush1.msra.mxu0 0.0
        %2805 = vmatprep.subr.mxu0 0.0
        %2806 = vmatpush1.msra.mxu0 0.0
        %2807 = vmatprep.subr.mxu0 0.0
        %2808 = vmatpush1.msra.mxu0 0.0
        %2809 = vmatprep.subr.mxu0 0.0
        %2810 = vmatpush1.msra.mxu0 0.0
        %2811 = vmatprep.subr.mxu0 0.0
        %2812 = vmatpush1.msra.mxu0 0.0
        %2813 = vmatprep.subr.mxu0 0.0
        %2814 = vmatpush1.msra.mxu0 0.0
        %2815 = vmatprep.subr.mxu0 0.0
        %2816 = vmatpush1.msra.mxu0 0.0
        %2817 = vmatprep.subr.mxu0 0.0
        %2818 = vmatpush1.msra.mxu0 0.0
        %2819 = vmatprep.subr.mxu0 0.0
        %2820 = vmatpush1.msra.mxu0 0.0
        %2821 = vmatprep.subr.mxu0 0.0
        %2822 = vmatpush1.msra.mxu0 0.0
        %2823 = vmatprep.subr.mxu0 0.0
        %2824 = vmatpush1.msra.mxu0 0.0
        %2825 = vmatprep.subr.mxu0 0.0
        %2826 = vmatpush1.msra.mxu0 0.0
        %2827 = vmatprep.subr.mxu0 0.0
        %2828 = vmatpush1.msra.mxu0 0.0
        %2829 = vmatprep.subr.mxu0 0.0
        %2830 = vmatpush1.msra.mxu0 0.0
        %2831 = vmatprep.subr.mxu0 0.0
        %2832 = vmatpush1.msra.mxu0 0.0
        %2833 = vmatprep.subr.mxu0 0.0
        %2834 = vmatpush1.msra.mxu0 0.0
        %2835 = vmatprep.subr.mxu0 0.0
        %2836 = vmatpush1.msra.mxu0 0.0
        %2837 = vmatprep.subr.mxu0 0.0
        %2838 = vmatpush1.msra.mxu0 0.0
        %2839 = vmatprep.subr.mxu0 0.0
        %2840 = vmatpush1.msra.mxu0 0.0
        %2841 = vmatprep.subr.mxu0 0.0
        %2842 = vmatpush1.msra.mxu0 0.0
        %2843 = vmatprep.subr.mxu0 0.0
        %2844 = vmatpush1.msra.mxu0 0.0
        %2845 = vmatprep.subr.mxu0 0.0
        %2846 = vmatpush1.msra.mxu0 0.0
        %2847 = vmatprep.subr.mxu0 0.0
        %2848 = vmatpush1.msra.mxu0 0.0
        %2849 = vmatprep.subr.mxu0 0.0
        %2850 = vmatpush1.msra.mxu0 0.0
        %2851 = vmatprep.mubr.f32.mxu0 0.0
        %2852 = vmatmul.mubr.f32.gmra.mrb[0].mxu0 %v2785
        %v2853 = vpop.f32.mrb[0].mxu0
        %v2854 = vadd.f32 0.0, %v2853
        %v2855 = vpop.f32.mrb[0].mxu0
        %2856 = vdwg.mxu0
        %v2857 = vmul.f32 %v2854, %v2780
        %2858 = vrot.lane.b32.xlu0 %v2358, 104
        %v2859 = vpop.permute.xlu0 %2858
        %2860 = vrot.lane.b32.xlu0 %v2358, 72
        %v2861 = vpop.permute.xlu0 %2860
        %v2862 = vsel %vm302, %v2859, 0
        %v2864 = vsel %vm302, %v2861, 0
        %2866 = vmatprep.subr.mxu0 0.0
        %2867 = vmatpush1.xpose.msra.mxu0 %v2864
        %2868 = vmatprep.subr.mxu0 0.0
        %2869 = vmatpush1.xpose.msra.mxu0 0.0
        %2870 = vmatprep.subr.mxu0 0.0
        %2871 = vmatpush1.xpose.msra.mxu0 0.0
        %2872 = vmatprep.subr.mxu0 0.0
        %2873 = vmatpush1.xpose.msra.mxu0 0.0
        %2874 = vmatprep.subr.mxu0 0.0
        %2875 = vmatpush1.xpose.msra.mxu0 0.0
        %2876 = vmatprep.subr.mxu0 0.0
        %2877 = vmatpush1.xpose.msra.mxu0 0.0
        %2878 = vmatprep.subr.mxu0 0.0
        %2879 = vmatpush1.xpose.msra.mxu0 0.0
        %2880 = vmatprep.subr.mxu0 0.0
        %2881 = vmatpush1.xpose.msra.mxu0 0.0
        %2882 = vmatprep.subr.mxu0 0.0
        %2883 = vmatpush1.xpose.msra.mxu0 0.0
        %2884 = vmatprep.subr.mxu0 0.0
        %2885 = vmatpush1.xpose.msra.mxu0 0.0
        %2886 = vmatprep.subr.mxu0 0.0
        %2887 = vmatpush1.xpose.msra.mxu0 0.0
        %2888 = vmatprep.subr.mxu0 0.0
        %2889 = vmatpush1.xpose.msra.mxu0 0.0
        %2890 = vmatprep.subr.mxu0 0.0
        %2891 = vmatpush1.xpose.msra.mxu0 0.0
        %2892 = vmatprep.subr.mxu0 0.0
        %2893 = vmatpush1.xpose.msra.mxu0 0.0
        %2894 = vmatprep.subr.mxu0 0.0
        %2895 = vmatpush1.xpose.msra.mxu0 0.0
        %2896 = vmatprep.subr.mxu0 0.0
        %2897 = vmatpush1.xpose.msra.mxu0 0.0
        %2898 = vmatprep.subr.mxu0 0.0
        %2899 = vmatpush1.xpose.msra.mxu0 0.0
        %2900 = vmatprep.subr.mxu0 0.0
        %2901 = vmatpush1.xpose.msra.mxu0 0.0
        %2902 = vmatprep.subr.mxu0 0.0
        %2903 = vmatpush1.xpose.msra.mxu0 0.0
        %2904 = vmatprep.subr.mxu0 0.0
        %2905 = vmatpush1.xpose.msra.mxu0 0.0
        %2906 = vmatprep.subr.mxu0 0.0
        %2907 = vmatpush1.xpose.msra.mxu0 0.0
        %2908 = vmatprep.subr.mxu0 0.0
        %2909 = vmatpush1.xpose.msra.mxu0 0.0
        %2910 = vmatprep.subr.mxu0 0.0
        %2911 = vmatpush1.xpose.msra.mxu0 0.0
        %2912 = vmatprep.subr.mxu0 0.0
        %2913 = vmatpush1.xpose.msra.mxu0 0.0
        %2914 = vmatprep.subr.mxu0 0.0
        %2915 = vmatpush1.xpose.msra.mxu0 0.0
        %2916 = vmatprep.subr.mxu0 0.0
        %2917 = vmatpush1.xpose.msra.mxu0 0.0
        %2918 = vmatprep.subr.mxu0 0.0
        %2919 = vmatpush1.xpose.msra.mxu0 0.0
        %2920 = vmatprep.subr.mxu0 0.0
        %2921 = vmatpush1.xpose.msra.mxu0 0.0
        %2922 = vmatprep.subr.mxu0 0.0
        %2923 = vmatpush1.xpose.msra.mxu0 0.0
        %2924 = vmatprep.subr.mxu0 0.0
        %2925 = vmatpush1.xpose.msra.mxu0 0.0
        %2926 = vmatprep.subr.mxu0 0.0
        %2927 = vmatpush1.xpose.msra.mxu0 0.0
        %2928 = vmatprep.subr.mxu0 0.0
        %2929 = vmatpush1.xpose.msra.mxu0 0.0
        %2930 = vmatprep.mubr.f32.mxu0 0.0
        %2931 = vmatmul.mubr.f32.gmra.mrb[0].mxu0 %v2862
        %v2932 = vpop.f32.mrb[0].mxu0
        %v2933 = vadd.f32 0.0, %v2932
        %v2934 = vpop.f32.mrb[0].mxu0
        %2935 = vdwg.mxu0
        %v2936 = vsel %vm302, %v2933, -inf
        %2937 = vmax.xlane.f32.xlu0 %v2936
        %v2938 = vpop.xlane.xlu0 %2937
        %v2939 = vsub.f32 %v2933, %v2938
        %v2940 = vmul.f32 %v2939, 1.442695
        %v2941 = vpow.pop %v2940
        %v2942 = vsel %vm302, %v2941, 0.0
        %2943 = vadd.xlane.f32.xlu0 %v2942
        %v2944 = vpop.xlane.xlu0 %2943
        %v2945 = vrcp.pop %v2944
        %v2946 = vmul.f32 1.0, %v2945
        %2947 = vrot.lane.b32.xlu0 %v2358, 40
        %v2948 = vpop.permute.xlu0 %2947
        %v2951 = vsel %vm302, %v2941, 0
        %2953 = vmatprep.subr.mxu0 0.0
        %2954 = vmatpush1.msra.mxu0 %v2948
        %2955 = vmatprep.subr.mxu0 0.0
        %2956 = vmatpush1.msra.mxu0 0.0
        %2957 = vmatprep.subr.mxu0 0.0
        %2958 = vmatpush1.msra.mxu0 0.0
        %2959 = vmatprep.subr.mxu0 0.0
        %2960 = vmatpush1.msra.mxu0 0.0
        %2961 = vmatprep.subr.mxu0 0.0
        %2962 = vmatpush1.msra.mxu0 0.0
        %2963 = vmatprep.subr.mxu0 0.0
        %2964 = vmatpush1.msra.mxu0 0.0
        %2965 = vmatprep.subr.mxu0 0.0
        %2966 = vmatpush1.msra.mxu0 0.0
        %2967 = vmatprep.subr.mxu0 0.0
        %2968 = vmatpush1.msra.mxu0 0.0
        %2969 = vmatprep.subr.mxu0 0.0
        %2970 = vmatpush1.msra.mxu0 0.0
        %2971 = vmatprep.subr.mxu0 0.0
        %2972 = vmatpush1.msra.mxu0 0.0
        %2973 = vmatprep.subr.mxu0 0.0
        %2974 = vmatpush1.msra.mxu0 0.0
        %2975 = vmatprep.subr.mxu0 0.0
        %2976 = vmatpush1.msra.mxu0 0.0
        %2977 = vmatprep.subr.mxu0 0.0
        %2978 = vmatpush1.msra.mxu0 0.0
        %2979 = vmatprep.subr.mxu0 0.0
        %2980 = vmatpush1.msra.mxu0 0.0
        %2981 = vmatprep.subr.mxu0 0.0
        %2982 = vmatpush1.msra.mxu0 0.0
        %2983 = vmatprep.subr.mxu0 0.0
        %2984 = vmatpush1.msra.mxu0 0.0
        %2985 = vmatprep.subr.mxu0 0.0
        %2986 = vmatpush1.msra.mxu0 0.0
        %2987 = vmatprep.subr.mxu0 0.0
        %2988 = vmatpush1.msra.mxu0 0.0
        %2989 = vmatprep.subr.mxu0 0.0
        %2990 = vmatpush1.msra.mxu0 0.0
        %2991 = vmatprep.subr.mxu0 0.0
        %2992 = vmatpush1.msra.mxu0 0.0
        %2993 = vmatprep.subr.mxu0 0.0
        %2994 = vmatpush1.msra.mxu0 0.0
        %2995 = vmatprep.subr.mxu0 0.0
        %2996 = vmatpush1.msra.mxu0 0.0
        %2997 = vmatprep.subr.mxu0 0.0
        %2998 = vmatpush1.msra.mxu0 0.0
        %2999 = vmatprep.subr.mxu0 0.0
        %3000 = vmatpush1.msra.mxu0 0.0
        %3001 = vmatprep.subr.mxu0 0.0
        %3002 = vmatpush1.msra.mxu0 0.0
        %3003 = vmatprep.subr.mxu0 0.0
        %3004 = vmatpush1.msra.mxu0 0.0
        %3005 = vmatprep.subr.mxu0 0.0
        %3006 = vmatpush1.msra.mxu0 0.0
        %3007 = vmatprep.subr.mxu0 0.0
        %3008 = vmatpush1.msra.mxu0 0.0
        %3009 = vmatprep.subr.mxu0 0.0
        %3010 = vmatpush1.msra.mxu0 0.0
        %3011 = vmatprep.subr.mxu0 0.0
        %3012 = vmatpush1.msra.mxu0 0.0
        %3013 = vmatprep.subr.mxu0 0.0
        %3014 = vmatpush1.msra.mxu0 0.0
        %3015 = vmatprep.subr.mxu0 0.0
        %3016 = vmatpush1.msra.mxu0 0.0
        %3017 = vmatprep.mubr.f32.mxu0 0.0
        %3018 = vmatmul.mubr.f32.gmra.mrb[0].mxu0 %v2951
        %v3019 = vpop.f32.mrb[0].mxu0
        %v3020 = vadd.f32 0.0, %v3019
        %v3021 = vpop.f32.mrb[0].mxu0
        %3022 = vdwg.mxu0
        %v3023 = vmul.f32 %v3020, %v2946
        %3025 = vrot.lane.b32.xlu0 %v2691, 8
        %v3026 = vpop.permute.xlu0 %3025
        %3029 = vrot.lane.b32.xlu0 %v2857, 16
        %v3030 = vpop.permute.xlu0 %3029
        %3033 = vrot.lane.b32.xlu0 %v3023, 24
        %v3034 = vpop.permute.xlu0 %3033
        %v3036 = vsel %vm302, %v2525, %v3026
        %v3037 = vsel %vm976, %v3036, %v3030
        %v3038 = vsel %vm978, %v3037, %v3034
        %v3039 = vld [vmem:[%s2 + $0x140] sm:$0xff]
        %v3040 = vld [vmem:[%s2 + $0x148] sm:$0xff]
        %v3041 = vld [vmem:[%s2 + $0x150] sm:$0xff]
        %v3042 = vld [vmem:[%s2 + $0x158] sm:$0xff]
        %v3043 = vld [vmem:[%s3 + $0xe] sm:$0x1]
        %v3044 = vlaneseq
        %v3045 = vshrl.u32 %v3044, 7
        %v3046 = vsub.s32 0, %v3045
        %v3047 = vrot.slane %v3043, %v3046
        %v3049 = vsel %vm225, %v3038, 0
        %3051 = vmatprep.subr.mxu0 0.0
        %3052 = vmatpush1.msra.mxu0 %v3039
        %3053 = vmatprep.subr.mxu0 0.0
        %3054 = vmatpush1.msra.mxu0 %v3040
        %3055 = vmatprep.subr.mxu0 0.0
        %3056 = vmatpush1.msra.mxu0 %v3041
        %3057 = vmatprep.subr.mxu0 0.0
        %3058 = vmatpush1.msra.mxu0 %v3042
        %3059 = vmatprep.subr.mxu0 0.0
        %3060 = vmatpush1.msra.mxu0 0.0
        %3061 = vmatprep.subr.mxu0 0.0
        %3062 = vmatpush1.msra.mxu0 0.0
        %3063 = vmatprep.subr.mxu0 0.0
        %3064 = vmatpush1.msra.mxu0 0.0
        %3065 = vmatprep.subr.mxu0 0.0
        %3066 = vmatpush1.msra.mxu0 0.0
        %3067 = vmatprep.subr.mxu0 0.0
        %3068 = vmatpush1.msra.mxu0 0.0
        %3069 = vmatprep.subr.mxu0 0.0
        %3070 = vmatpush1.msra.mxu0 0.0
        %3071 = vmatprep.subr.mxu0 0.0
        %3072 = vmatpush1.msra.mxu0 0.0
        %3073 = vmatprep.subr.mxu0 0.0
        %3074 = vmatpush1.msra.mxu0 0.0
        %3075 = vmatprep.subr.mxu0 0.0
        %3076 = vmatpush1.msra.mxu0 0.0
        %3077 = vmatprep.subr.mxu0 0.0
        %3078 = vmatpush1.msra.mxu0 0.0
        %3079 = vmatprep.subr.mxu0 0.0
        %3080 = vmatpush1.msra.mxu0 0.0
        %3081 = vmatprep.subr.mxu0 0.0
        %3082 = vmatpush1.msra.mxu0 0.0
        %3083 = vmatprep.subr.mxu0 0.0
        %3084 = vmatpush1.msra.mxu0 0.0
        %3085 = vmatprep.subr.mxu0 0.0
        %3086 = vmatpush1.msra.mxu0 0.0
        %3087 = vmatprep.subr.mxu0 0.0
        %3088 = vmatpush1.msra.mxu0 0.0
        %3089 = vmatprep.subr.mxu0 0.0
        %3090 = vmatpush1.msra.mxu0 0.0
        %3091 = vmatprep.subr.mxu0 0.0
        %3092 = vmatpush1.msra.mxu0 0.0
        %3093 = vmatprep.subr.mxu0 0.0
        %3094 = vmatpush1.msra.mxu0 0.0
        %3095 = vmatprep.subr.mxu0 0.0
        %3096 = vmatpush1.msra.mxu0 0.0
        %3097 = vmatprep.subr.mxu0 0.0
        %3098 = vmatpush1.msra.mxu0 0.0
        %3099 = vmatprep.subr.mxu0 0.0
        %3100 = vmatpush1.msra.mxu0 0.0
        %3101 = vmatprep.subr.mxu0 0.0
        %3102 = vmatpush1.msra.mxu0 0.0
        %3103 = vmatprep.subr.mxu0 0.0
        %3104 = vmatpush1.msra.mxu0 0.0
        %3105 = vmatprep.subr.mxu0 0.0
        %3106 = vmatpush1.msra.mxu0 0.0
        %3107 = vmatprep.subr.mxu0 0.0
        %3108 = vmatpush1.msra.mxu0 0.0
        %3109 = vmatprep.subr.mxu0 0.0
        %3110 = vmatpush1.msra.mxu0 0.0
        %3111 = vmatprep.subr.mxu0 0.0
        %3112 = vmatpush1.msra.mxu0 0.0
        %3113 = vmatprep.subr.mxu0 0.0
        %3114 = vmatpush1.msra.mxu0 0.0
        %3115 = vmatprep.mubr.f32.mxu0 0.0
        %3116 = vmatmul.mubr.f32.gmra.mrb[0].mxu0 %v3049
        %v3117 = vpop.f32.mrb[0].mxu0
        %v3118 = vadd.f32 %v3047, %v3117
        %v3119 = vpop.f32.mrb[0].mxu0
        %3120 = vdwg.mxu0
        %v3121 = vld [vmem:[%s3 + $0x14] sm:$0x1]
        %v3122 = vld [vmem:[%s3 + $0x15] sm:$0x1]
        %v3123 = vadd.f32 %v2278, %v3118
        %v3124 = vsel %vm225, %v3123, 0.0
        %3125 = vadd.xlane.f32.xlu0 %v3124
        %v3126 = vpop.xlane.xlu0 %3125
        %v3127 = vmul.f32 %v3126, %v1068
        %v3128 = vsub.f32 %v3123, %v3127
        %v3129 = vmul.f32 %v3128, %v3128
        %v3130 = vsel %vm225, %v3129, 0.0
        %3131 = vadd.xlane.f32.xlu0 %v3130
        %v3132 = vpop.xlane.xlu0 %3131
        %v3133 = vmul.f32 %v3132, %v1068
        %v3134 = vadd.f32 %v3133, 1e-05
        %v3135 = vrsqrt.pop %v3134
        %v3136 = vmul.f32 %v3128, %v3135
        %v3137 = vlaneseq
        %v3138 = vshrl.u32 %v3137, 7
        %v3139 = vsub.s32 0, %v3138
        %v3140 = vrot.slane %v3121, %v3139
        %v3141 = vmul.f32 %v3136, %v3140
        %v3142 = vlaneseq
        %v3143 = vshrl.u32 %v3142, 7
        %v3144 = vsub.s32 0, %v3143
        %v3145 = vrot.slane %v3122, %v3144
        %v3146 = vadd.f32 %v3141, %v3145
        %v3147 = vld [vmem:[%s2 + $0x160] sm:$0xff]
        %v3148 = vld [vmem:[%s2 + $0x168] sm:$0xff]
        %v3149 = vld [vmem:[%s2 + $0x170] sm:$0xff]
        %v3150 = vld [vmem:[%s2 + $0x178] sm:$0xff]
        %v3151 = vld [vmem:[%s3 + $0xf] sm:$0x1]
        %v3152 = vlaneseq
        %v3153 = vshrl.u32 %v3152, 7
        %v3154 = vsub.s32 0, %v3153
        %v3155 = vrot.slane %v3151, %v3154
        %v3157 = vsel %vm225, %v3146, 0
        %3159 = vmatprep.subr.mxu0 0.0
        %3160 = vmatpush1.msra.mxu0 %v3147
        %3161 = vmatprep.subr.mxu0 0.0
        %3162 = vmatpush1.msra.mxu0 %v3148
        %3163 = vmatprep.subr.mxu0 0.0
        %3164 = vmatpush1.msra.mxu0 %v3149
        %3165 = vmatprep.subr.mxu0 0.0
        %3166 = vmatpush1.msra.mxu0 %v3150
        %3167 = vmatprep.subr.mxu0 0.0
        %3168 = vmatpush1.msra.mxu0 0.0
        %3169 = vmatprep.subr.mxu0 0.0
        %3170 = vmatpush1.msra.mxu0 0.0
        %3171 = vmatprep.subr.mxu0 0.0
        %3172 = vmatpush1.msra.mxu0 0.0
        %3173 = vmatprep.subr.mxu0 0.0
        %3174 = vmatpush1.msra.mxu0 0.0
        %3175 = vmatprep.subr.mxu0 0.0
        %3176 = vmatpush1.msra.mxu0 0.0
        %3177 = vmatprep.subr.mxu0 0.0
        %3178 = vmatpush1.msra.mxu0 0.0
        %3179 = vmatprep.subr.mxu0 0.0
        %3180 = vmatpush1.msra.mxu0 0.0
        %3181 = vmatprep.subr.mxu0 0.0
        %3182 = vmatpush1.msra.mxu0 0.0
        %3183 = vmatprep.subr.mxu0 0.0
        %3184 = vmatpush1.msra.mxu0 0.0
        %3185 = vmatprep.subr.mxu0 0.0
        %3186 = vmatpush1.msra.mxu0 0.0
        %3187 = vmatprep.subr.mxu0 0.0
        %3188 = vmatpush1.msra.mxu0 0.0
        %3189 = vmatprep.subr.mxu0 0.0
        %3190 = vmatpush1.msra.mxu0 0.0
        %3191 = vmatprep.subr.mxu0 0.0
        %3192 = vmatpush1.msra.mxu0 0.0
        %3193 = vmatprep.subr.mxu0 0.0
        %3194 = vmatpush1.msra.mxu0 0.0
        %3195 = vmatprep.subr.mxu0 0.0
        %3196 = vmatpush1.msra.mxu0 0.0
        %3197 = vmatprep.subr.mxu0 0.0
        %3198 = vmatpush1.msra.mxu0 0.0
        %3199 = vmatprep.subr.mxu0 0.0
        %3200 = vmatpush1.msra.mxu0 0.0
        %3201 = vmatprep.subr.mxu0 0.0
        %3202 = vmatpush1.msra.mxu0 0.0
        %3203 = vmatprep.subr.mxu0 0.0
        %3204 = vmatpush1.msra.mxu0 0.0
        %3205 = vmatprep.subr.mxu0 0.0
        %3206 = vmatpush1.msra.mxu0 0.0
        %3207 = vmatprep.subr.mxu0 0.0
        %3208 = vmatpush1.msra.mxu0 0.0
        %3209 = vmatprep.subr.mxu0 0.0
        %3210 = vmatpush1.msra.mxu0 0.0
        %3211 = vmatprep.subr.mxu0 0.0
        %3212 = vmatpush1.msra.mxu0 0.0
        %3213 = vmatprep.subr.mxu0 0.0
        %3214 = vmatpush1.msra.mxu0 0.0
        %3215 = vmatprep.subr.mxu0 0.0
        %3216 = vmatpush1.msra.mxu0 0.0
        %3217 = vmatprep.subr.mxu0 0.0
        %3218 = vmatpush1.msra.mxu0 0.0
        %3219 = vmatprep.subr.mxu0 0.0
        %3220 = vmatpush1.msra.mxu0 0.0
        %3221 = vmatprep.subr.mxu0 0.0
        %3222 = vmatpush1.msra.mxu0 0.0
        %3223 = vmatprep.mubr.f32.mxu0 0.0
        %3224 = vmatmul.mubr.f32.gmra.mrb[0].mxu0 %v3157
        %v3225 = vpop.f32.mrb[0].mxu0
        %v3226 = vadd.f32 %v3155, %v3225
        %v3227 = vpop.f32.mrb[0].mxu0
        %3228 = vdwg.mxu0
        %v3229 = vld [vmem:[%s2 + $0x180] sm:$0xff]
        %v3230 = vld [vmem:[%s2 + $0x188] sm:$0xff]
        %v3231 = vld [vmem:[%s2 + $0x190] sm:$0xff]
        %v3232 = vld [vmem:[%s2 + $0x198] sm:$0xff]
        %v3233 = vld [vmem:[%s2 + $0x1a0] sm:$0xff]
        %v3234 = vld [vmem:[%s2 + $0x1a8] sm:$0xff]
        %v3235 = vld [vmem:[%s2 + $0x1b0] sm:$0xff]
        %v3236 = vld [vmem:[%s2 + $0x1b8] sm:$0xff]
        %v3237 = vld [vmem:[%s3 + $0x10] sm:$0x1]
        %v3238 = vlaneseq
        %v3239 = vshrl.u32 %v3238, 7
        %v3240 = vsub.s32 0, %v3239
        %v3241 = vrot.slane %v3237, %v3240
        %3242 = vmatprep.subr.mxu0 0.0
        %3243 = vmatpush1.msra.mxu0 %v3229
        %3244 = vmatprep.subr.mxu0 0.0
        %3245 = vmatpush1.msra.mxu0 %v3230
        %3246 = vmatprep.subr.mxu0 0.0
        %3247 = vmatpush1.msra.mxu0 %v3231
        %3248 = vmatprep.subr.mxu0 0.0
        %3249 = vmatpush1.msra.mxu0 %v3232
        %3250 = vmatprep.subr.mxu0 0.0
        %3251 = vmatpush1.msra.mxu0 %v3233
        %3252 = vmatprep.subr.mxu0 0.0
        %3253 = vmatpush1.msra.mxu0 %v3234
        %3254 = vmatprep.subr.mxu0 0.0
        %3255 = vmatpush1.msra.mxu0 %v3235
        %3256 = vmatprep.subr.mxu0 0.0
        %3257 = vmatpush1.msra.mxu0 %v3236
        %3258 = vmatprep.subr.mxu0 0.0
        %3259 = vmatpush1.msra.mxu0 0.0
        %3260 = vmatprep.subr.mxu0 0.0
        %3261 = vmatpush1.msra.mxu0 0.0
        %3262 = vmatprep.subr.mxu0 0.0
        %3263 = vmatpush1.msra.mxu0 0.0
        %3264 = vmatprep.subr.mxu0 0.0
        %3265 = vmatpush1.msra.mxu0 0.0
        %3266 = vmatprep.subr.mxu0 0.0
        %3267 = vmatpush1.msra.mxu0 0.0
        %3268 = vmatprep.subr.mxu0 0.0
        %3269 = vmatpush1.msra.mxu0 0.0
        %3270 = vmatprep.subr.mxu0 0.0
        %3271 = vmatpush1.msra.mxu0 0.0
        %3272 = vmatprep.subr.mxu0 0.0
        %3273 = vmatpush1.msra.mxu0 0.0
        %3274 = vmatprep.subr.mxu0 0.0
        %3275 = vmatpush1.msra.mxu0 0.0
        %3276 = vmatprep.subr.mxu0 0.0
        %3277 = vmatpush1.msra.mxu0 0.0
        %3278 = vmatprep.subr.mxu0 0.0
        %3279 = vmatpush1.msra.mxu0 0.0
        %3280 = vmatprep.subr.mxu0 0.0
        %3281 = vmatpush1.msra.mxu0 0.0
        %3282 = vmatprep.subr.mxu0 0.0
        %3283 = vmatpush1.msra.mxu0 0.0
        %3284 = vmatprep.subr.mxu0 0.0
        %3285 = vmatpush1.msra.mxu0 0.0
        %3286 = vmatprep.subr.mxu0 0.0
        %3287 = vmatpush1.msra.mxu0 0.0
        %3288 = vmatprep.subr.mxu0 0.0
        %3289 = vmatpush1.msra.mxu0 0.0
        %3290 = vmatprep.subr.mxu0 0.0
        %3291 = vmatpush1.msra.mxu0 0.0
        %3292 = vmatprep.subr.mxu0 0.0
        %3293 = vmatpush1.msra.mxu0 0.0
        %3294 = vmatprep.subr.mxu0 0.0
        %3295 = vmatpush1.msra.mxu0 0.0
        %3296 = vmatprep.subr.mxu0 0.0
        %3297 = vmatpush1.msra.mxu0 0.0
        %3298 = vmatprep.subr.mxu0 0.0
        %3299 = vmatpush1.msra.mxu0 0.0
        %3300 = vmatprep.subr.mxu0 0.0
        %3301 = vmatpush1.msra.mxu0 0.0
        %3302 = vmatprep.subr.mxu0 0.0
        %3303 = vmatpush1.msra.mxu0 0.0
        %3304 = vmatprep.subr.mxu0 0.0
        %3305 = vmatpush1.msra.mxu0 0.0
        %3306 = vmatprep.mubr.f32.mxu0 0.0
        %3307 = vmatmul.mubr.f32.gmra.mrb[0].mxu0 %v1186
        %v3308 = vpop.f32.mrb[0].mxu0
        %v3309 = vadd.f32 %v3241, %v3308
        %v3310 = vpop.f32.mrb[0].mxu0
        %3311 = vmatprep.mubr.f32.mxu0 0.0
        %3312 = vmatmul.mubr.f32.gmra.mrb[0].mxu0 %v1189
        %v3313 = vpop.f32.mrb[0].mxu0
        %v3314 = vadd.f32 %v3241, %v3313
        %v3315 = vpop.f32.mrb[0].mxu0
        %3316 = vdwg.mxu0
        %v3318 = vsel %vm302, %v3226, 0
        %v3321 = vsel %vm302, %v3309, 0
        %v3324 = vsel %vm302, %v3314, 0
        %3326 = vmatprep.subr.mxu0 0.0
        %3327 = vmatpush1.xpose.msra.mxu0 %v3321
        %3328 = vmatprep.subr.mxu0 0.0
        %3329 = vmatpush1.xpose.msra.mxu0 %v3324
        %3330 = vmatprep.subr.mxu0 0.0
        %3331 = vmatpush1.xpose.msra.mxu0 0.0
        %3332 = vmatprep.subr.mxu0 0.0
        %3333 = vmatpush1.xpose.msra.mxu0 0.0
        %3334 = vmatprep.subr.mxu0 0.0
        %3335 = vmatpush1.xpose.msra.mxu0 0.0
        %3336 = vmatprep.subr.mxu0 0.0
        %3337 = vmatpush1.xpose.msra.mxu0 0.0
        %3338 = vmatprep.subr.mxu0 0.0
        %3339 = vmatpush1.xpose.msra.mxu0 0.0
        %3340 = vmatprep.subr.mxu0 0.0
        %3341 = vmatpush1.xpose.msra.mxu0 0.0
        %3342 = vmatprep.subr.mxu0 0.0
        %3343 = vmatpush1.xpose.msra.mxu0 0.0
        %3344 = vmatprep.subr.mxu0 0.0
        %3345 = vmatpush1.xpose.msra.mxu0 0.0
        %3346 = vmatprep.subr.mxu0 0.0
        %3347 = vmatpush1.xpose.msra.mxu0 0.0
        %3348 = vmatprep.subr.mxu0 0.0
        %3349 = vmatpush1.xpose.msra.mxu0 0.0
        %3350 = vmatprep.subr.mxu0 0.0
        %3351 = vmatpush1.xpose.msra.mxu0 0.0
        %3352 = vmatprep.subr.mxu0 0.0
        %3353 = vmatpush1.xpose.msra.mxu0 0.0
        %3354 = vmatprep.subr.mxu0 0.0
        %3355 = vmatpush1.xpose.msra.mxu0 0.0
        %3356 = vmatprep.subr.mxu0 0.0
        %3357 = vmatpush1.xpose.msra.mxu0 0.0
        %3358 = vmatprep.subr.mxu0 0.0
        %3359 = vmatpush1.xpose.msra.mxu0 0.0
        %3360 = vmatprep.subr.mxu0 0.0
        %3361 = vmatpush1.xpose.msra.mxu0 0.0
        %3362 = vmatprep.subr.mxu0 0.0
        %3363 = vmatpush1.xpose.msra.mxu0 0.0
        %3364 = vmatprep.subr.mxu0 0.0
        %3365 = vmatpush1.xpose.msra.mxu0 0.0
        %3366 = vmatprep.subr.mxu0 0.0
        %3367 = vmatpush1.xpose.msra.mxu0 0.0
        %3368 = vmatprep.subr.mxu0 0.0
        %3369 = vmatpush1.xpose.msra.mxu0 0.0
        %3370 = vmatprep.subr.mxu0 0.0
        %3371 = vmatpush1.xpose.msra.mxu0 0.0
        %3372 = vmatprep.subr.mxu0 0.0
        %3373 = vmatpush1.xpose.msra.mxu0 0.0
        %3374 = vmatprep.subr.mxu0 0.0
        %3375 = vmatpush1.xpose.msra.mxu0 0.0
        %3376 = vmatprep.subr.mxu0 0.0
        %3377 = vmatpush1.xpose.msra.mxu0 0.0
        %3378 = vmatprep.subr.mxu0 0.0
        %3379 = vmatpush1.xpose.msra.mxu0 0.0
        %3380 = vmatprep.subr.mxu0 0.0
        %3381 = vmatpush1.xpose.msra.mxu0 0.0
        %3382 = vmatprep.subr.mxu0 0.0
        %3383 = vmatpush1.xpose.msra.mxu0 0.0
        %3384 = vmatprep.subr.mxu0 0.0
        %3385 = vmatpush1.xpose.msra.mxu0 0.0
        %3386 = vmatprep.subr.mxu0 0.0
        %3387 = vmatpush1.xpose.msra.mxu0 0.0
        %3388 = vmatprep.subr.mxu0 0.0
        %3389 = vmatpush1.xpose.msra.mxu0 0.0
        %3390 = vmatprep.mubr.f32.mxu0 0.0
        %3391 = vmatmul.mubr.f32.gmra.mrb[0].mxu0 %v3318
        %v3392 = vpop.f32.mrb[0].mxu0
        %v3393 = vadd.f32 0.0, %v3392
        %v3394 = vpop.f32.mrb[0].mxu0
        %3395 = vdwg.mxu0
        %v3396 = vsel %vm1345, %v3393, -inf
        %3397 = vmax.xlane.f32.xlu0 %v3396
        %v3398 = vpop.xlane.xlu0 %3397
        %v3399 = vsub.f32 %v3393, %v3398
        %v3400 = vmul.f32 %v3399, 1.442695
        %v3401 = vpow.pop %v3400
        %v3402 = vsel %vm1345, %v3401, 0.0
        %3403 = vadd.xlane.f32.xlu0 %v3402
        %v3404 = vpop.xlane.xlu0 %3403
        %v3405 = vrcp.pop %v3404
        %v3406 = vmul.f32 1.0, %v3405
        %3407 = vrot.lane.b32.xlu0 %v3309, 96
        %v3408 = vpop.permute.xlu0 %3407
        %3409 = vrot.lane.b32.xlu0 %v3314, 96
        %v3410 = vpop.permute.xlu0 %3409
        %v3413 = vsel %vm1345, %v3401, 0
        %v3415 = vsel %vm1365, %v3410, 0
        %3417 = vmatprep.subr.mxu0 0.0
        %3418 = vmatpush1.msra.mxu0 %v3408
        %3419 = vmatprep.subr.mxu0 0.0
        %3420 = vmatpush1.msra.mxu0 %v3415
        %3421 = vmatprep.subr.mxu0 0.0
        %3422 = vmatpush1.msra.mxu0 0.0
        %3423 = vmatprep.subr.mxu0 0.0
        %3424 = vmatpush1.msra.mxu0 0.0
        %3425 = vmatprep.subr.mxu0 0.0
        %3426 = vmatpush1.msra.mxu0 0.0
        %3427 = vmatprep.subr.mxu0 0.0
        %3428 = vmatpush1.msra.mxu0 0.0
        %3429 = vmatprep.subr.mxu0 0.0
        %3430 = vmatpush1.msra.mxu0 0.0
        %3431 = vmatprep.subr.mxu0 0.0
        %3432 = vmatpush1.msra.mxu0 0.0
        %3433 = vmatprep.subr.mxu0 0.0
        %3434 = vmatpush1.msra.mxu0 0.0
        %3435 = vmatprep.subr.mxu0 0.0
        %3436 = vmatpush1.msra.mxu0 0.0
        %3437 = vmatprep.subr.mxu0 0.0
        %3438 = vmatpush1.msra.mxu0 0.0
        %3439 = vmatprep.subr.mxu0 0.0
        %3440 = vmatpush1.msra.mxu0 0.0
        %3441 = vmatprep.subr.mxu0 0.0
        %3442 = vmatpush1.msra.mxu0 0.0
        %3443 = vmatprep.subr.mxu0 0.0
        %3444 = vmatpush1.msra.mxu0 0.0
        %3445 = vmatprep.subr.mxu0 0.0
        %3446 = vmatpush1.msra.mxu0 0.0
        %3447 = vmatprep.subr.mxu0 0.0
        %3448 = vmatpush1.msra.mxu0 0.0
        %3449 = vmatprep.subr.mxu0 0.0
        %3450 = vmatpush1.msra.mxu0 0.0
        %3451 = vmatprep.subr.mxu0 0.0
        %3452 = vmatpush1.msra.mxu0 0.0
        %3453 = vmatprep.subr.mxu0 0.0
        %3454 = vmatpush1.msra.mxu0 0.0
        %3455 = vmatprep.subr.mxu0 0.0
        %3456 = vmatpush1.msra.mxu0 0.0
        %3457 = vmatprep.subr.mxu0 0.0
        %3458 = vmatpush1.msra.mxu0 0.0
        %3459 = vmatprep.subr.mxu0 0.0
        %3460 = vmatpush1.msra.mxu0 0.0
        %3461 = vmatprep.subr.mxu0 0.0
        %3462 = vmatpush1.msra.mxu0 0.0
        %3463 = vmatprep.subr.mxu0 0.0
        %3464 = vmatpush1.msra.mxu0 0.0
        %3465 = vmatprep.subr.mxu0 0.0
        %3466 = vmatpush1.msra.mxu0 0.0
        %3467 = vmatprep.subr.mxu0 0.0
        %3468 = vmatpush1.msra.mxu0 0.0
        %3469 = vmatprep.subr.mxu0 0.0
        %3470 = vmatpush1.msra.mxu0 0.0
        %3471 = vmatprep.subr.mxu0 0.0
        %3472 = vmatpush1.msra.mxu0 0.0
        %3473 = vmatprep.subr.mxu0 0.0
        %3474 = vmatpush1.msra.mxu0 0.0
        %3475 = vmatprep.subr.mxu0 0.0
        %3476 = vmatpush1.msra.mxu0 0.0
        %3477 = vmatprep.subr.mxu0 0.0
        %3478 = vmatpush1.msra.mxu0 0.0
        %3479 = vmatprep.subr.mxu0 0.0
        %3480 = vmatpush1.msra.mxu0 0.0
        %3481 = vmatprep.mubr.f32.mxu0 0.0
        %3482 = vmatmul.mubr.f32.gmra.mrb[0].mxu0 %v3413
        %v3483 = vpop.f32.mrb[0].mxu0
        %v3484 = vadd.f32 0.0, %v3483
        %v3485 = vpop.f32.mrb[0].mxu0
        %3486 = vdwg.mxu0
        %v3487 = vmul.f32 %v3484, %v3406
        %3488 = vrot.lane.b32.xlu0 %v3226, 120
        %v3489 = vpop.permute.xlu0 %3488
        %3490 = vrot.lane.b32.xlu0 %v3309, 120
        %v3491 = vpop.permute.xlu0 %3490
        %3492 = vrot.lane.b32.xlu0 %v3314, 120
        %v3493 = vpop.permute.xlu0 %3492
        %v3494 = vsel %vm302, %v3489, 0
        %v3496 = vsel %vm302, %v3491, 0
        %v3498 = vsel %vm302, %v3493, 0
        %3500 = vmatprep.subr.mxu0 0.0
        %3501 = vmatpush1.xpose.msra.mxu0 %v3496
        %3502 = vmatprep.subr.mxu0 0.0
        %3503 = vmatpush1.xpose.msra.mxu0 %v3498
        %3504 = vmatprep.subr.mxu0 0.0
        %3505 = vmatpush1.xpose.msra.mxu0 0.0
        %3506 = vmatprep.subr.mxu0 0.0
        %3507 = vmatpush1.xpose.msra.mxu0 0.0
        %3508 = vmatprep.subr.mxu0 0.0
        %3509 = vmatpush1.xpose.msra.mxu0 0.0
        %3510 = vmatprep.subr.mxu0 0.0
        %3511 = vmatpush1.xpose.msra.mxu0 0.0
        %3512 = vmatprep.subr.mxu0 0.0
        %3513 = vmatpush1.xpose.msra.mxu0 0.0
        %3514 = vmatprep.subr.mxu0 0.0
        %3515 = vmatpush1.xpose.msra.mxu0 0.0
        %3516 = vmatprep.subr.mxu0 0.0
        %3517 = vmatpush1.xpose.msra.mxu0 0.0
        %3518 = vmatprep.subr.mxu0 0.0
        %3519 = vmatpush1.xpose.msra.mxu0 0.0
        %3520 = vmatprep.subr.mxu0 0.0
        %3521 = vmatpush1.xpose.msra.mxu0 0.0
        %3522 = vmatprep.subr.mxu0 0.0
        %3523 = vmatpush1.xpose.msra.mxu0 0.0
        %3524 = vmatprep.subr.mxu0 0.0
        %3525 = vmatpush1.xpose.msra.mxu0 0.0
        %3526 = vmatprep.subr.mxu0 0.0
        %3527 = vmatpush1.xpose.msra.mxu0 0.0
        %3528 = vmatprep.subr.mxu0 0.0
        %3529 = vmatpush1.xpose.msra.mxu0 0.0
        %3530 = vmatprep.subr.mxu0 0.0
        %3531 = vmatpush1.xpose.msra.mxu0 0.0
        %3532 = vmatprep.subr.mxu0 0.0
        %3533 = vmatpush1.xpose.msra.mxu0 0.0
        %3534 = vmatprep.subr.mxu0 0.0
        %3535 = vmatpush1.xpose.msra.mxu0 0.0
        %3536 = vmatprep.subr.mxu0 0.0
        %3537 = vmatpush1.xpose.msra.mxu0 0.0
        %3538 = vmatprep.subr.mxu0 0.0
        %3539 = vmatpush1.xpose.msra.mxu0 0.0
        %3540 = vmatprep.subr.mxu0 0.0
        %3541 = vmatpush1.xpose.msra.mxu0 0.0
        %3542 = vmatprep.subr.mxu0 0.0
        %3543 = vmatpush1.xpose.msra.mxu0 0.0
        %3544 = vmatprep.subr.mxu0 0.0
        %3545 = vmatpush1.xpose.msra.mxu0 0.0
        %3546 = vmatprep.subr.mxu0 0.0
        %3547 = vmatpush1.xpose.msra.mxu0 0.0
        %3548 = vmatprep.subr.mxu0 0.0
        %3549 = vmatpush1.xpose.msra.mxu0 0.0
        %3550 = vmatprep.subr.mxu0 0.0
        %3551 = vmatpush1.xpose.msra.mxu0 0.0
        %3552 = vmatprep.subr.mxu0 0.0
        %3553 = vmatpush1.xpose.msra.mxu0 0.0
        %3554 = vmatprep.subr.mxu0 0.0
        %3555 = vmatpush1.xpose.msra.mxu0 0.0
        %3556 = vmatprep.subr.mxu0 0.0
        %3557 = vmatpush1.xpose.msra.mxu0 0.0
        %3558 = vmatprep.subr.mxu0 0.0
        %3559 = vmatpush1.xpose.msra.mxu0 0.0
        %3560 = vmatprep.subr.mxu0 0.0
        %3561 = vmatpush1.xpose.msra.mxu0 0.0
        %3562 = vmatprep.subr.mxu0 0.0
        %3563 = vmatpush1.xpose.msra.mxu0 0.0
        %3564 = vmatprep.mubr.f32.mxu0 0.0
        %3565 = vmatmul.mubr.f32.gmra.mrb[0].mxu0 %v3494
        %v3566 = vpop.f32.mrb[0].mxu0
        %v3567 = vadd.f32 0.0, %v3566
        %v3568 = vpop.f32.mrb[0].mxu0
        %3569 = vdwg.mxu0
        %v3570 = vsel %vm1345, %v3567, -inf
        %3571 = vmax.xlane.f32.xlu0 %v3570
        %v3572 = vpop.xlane.xlu0 %3571
        %v3573 = vsub.f32 %v3567, %v3572
        %v3574 = vmul.f32 %v3573, 1.442695
        %v3575 = vpow.pop %v3574
        %v3576 = vsel %vm1345, %v3575, 0.0
        %3577 = vadd.xlane.f32.xlu0 %v3576
        %v3578 = vpop.xlane.xlu0 %3577
        %v3579 = vrcp.pop %v3578
        %v3580 = vmul.f32 1.0, %v3579
        %3581 = vrot.lane.b32.xlu0 %v3309, 88
        %v3582 = vpop.permute.xlu0 %3581
        %3583 = vrot.lane.b32.xlu0 %v3314, 88
        %v3584 = vpop.permute.xlu0 %3583
        %v3587 = vsel %vm1345, %v3575, 0
        %v3589 = vsel %vm1365, %v3584, 0
        %3591 = vmatprep.subr.mxu0 0.0
        %3592 = vmatpush1.msra.mxu0 %v3582
        %3593 = vmatprep.subr.mxu0 0.0
        %3594 = vmatpush1.msra.mxu0 %v3589
        %3595 = vmatprep.subr.mxu0 0.0
        %3596 = vmatpush1.msra.mxu0 0.0
        %3597 = vmatprep.subr.mxu0 0.0
        %3598 = vmatpush1.msra.mxu0 0.0
        %3599 = vmatprep.subr.mxu0 0.0
        %3600 = vmatpush1.msra.mxu0 0.0
        %3601 = vmatprep.subr.mxu0 0.0
        %3602 = vmatpush1.msra.mxu0 0.0
        %3603 = vmatprep.subr.mxu0 0.0
        %3604 = vmatpush1.msra.mxu0 0.0
        %3605 = vmatprep.subr.mxu0 0.0
        %3606 = vmatpush1.msra.mxu0 0.0
        %3607 = vmatprep.subr.mxu0 0.0
        %3608 = vmatpush1.msra.mxu0 0.0
        %3609 = vmatprep.subr.mxu0 0.0
        %3610 = vmatpush1.msra.mxu0 0.0
        %3611 = vmatprep.subr.mxu0 0.0
        %3612 = vmatpush1.msra.mxu0 0.0
        %3613 = vmatprep.subr.mxu0 0.0
        %3614 = vmatpush1.msra.mxu0 0.0
        %3615 = vmatprep.subr.mxu0 0.0
        %3616 = vmatpush1.msra.mxu0 0.0
        %3617 = vmatprep.subr.mxu0 0.0
        %3618 = vmatpush1.msra.mxu0 0.0
        %3619 = vmatprep.subr.mxu0 0.0
        %3620 = vmatpush1.msra.mxu0 0.0
        %3621 = vmatprep.subr.mxu0 0.0
        %3622 = vmatpush1.msra.mxu0 0.0
        %3623 = vmatprep.subr.mxu0 0.0
        %3624 = vmatpush1.msra.mxu0 0.0
        %3625 = vmatprep.subr.mxu0 0.0
        %3626 = vmatpush1.msra.mxu0 0.0
        %3627 = vmatprep.subr.mxu0 0.0
        %3628 = vmatpush1.msra.mxu0 0.0
        %3629 = vmatprep.subr.mxu0 0.0
        %3630 = vmatpush1.msra.mxu0 0.0
        %3631 = vmatprep.subr.mxu0 0.0
        %3632 = vmatpush1.msra.mxu0 0.0
        %3633 = vmatprep.subr.mxu0 0.0
        %3634 = vmatpush1.msra.mxu0 0.0
        %3635 = vmatprep.subr.mxu0 0.0
        %3636 = vmatpush1.msra.mxu0 0.0
        %3637 = vmatprep.subr.mxu0 0.0
        %3638 = vmatpush1.msra.mxu0 0.0
        %3639 = vmatprep.subr.mxu0 0.0
        %3640 = vmatpush1.msra.mxu0 0.0
        %3641 = vmatprep.subr.mxu0 0.0
        %3642 = vmatpush1.msra.mxu0 0.0
        %3643 = vmatprep.subr.mxu0 0.0
        %3644 = vmatpush1.msra.mxu0 0.0
        %3645 = vmatprep.subr.mxu0 0.0
        %3646 = vmatpush1.msra.mxu0 0.0
        %3647 = vmatprep.subr.mxu0 0.0
        %3648 = vmatpush1.msra.mxu0 0.0
        %3649 = vmatprep.subr.mxu0 0.0
        %3650 = vmatpush1.msra.mxu0 0.0
        %3651 = vmatprep.subr.mxu0 0.0
        %3652 = vmatpush1.msra.mxu0 0.0
        %3653 = vmatprep.subr.mxu0 0.0
        %3654 = vmatpush1.msra.mxu0 0.0
        %3655 = vmatprep.mubr.f32.mxu0 0.0
        %3656 = vmatmul.mubr.f32.gmra.mrb[0].mxu0 %v3587
        %v3657 = vpop.f32.mrb[0].mxu0
        %v3658 = vadd.f32 0.0, %v3657
        %v3659 = vpop.f32.mrb[0].mxu0
        %3660 = vdwg.mxu0
        %v3661 = vmul.f32 %v3658, %v3580
        %3662 = vrot.lane.b32.xlu0 %v3226, 112
        %v3663 = vpop.permute.xlu0 %3662
        %3664 = vrot.lane.b32.xlu0 %v3309, 112
        %v3665 = vpop.permute.xlu0 %3664
        %3666 = vrot.lane.b32.xlu0 %v3314, 112
        %v3667 = vpop.permute.xlu0 %3666
        %v3668 = vsel %vm302, %v3663, 0
        %v3670 = vsel %vm302, %v3665, 0
        %v3672 = vsel %vm302, %v3667, 0
        %3674 = vmatprep.subr.mxu0 0.0
        %3675 = vmatpush1.xpose.msra.mxu0 %v3670
        %3676 = vmatprep.subr.mxu0 0.0
        %3677 = vmatpush1.xpose.msra.mxu0 %v3672
        %3678 = vmatprep.subr.mxu0 0.0
        %3679 = vmatpush1.xpose.msra.mxu0 0.0
        %3680 = vmatprep.subr.mxu0 0.0
        %3681 = vmatpush1.xpose.msra.mxu0 0.0
        %3682 = vmatprep.subr.mxu0 0.0
        %3683 = vmatpush1.xpose.msra.mxu0 0.0
        %3684 = vmatprep.subr.mxu0 0.0
        %3685 = vmatpush1.xpose.msra.mxu0 0.0
        %3686 = vmatprep.subr.mxu0 0.0
        %3687 = vmatpush1.xpose.msra.mxu0 0.0
        %3688 = vmatprep.subr.mxu0 0.0
        %3689 = vmatpush1.xpose.msra.mxu0 0.0
        %3690 = vmatprep.subr.mxu0 0.0
        %3691 = vmatpush1.xpose.msra.mxu0 0.0
        %3692 = vmatprep.subr.mxu0 0.0
        %3693 = vmatpush1.xpose.msra.mxu0 0.0
        %3694 = vmatprep.subr.mxu0 0.0
        %3695 = vmatpush1.xpose.msra.mxu0 0.0
        %3696 = vmatprep.subr.mxu0 0.0
        %3697 = vmatpush1.xpose.msra.mxu0 0.0
        %3698 = vmatprep.subr.mxu0 0.0
        %3699 = vmatpush1.xpose.msra.mxu0 0.0
        %3700 = vmatprep.subr.mxu0 0.0
        %3701 = vmatpush1.xpose.msra.mxu0 0.0
        %3702 = vmatprep.subr.mxu0 0.0
        %3703 = vmatpush1.xpose.msra.mxu0 0.0
        %3704 = vmatprep.subr.mxu0 0.0
        %3705 = vmatpush1.xpose.msra.mxu0 0.0
        %3706 = vmatprep.subr.mxu0 0.0
        %3707 = vmatpush1.xpose.msra.mxu0 0.0
        %3708 = vmatprep.subr.mxu0 0.0
        %3709 = vmatpush1.xpose.msra.mxu0 0.0
        %3710 = vmatprep.subr.mxu0 0.0
        %3711 = vmatpush1.xpose.msra.mxu0 0.0
        %3712 = vmatprep.subr.mxu0 0.0
        %3713 = vmatpush1.xpose.msra.mxu0 0.0
        %3714 = vmatprep.subr.mxu0 0.0
        %3715 = vmatpush1.xpose.msra.mxu0 0.0
        %3716 = vmatprep.subr.mxu0 0.0
        %3717 = vmatpush1.xpose.msra.mxu0 0.0
        %3718 = vmatprep.subr.mxu0 0.0
        %3719 = vmatpush1.xpose.msra.mxu0 0.0
        %3720 = vmatprep.subr.mxu0 0.0
        %3721 = vmatpush1.xpose.msra.mxu0 0.0
        %3722 = vmatprep.subr.mxu0 0.0
        %3723 = vmatpush1.xpose.msra.mxu0 0.0
        %3724 = vmatprep.subr.mxu0 0.0
        %3725 = vmatpush1.xpose.msra.mxu0 0.0
        %3726 = vmatprep.subr.mxu0 0.0
        %3727 = vmatpush1.xpose.msra.mxu0 0.0
        %3728 = vmatprep.subr.mxu0 0.0
        %3729 = vmatpush1.xpose.msra.mxu0 0.0
        %3730 = vmatprep.subr.mxu0 0.0
        %3731 = vmatpush1.xpose.msra.mxu0 0.0
        %3732 = vmatprep.subr.mxu0 0.0
        %3733 = vmatpush1.xpose.msra.mxu0 0.0
        %3734 = vmatprep.subr.mxu0 0.0
        %3735 = vmatpush1.xpose.msra.mxu0 0.0
        %3736 = vmatprep.subr.mxu0 0.0
        %3737 = vmatpush1.xpose.msra.mxu0 0.0
        %3738 = vmatprep.mubr.f32.mxu0 0.0
        %3739 = vmatmul.mubr.f32.gmra.mrb[0].mxu0 %v3668
        %v3740 = vpop.f32.mrb[0].mxu0
        %v3741 = vadd.f32 0.0, %v3740
        %v3742 = vpop.f32.mrb[0].mxu0
        %3743 = vdwg.mxu0
        %v3744 = vsel %vm1345, %v3741, -inf
        %3745 = vmax.xlane.f32.xlu0 %v3744
        %v3746 = vpop.xlane.xlu0 %3745
        %v3747 = vsub.f32 %v3741, %v3746
        %v3748 = vmul.f32 %v3747, 1.442695
        %v3749 = vpow.pop %v3748
        %v3750 = vsel %vm1345, %v3749, 0.0
        %3751 = vadd.xlane.f32.xlu0 %v3750
        %v3752 = vpop.xlane.xlu0 %3751
        %v3753 = vrcp.pop %v3752
        %v3754 = vmul.f32 1.0, %v3753
        %3755 = vrot.lane.b32.xlu0 %v3309, 80
        %v3756 = vpop.permute.xlu0 %3755
        %3757 = vrot.lane.b32.xlu0 %v3314, 80
        %v3758 = vpop.permute.xlu0 %3757
        %v3761 = vsel %vm1345, %v3749, 0
        %v3763 = vsel %vm1365, %v3758, 0
        %3765 = vmatprep.subr.mxu0 0.0
        %3766 = vmatpush1.msra.mxu0 %v3756
        %3767 = vmatprep.subr.mxu0 0.0
        %3768 = vmatpush1.msra.mxu0 %v3763
        %3769 = vmatprep.subr.mxu0 0.0
        %3770 = vmatpush1.msra.mxu0 0.0
        %3771 = vmatprep.subr.mxu0 0.0
        %3772 = vmatpush1.msra.mxu0 0.0
        %3773 = vmatprep.subr.mxu0 0.0
        %3774 = vmatpush1.msra.mxu0 0.0
        %3775 = vmatprep.subr.mxu0 0.0
        %3776 = vmatpush1.msra.mxu0 0.0
        %3777 = vmatprep.subr.mxu0 0.0
        %3778 = vmatpush1.msra.mxu0 0.0
        %3779 = vmatprep.subr.mxu0 0.0
        %3780 = vmatpush1.msra.mxu0 0.0
        %3781 = vmatprep.subr.mxu0 0.0
        %3782 = vmatpush1.msra.mxu0 0.0
        %3783 = vmatprep.subr.mxu0 0.0
        %3784 = vmatpush1.msra.mxu0 0.0
        %3785 = vmatprep.subr.mxu0 0.0
        %3786 = vmatpush1.msra.mxu0 0.0
        %3787 = vmatprep.subr.mxu0 0.0
        %3788 = vmatpush1.msra.mxu0 0.0
        %3789 = vmatprep.subr.mxu0 0.0
        %3790 = vmatpush1.msra.mxu0 0.0
        %3791 = vmatprep.subr.mxu0 0.0
        %3792 = vmatpush1.msra.mxu0 0.0
        %3793 = vmatprep.subr.mxu0 0.0
        %3794 = vmatpush1.msra.mxu0 0.0
        %3795 = vmatprep.subr.mxu0 0.0
        %3796 = vmatpush1.msra.mxu0 0.0
        %3797 = vmatprep.subr.mxu0 0.0
        %3798 = vmatpush1.msra.mxu0 0.0
        %3799 = vmatprep.subr.mxu0 0.0
        %3800 = vmatpush1.msra.mxu0 0.0
        %3801 = vmatprep.subr.mxu0 0.0
        %3802 = vmatpush1.msra.mxu0 0.0
        %3803 = vmatprep.subr.mxu0 0.0
        %3804 = vmatpush1.msra.mxu0 0.0
        %3805 = vmatprep.subr.mxu0 0.0
        %3806 = vmatpush1.msra.mxu0 0.0
        %3807 = vmatprep.subr.mxu0 0.0
        %3808 = vmatpush1.msra.mxu0 0.0
        %3809 = vmatprep.subr.mxu0 0.0
        %3810 = vmatpush1.msra.mxu0 0.0
        %3811 = vmatprep.subr.mxu0 0.0
        %3812 = vmatpush1.msra.mxu0 0.0
        %3813 = vmatprep.subr.mxu0 0.0
        %3814 = vmatpush1.msra.mxu0 0.0
        %3815 = vmatprep.subr.mxu0 0.0
        %3816 = vmatpush1.msra.mxu0 0.0
        %3817 = vmatprep.subr.mxu0 0.0
        %3818 = vmatpush1.msra.mxu0 0.0
        %3819 = vmatprep.subr.mxu0 0.0
        %3820 = vmatpush1.msra.mxu0 0.0
        %3821 = vmatprep.subr.mxu0 0.0
        %3822 = vmatpush1.msra.mxu0 0.0
        %3823 = vmatprep.subr.mxu0 0.0
        %3824 = vmatpush1.msra.mxu0 0.0
        %3825 = vmatprep.subr.mxu0 0.0
        %3826 = vmatpush1.msra.mxu0 0.0
        %3827 = vmatprep.subr.mxu0 0.0
        %3828 = vmatpush1.msra.mxu0 0.0
        %3829 = vmatprep.mubr.f32.mxu0 0.0
        %3830 = vmatmul.mubr.f32.gmra.mrb[0].mxu0 %v3761
        %v3831 = vpop.f32.mrb[0].mxu0
        %v3832 = vadd.f32 0.0, %v3831
        %v3833 = vpop.f32.mrb[0].mxu0
        %3834 = vdwg.mxu0
        %v3835 = vmul.f32 %v3832, %v3754
        %3836 = vrot.lane.b32.xlu0 %v3226, 104
        %v3837 = vpop.permute.xlu0 %3836
        %3838 = vrot.lane.b32.xlu0 %v3309, 104
        %v3839 = vpop.permute.xlu0 %3838
        %3840 = vrot.lane.b32.xlu0 %v3314, 104
        %v3841 = vpop.permute.xlu0 %3840
        %v3842 = vsel %vm302, %v3837, 0
        %v3844 = vsel %vm302, %v3839, 0
        %v3846 = vsel %vm302, %v3841, 0
        %3848 = vmatprep.subr.mxu0 0.0
        %3849 = vmatpush1.xpose.msra.mxu0 %v3844
        %3850 = vmatprep.subr.mxu0 0.0
        %3851 = vmatpush1.xpose.msra.mxu0 %v3846
        %3852 = vmatprep.subr.mxu0 0.0
        %3853 = vmatpush1.xpose.msra.mxu0 0.0
        %3854 = vmatprep.subr.mxu0 0.0
        %3855 = vmatpush1.xpose.msra.mxu0 0.0
        %3856 = vmatprep.subr.mxu0 0.0
        %3857 = vmatpush1.xpose.msra.mxu0 0.0
        %3858 = vmatprep.subr.mxu0 0.0
        %3859 = vmatpush1.xpose.msra.mxu0 0.0
        %3860 = vmatprep.subr.mxu0 0.0
        %3861 = vmatpush1.xpose.msra.mxu0 0.0
        %3862 = vmatprep.subr.mxu0 0.0
        %3863 = vmatpush1.xpose.msra.mxu0 0.0
        %3864 = vmatprep.subr.mxu0 0.0
        %3865 = vmatpush1.xpose.msra.mxu0 0.0
        %3866 = vmatprep.subr.mxu0 0.0
        %3867 = vmatpush1.xpose.msra.mxu0 0.0
        %3868 = vmatprep.subr.mxu0 0.0
        %3869 = vmatpush1.xpose.msra.mxu0 0.0
        %3870 = vmatprep.subr.mxu0 0.0
        %3871 = vmatpush1.xpose.msra.mxu0 0.0
        %3872 = vmatprep.subr.mxu0 0.0
        %3873 = vmatpush1.xpose.msra.mxu0 0.0
        %3874 = vmatprep.subr.mxu0 0.0
        %3875 = vmatpush1.xpose.msra.mxu0 0.0
        %3876 = vmatprep.subr.mxu0 0.0
        %3877 = vmatpush1.xpose.msra.mxu0 0.0
        %3878 = vmatprep.subr.mxu0 0.0
        %3879 = vmatpush1.xpose.msra.mxu0 0.0
        %3880 = vmatprep.subr.mxu0 0.0
        %3881 = vmatpush1.xpose.msra.mxu0 0.0
        %3882 = vmatprep.subr.mxu0 0.0
        %3883 = vmatpush1.xpose.msra.mxu0 0.0
        %3884 = vmatprep.subr.mxu0 0.0
        %3885 = vmatpush1.xpose.msra.mxu0 0.0
        %3886 = vmatprep.subr.mxu0 0.0
        %3887 = vmatpush1.xpose.msra.mxu0 0.0
        %3888 = vmatprep.subr.mxu0 0.0
        %3889 = vmatpush1.xpose.msra.mxu0 0.0
        %3890 = vmatprep.subr.mxu0 0.0
        %3891 = vmatpush1.xpose.msra.mxu0 0.0
        %3892 = vmatprep.subr.mxu0 0.0
        %3893 = vmatpush1.xpose.msra.mxu0 0.0
        %3894 = vmatprep.subr.mxu0 0.0
        %3895 = vmatpush1.xpose.msra.mxu0 0.0
        %3896 = vmatprep.subr.mxu0 0.0
        %3897 = vmatpush1.xpose.msra.mxu0 0.0
        %3898 = vmatprep.subr.mxu0 0.0
        %3899 = vmatpush1.xpose.msra.mxu0 0.0
        %3900 = vmatprep.subr.mxu0 0.0
        %3901 = vmatpush1.xpose.msra.mxu0 0.0
        %3902 = vmatprep.subr.mxu0 0.0
        %3903 = vmatpush1.xpose.msra.mxu0 0.0
        %3904 = vmatprep.subr.mxu0 0.0
        %3905 = vmatpush1.xpose.msra.mxu0 0.0
        %3906 = vmatprep.subr.mxu0 0.0
        %3907 = vmatpush1.xpose.msra.mxu0 0.0
        %3908 = vmatprep.subr.mxu0 0.0
        %3909 = vmatpush1.xpose.msra.mxu0 0.0
        %3910 = vmatprep.subr.mxu0 0.0
        %3911 = vmatpush1.xpose.msra.mxu0 0.0
        %3912 = vmatprep.mubr.f32.mxu0 0.0
        %3913 = vmatmul.mubr.f32.gmra.mrb[0].mxu0 %v3842
        %v3914 = vpop.f32.mrb[0].mxu0
        %v3915 = vadd.f32 0.0, %v3914
        %v3916 = vpop.f32.mrb[0].mxu0
        %3917 = vdwg.mxu0
        %v3918 = vsel %vm1345, %v3915, -inf
        %3919 = vmax.xlane.f32.xlu0 %v3918
        %v3920 = vpop.xlane.xlu0 %3919
        %v3921 = vsub.f32 %v3915, %v3920
        %v3922 = vmul.f32 %v3921, 1.442695
        %v3923 = vpow.pop %v3922
        %v3924 = vsel %vm1345, %v3923, 0.0
        %3925 = vadd.xlane.f32.xlu0 %v3924
        %v3926 = vpop.xlane.xlu0 %3925
        %v3927 = vrcp.pop %v3926
        %v3928 = vmul.f32 1.0, %v3927
        %3929 = vrot.lane.b32.xlu0 %v3309, 72
        %v3930 = vpop.permute.xlu0 %3929
        %3931 = vrot.lane.b32.xlu0 %v3314, 72
        %v3932 = vpop.permute.xlu0 %3931
        %v3935 = vsel %vm1345, %v3923, 0
        %v3937 = vsel %vm1365, %v3932, 0
        %3939 = vmatprep.subr.mxu0 0.0
        %3940 = vmatpush1.msra.mxu0 %v3930
        %3941 = vmatprep.subr.mxu0 0.0
        %3942 = vmatpush1.msra.mxu0 %v3937
        %3943 = vmatprep.subr.mxu0 0.0
        %3944 = vmatpush1.msra.mxu0 0.0
        %3945 = vmatprep.subr.mxu0 0.0
        %3946 = vmatpush1.msra.mxu0 0.0
        %3947 = vmatprep.subr.mxu0 0.0
        %3948 = vmatpush1.msra.mxu0 0.0
        %3949 = vmatprep.subr.mxu0 0.0
        %3950 = vmatpush1.msra.mxu0 0.0
        %3951 = vmatprep.subr.mxu0 0.0
        %3952 = vmatpush1.msra.mxu0 0.0
        %3953 = vmatprep.subr.mxu0 0.0
        %3954 = vmatpush1.msra.mxu0 0.0
        %3955 = vmatprep.subr.mxu0 0.0
        %3956 = vmatpush1.msra.mxu0 0.0
        %3957 = vmatprep.subr.mxu0 0.0
        %3958 = vmatpush1.msra.mxu0 0.0
        %3959 = vmatprep.subr.mxu0 0.0
        %3960 = vmatpush1.msra.mxu0 0.0
        %3961 = vmatprep.subr.mxu0 0.0
        %3962 = vmatpush1.msra.mxu0 0.0
        %3963 = vmatprep.subr.mxu0 0.0
        %3964 = vmatpush1.msra.mxu0 0.0
        %3965 = vmatprep.subr.mxu0 0.0
        %3966 = vmatpush1.msra.mxu0 0.0
        %3967 = vmatprep.subr.mxu0 0.0
        %3968 = vmatpush1.msra.mxu0 0.0
        %3969 = vmatprep.subr.mxu0 0.0
        %3970 = vmatpush1.msra.mxu0 0.0
        %3971 = vmatprep.subr.mxu0 0.0
        %3972 = vmatpush1.msra.mxu0 0.0
        %3973 = vmatprep.subr.mxu0 0.0
        %3974 = vmatpush1.msra.mxu0 0.0
        %3975 = vmatprep.subr.mxu0 0.0
        %3976 = vmatpush1.msra.mxu0 0.0
        %3977 = vmatprep.subr.mxu0 0.0
        %3978 = vmatpush1.msra.mxu0 0.0
        %3979 = vmatprep.subr.mxu0 0.0
        %3980 = vmatpush1.msra.mxu0 0.0
        %3981 = vmatprep.subr.mxu0 0.0
        %3982 = vmatpush1.msra.mxu0 0.0
        %3983 = vmatprep.subr.mxu0 0.0
        %3984 = vmatpush1.msra.mxu0 0.0
        %3985 = vmatprep.subr.mxu0 0.0
        %3986 = vmatpush1.msra.mxu0 0.0
        %3987 = vmatprep.subr.mxu0 0.0
        %3988 = vmatpush1.msra.mxu0 0.0
        %3989 = vmatprep.subr.mxu0 0.0
        %3990 = vmatpush1.msra.mxu0 0.0
        %3991 = vmatprep.subr.mxu0 0.0
        %3992 = vmatpush1.msra.mxu0 0.0
        %3993 = vmatprep.subr.mxu0 0.0
        %3994 = vmatpush1.msra.mxu0 0.0
        %3995 = vmatprep.subr.mxu0 0.0
        %3996 = vmatpush1.msra.mxu0 0.0
        %3997 = vmatprep.subr.mxu0 0.0
        %3998 = vmatpush1.msra.mxu0 0.0
        %3999 = vmatprep.subr.mxu0 0.0
        %4000 = vmatpush1.msra.mxu0 0.0
        %4001 = vmatprep.subr.mxu0 0.0
        %4002 = vmatpush1.msra.mxu0 0.0
        %4003 = vmatprep.mubr.f32.mxu0 0.0
        %4004 = vmatmul.mubr.f32.gmra.mrb[0].mxu0 %v3935
        %v4005 = vpop.f32.mrb[0].mxu0
        %v4006 = vadd.f32 0.0, %v4005
        %v4007 = vpop.f32.mrb[0].mxu0
        %4008 = vdwg.mxu0
        %v4009 = vmul.f32 %v4006, %v3928
        %4011 = vrot.lane.b32.xlu0 %v3661, 8
        %v4012 = vpop.permute.xlu0 %4011
        %4015 = vrot.lane.b32.xlu0 %v3835, 16
        %v4016 = vpop.permute.xlu0 %4015
        %4019 = vrot.lane.b32.xlu0 %v4009, 24
        %v4020 = vpop.permute.xlu0 %4019
        %v4022 = vsel %vm302, %v3487, %v4012
        %v4023 = vsel %vm976, %v4022, %v4016
        %v4024 = vsel %vm978, %v4023, %v4020
        %v4025 = vld [vmem:[%s2 + $0x1c0] sm:$0xff]
        %v4026 = vld [vmem:[%s2 + $0x1c8] sm:$0xff]
        %v4027 = vld [vmem:[%s2 + $0x1d0] sm:$0xff]
        %v4028 = vld [vmem:[%s2 + $0x1d8] sm:$0xff]
        %v4029 = vld [vmem:[%s3 + $0x11] sm:$0x1]
        %v4030 = vlaneseq
        %v4031 = vshrl.u32 %v4030, 7
        %v4032 = vsub.s32 0, %v4031
        %v4033 = vrot.slane %v4029, %v4032
        %v4035 = vsel %vm225, %v4024, 0
        %4037 = vmatprep.subr.mxu0 0.0
        %4038 = vmatpush1.msra.mxu0 %v4025
        %4039 = vmatprep.subr.mxu0 0.0
        %4040 = vmatpush1.msra.mxu0 %v4026
        %4041 = vmatprep.subr.mxu0 0.0
        %4042 = vmatpush1.msra.mxu0 %v4027
        %4043 = vmatprep.subr.mxu0 0.0
        %4044 = vmatpush1.msra.mxu0 %v4028
        %4045 = vmatprep.subr.mxu0 0.0
        %4046 = vmatpush1.msra.mxu0 0.0
        %4047 = vmatprep.subr.mxu0 0.0
        %4048 = vmatpush1.msra.mxu0 0.0
        %4049 = vmatprep.subr.mxu0 0.0
        %4050 = vmatpush1.msra.mxu0 0.0
        %4051 = vmatprep.subr.mxu0 0.0
        %4052 = vmatpush1.msra.mxu0 0.0
        %4053 = vmatprep.subr.mxu0 0.0
        %4054 = vmatpush1.msra.mxu0 0.0
        %4055 = vmatprep.subr.mxu0 0.0
        %4056 = vmatpush1.msra.mxu0 0.0
        %4057 = vmatprep.subr.mxu0 0.0
        %4058 = vmatpush1.msra.mxu0 0.0
        %4059 = vmatprep.subr.mxu0 0.0
        %4060 = vmatpush1.msra.mxu0 0.0
        %4061 = vmatprep.subr.mxu0 0.0
        %4062 = vmatpush1.msra.mxu0 0.0
        %4063 = vmatprep.subr.mxu0 0.0
        %4064 = vmatpush1.msra.mxu0 0.0
        %4065 = vmatprep.subr.mxu0 0.0
        %4066 = vmatpush1.msra.mxu0 0.0
        %4067 = vmatprep.subr.mxu0 0.0
        %4068 = vmatpush1.msra.mxu0 0.0
        %4069 = vmatprep.subr.mxu0 0.0
        %4070 = vmatpush1.msra.mxu0 0.0
        %4071 = vmatprep.subr.mxu0 0.0
        %4072 = vmatpush1.msra.mxu0 0.0
        %4073 = vmatprep.subr.mxu0 0.0
        %4074 = vmatpush1.msra.mxu0 0.0
        %4075 = vmatprep.subr.mxu0 0.0
        %4076 = vmatpush1.msra.mxu0 0.0
        %4077 = vmatprep.subr.mxu0 0.0
        %4078 = vmatpush1.msra.mxu0 0.0
        %4079 = vmatprep.subr.mxu0 0.0
        %4080 = vmatpush1.msra.mxu0 0.0
        %4081 = vmatprep.subr.mxu0 0.0
        %4082 = vmatpush1.msra.mxu0 0.0
        %4083 = vmatprep.subr.mxu0 0.0
        %4084 = vmatpush1.msra.mxu0 0.0
        %4085 = vmatprep.subr.mxu0 0.0
        %4086 = vmatpush1.msra.mxu0 0.0
        %4087 = vmatprep.subr.mxu0 0.0
        %4088 = vmatpush1.msra.mxu0 0.0
        %4089 = vmatprep.subr.mxu0 0.0
        %4090 = vmatpush1.msra.mxu0 0.0
        %4091 = vmatprep.subr.mxu0 0.0
        %4092 = vmatpush1.msra.mxu0 0.0
        %4093 = vmatprep.subr.mxu0 0.0
        %4094 = vmatpush1.msra.mxu0 0.0
        %4095 = vmatprep.subr.mxu0 0.0
        %4096 = vmatpush1.msra.mxu0 0.0
        %4097 = vmatprep.subr.mxu0 0.0
        %4098 = vmatpush1.msra.mxu0 0.0
        %4099 = vmatprep.subr.mxu0 0.0
        %4100 = vmatpush1.msra.mxu0 0.0
        %4101 = vmatprep.mubr.f32.mxu0 0.0
        %4102 = vmatmul.mubr.f32.gmra.mrb[0].mxu0 %v4035
        %v4103 = vpop.f32.mrb[0].mxu0
        %v4104 = vadd.f32 %v4033, %v4103
        %v4105 = vpop.f32.mrb[0].mxu0
        %4106 = vdwg.mxu0
        %v4107 = vld [vmem:[%s3 + $0x16] sm:$0x1]
        %v4108 = vld [vmem:[%s3 + $0x17] sm:$0x1]
        %v4109 = vadd.f32 %v3146, %v4104
        %v4110 = vsel %vm225, %v4109, 0.0
        %4111 = vadd.xlane.f32.xlu0 %v4110
        %v4112 = vpop.xlane.xlu0 %4111
        %v4113 = vmul.f32 %v4112, %v1068
        %v4114 = vsub.f32 %v4109, %v4113
        %v4115 = vmul.f32 %v4114, %v4114
        %v4116 = vsel %vm225, %v4115, 0.0
        %4117 = vadd.xlane.f32.xlu0 %v4116
        %v4118 = vpop.xlane.xlu0 %4117
        %v4119 = vmul.f32 %v4118, %v1068
        %v4120 = vadd.f32 %v4119, 1e-05
        %v4121 = vrsqrt.pop %v4120
        %v4122 = vmul.f32 %v4114, %v4121
        %v4123 = vlaneseq
        %v4124 = vshrl.u32 %v4123, 7
        %v4125 = vsub.s32 0, %v4124
        %v4126 = vrot.slane %v4107, %v4125
        %v4127 = vmul.f32 %v4122, %v4126
        %v4128 = vlaneseq
        %v4129 = vshrl.u32 %v4128, 7
        %v4130 = vsub.s32 0, %v4129
        %v4131 = vrot.slane %v4108, %v4130
        %v4132 = vadd.f32 %v4127, %v4131
        %v4133 = vld [vmem:[%s2 + $0x1e0] sm:$0xff]
        %v4134 = vld [vmem:[%s2 + $0x1e8] sm:$0xff]
        %v4135 = vld [vmem:[%s2 + $0x1f0] sm:$0xff]
        %v4136 = vld [vmem:[%s2 + $0x1f8] sm:$0xff]
        %v4137 = vld [vmem:[%s3 + $0x12] sm:$0x1]
        %v4138 = vlaneseq
        %v4139 = vshrl.u32 %v4138, 7
        %v4140 = vsub.s32 0, %v4139
        %v4141 = vrot.slane %v4137, %v4140
        %v4143 = vsel %vm225, %v4132, 0
        %4145 = vmatprep.subr.mxu0 0.0
        %4146 = vmatpush1.msra.mxu0 %v4133
        %4147 = vmatprep.subr.mxu0 0.0
        %4148 = vmatpush1.msra.mxu0 %v4134
        %4149 = vmatprep.subr.mxu0 0.0
        %4150 = vmatpush1.msra.mxu0 %v4135
        %4151 = vmatprep.subr.mxu0 0.0
        %4152 = vmatpush1.msra.mxu0 %v4136
        %4153 = vmatprep.subr.mxu0 0.0
        %4154 = vmatpush1.msra.mxu0 0.0
        %4155 = vmatprep.subr.mxu0 0.0
        %4156 = vmatpush1.msra.mxu0 0.0
        %4157 = vmatprep.subr.mxu0 0.0
        %4158 = vmatpush1.msra.mxu0 0.0
        %4159 = vmatprep.subr.mxu0 0.0
        %4160 = vmatpush1.msra.mxu0 0.0
        %4161 = vmatprep.subr.mxu0 0.0
        %4162 = vmatpush1.msra.mxu0 0.0
        %4163 = vmatprep.subr.mxu0 0.0
        %4164 = vmatpush1.msra.mxu0 0.0
        %4165 = vmatprep.subr.mxu0 0.0
        %4166 = vmatpush1.msra.mxu0 0.0
        %4167 = vmatprep.subr.mxu0 0.0
        %4168 = vmatpush1.msra.mxu0 0.0
        %4169 = vmatprep.subr.mxu0 0.0
        %4170 = vmatpush1.msra.mxu0 0.0
        %4171 = vmatprep.subr.mxu0 0.0
        %4172 = vmatpush1.msra.mxu0 0.0
        %4173 = vmatprep.subr.mxu0 0.0
        %4174 = vmatpush1.msra.mxu0 0.0
        %4175 = vmatprep.subr.mxu0 0.0
        %4176 = vmatpush1.msra.mxu0 0.0
        %4177 = vmatprep.subr.mxu0 0.0
        %4178 = vmatpush1.msra.mxu0 0.0
        %4179 = vmatprep.subr.mxu0 0.0
        %4180 = vmatpush1.msra.mxu0 0.0
        %4181 = vmatprep.subr.mxu0 0.0
        %4182 = vmatpush1.msra.mxu0 0.0
        %4183 = vmatprep.subr.mxu0 0.0
        %4184 = vmatpush1.msra.mxu0 0.0
        %4185 = vmatprep.subr.mxu0 0.0
        %4186 = vmatpush1.msra.mxu0 0.0
        %4187 = vmatprep.subr.mxu0 0.0
        %4188 = vmatpush1.msra.mxu0 0.0
        %4189 = vmatprep.subr.mxu0 0.0
        %4190 = vmatpush1.msra.mxu0 0.0
        %4191 = vmatprep.subr.mxu0 0.0
        %4192 = vmatpush1.msra.mxu0 0.0
        %4193 = vmatprep.subr.mxu0 0.0
        %4194 = vmatpush1.msra.mxu0 0.0
        %4195 = vmatprep.subr.mxu0 0.0
        %4196 = vmatpush1.msra.mxu0 0.0
        %4197 = vmatprep.subr.mxu0 0.0
        %4198 = vmatpush1.msra.mxu0 0.0
        %4199 = vmatprep.subr.mxu0 0.0
        %4200 = vmatpush1.msra.mxu0 0.0
        %4201 = vmatprep.subr.mxu0 0.0
        %4202 = vmatpush1.msra.mxu0 0.0
        %4203 = vmatprep.subr.mxu0 0.0
        %4204 = vmatpush1.msra.mxu0 0.0
        %4205 = vmatprep.subr.mxu0 0.0
        %4206 = vmatpush1.msra.mxu0 0.0
        %4207 = vmatprep.subr.mxu0 0.0
        %4208 = vmatpush1.msra.mxu0 0.0
        %4209 = vmatprep.mubr.f32.mxu0 0.0
        %4210 = vmatmul.mubr.f32.gmra.mrb[0].mxu0 %v4143
        %v4211 = vpop.f32.mrb[0].mxu0
        %v4212 = vadd.f32 %v4141, %v4211
        %v4213 = vpop.f32.mrb[0].mxu0
        %4214 = vdwg.mxu0
        %v4215 = vmax.f32 %v4212, 0.0
        %v4216 = vld [vmem:[%s2 + $0x200] sm:$0xff]
        %v4217 = vld [vmem:[%s2 + $0x208] sm:$0xff]
        %v4218 = vld [vmem:[%s2 + $0x210] sm:$0xff]
        %v4219 = vld [vmem:[%s2 + $0x218] sm:$0xff]
        %v4220 = vld [vmem:[%s2 + $0x220] sm:$0xff]
        %v4221 = vld [vmem:[%s2 + $0x228] sm:$0xff]
        %v4222 = vld [vmem:[%s2 + $0x230] sm:$0xff]
        %v4223 = vld [vmem:[%s2 + $0x238] sm:$0xff]
        %v4224 = vld [vmem:[%s3 + $0x13] sm:$0x1]
        %v4225 = vlaneseq
        %v4226 = vshrl.u32 %v4225, 7
        %v4227 = vsub.s32 0, %v4226
        %v4228 = vrot.slane %v4224, %v4227
        %v4230 = vsel %vm1184, %v4215, 0
        %4232 = vmatprep.subr.mxu0 0.0
        %4233 = vmatpush1.msra.mxu0 %v4216
        %4234 = vmatprep.subr.mxu0 0.0
        %4235 = vmatpush1.msra.mxu0 %v4217
        %4236 = vmatprep.subr.mxu0 0.0
        %4237 = vmatpush1.msra.mxu0 %v4218
        %4238 = vmatprep.subr.mxu0 0.0
        %4239 = vmatpush1.msra.mxu0 %v4219
        %4240 = vmatprep.subr.mxu0 0.0
        %4241 = vmatpush1.msra.mxu0 %v4220
        %4242 = vmatprep.subr.mxu0 0.0
        %4243 = vmatpush1.msra.mxu0 %v4221
        %4244 = vmatprep.subr.mxu0 0.0
        %4245 = vmatpush1.msra.mxu0 %v4222
        %4246 = vmatprep.subr.mxu0 0.0
        %4247 = vmatpush1.msra.mxu0 %v4223
        %4248 = vmatprep.subr.mxu0 0.0
        %4249 = vmatpush1.msra.mxu0 0.0
        %4250 = vmatprep.subr.mxu0 0.0
        %4251 = vmatpush1.msra.mxu0 0.0
        %4252 = vmatprep.subr.mxu0 0.0
        %4253 = vmatpush1.msra.mxu0 0.0
        %4254 = vmatprep.subr.mxu0 0.0
        %4255 = vmatpush1.msra.mxu0 0.0
        %4256 = vmatprep.subr.mxu0 0.0
        %4257 = vmatpush1.msra.mxu0 0.0
        %4258 = vmatprep.subr.mxu0 0.0
        %4259 = vmatpush1.msra.mxu0 0.0
        %4260 = vmatprep.subr.mxu0 0.0
        %4261 = vmatpush1.msra.mxu0 0.0
        %4262 = vmatprep.subr.mxu0 0.0
        %4263 = vmatpush1.msra.mxu0 0.0
        %4264 = vmatprep.subr.mxu0 0.0
        %4265 = vmatpush1.msra.mxu0 0.0
        %4266 = vmatprep.subr.mxu0 0.0
        %4267 = vmatpush1.msra.mxu0 0.0
        %4268 = vmatprep.subr.mxu0 0.0
        %4269 = vmatpush1.msra.mxu0 0.0
        %4270 = vmatprep.subr.mxu0 0.0
        %4271 = vmatpush1.msra.mxu0 0.0
        %4272 = vmatprep.subr.mxu0 0.0
        %4273 = vmatpush1.msra.mxu0 0.0
        %4274 = vmatprep.subr.mxu0 0.0
        %4275 = vmatpush1.msra.mxu0 0.0
        %4276 = vmatprep.subr.mxu0 0.0
        %4277 = vmatpush1.msra.mxu0 0.0
        %4278 = vmatprep.subr.mxu0 0.0
        %4279 = vmatpush1.msra.mxu0 0.0
        %4280 = vmatprep.subr.mxu0 0.0
        %4281 = vmatpush1.msra.mxu0 0.0
        %4282 = vmatprep.subr.mxu0 0.0
        %4283 = vmatpush1.msra.mxu0 0.0
        %4284 = vmatprep.subr.mxu0 0.0
        %4285 = vmatpush1.msra.mxu0 0.0
        %4286 = vmatprep.subr.mxu0 0.0
        %4287 = vmatpush1.msra.mxu0 0.0
        %4288 = vmatprep.subr.mxu0 0.0
        %4289 = vmatpush1.msra.mxu0 0.0
        %4290 = vmatprep.subr.mxu0 0.0
        %4291 = vmatpush1.msra.mxu0 0.0
        %4292 = vmatprep.subr.mxu0 0.0
        %4293 = vmatpush1.msra.mxu0 0.0
        %4294 = vmatprep.subr.mxu0 0.0
        %4295 = vmatpush1.msra.mxu0 0.0
        %4296 = vmatprep.mubr.f32.mxu0 0.0
        %4297 = vmatmul.mubr.f32.gmra.mrb[0].mxu0 %v4230
        %v4298 = vpop.f32.mrb[0].mxu0
        %v4299 = vadd.f32 %v4228, %v4298
        %v4300 = vpop.f32.mrb[0].mxu0
        %4301 = vdwg.mxu0
        %v4302 = vld [vmem:[%s3 + $0x18] sm:$0x1]
        %v4303 = vld [vmem:[%s3 + $0x19] sm:$0x1]
        %v4304 = vadd.f32 %v4132, %v4299
        %v4305 = vsel %vm225, %v4304, 0.0
        %4306 = vadd.xlane.f32.xlu0 %v4305
        %v4307 = vpop.xlane.xlu0 %4306
        %v4308 = vmul.f32 %v4307, %v1068
        %v4309 = vsub.f32 %v4304, %v4308
        %v4310 = vmul.f32 %v4309, %v4309
        %v4311 = vsel %vm225, %v4310, 0.0
        %4312 = vadd.xlane.f32.xlu0 %v4311
        %v4313 = vpop.xlane.xlu0 %4312
        %v4314 = vmul.f32 %v4313, %v1068
        %v4315 = vadd.f32 %v4314, 1e-05
        %v4316 = vrsqrt.pop %v4315
        %v4317 = vmul.f32 %v4309, %v4316
        %v4318 = vlaneseq
        %v4319 = vshrl.u32 %v4318, 7
        %v4320 = vsub.s32 0, %v4319
        %v4321 = vrot.slane %v4302, %v4320
        %v4322 = vmul.f32 %v4317, %v4321
        %v4323 = vlaneseq
        %v4324 = vshrl.u32 %v4323, 7
        %v4325 = vsub.s32 0, %v4324
        %v4326 = vrot.slane %v4303, %v4325
        %v4327 = vadd.f32 %v4322, %v4326
        %4328 = vst.msk [vmem:[%s203] sm:$0xff] %vm225, %v4327
        %s4329 = sand.u32 %s120, 1
        %s4330 = scalar_lea.sflag [#allocation3], %s4329
        %s4331 = sand.u32 %s120, 1
        %s4332 = smul.addr %s4331, 8
        %s4333 = scalar_lea.vmem [#allocation2], %s4332
        // Predicated region
        $region37: #{tpu_custom_call.1} parent=35 // pred_check
          %p4334 = pneg %p130
        $region38: #{tpu_custom_call.1} parent=35 // pred_check_branch
          %4336 = sbr.rel (%p4334) target = $region40
        $region39: #{tpu_custom_call.1} parent=35 // pred_region
          %s4338 = ssub.s32 128, 128
          %4339 = vsyncadd %s4330, %s4338
          %s4340 = smul.addr %s18, 128
          %s4341 = scalar_lea.hbm %s4, %s4340
          %s4343 = sshll.u32 %s4333, 4
          %s4344 = int_to_ptr.vmem [resolvable:$true] %s4343
          %4346 = dma.vmem_to_hbm [thread:$0]  %s4344, 128, %s4341, %s4330
        $region40: #{tpu_custom_call.1} parent=35 // pred_fallthru
          _
      $region36: #{tpu_custom_call.1} parent=5 // pred_fallthru
        _
      %p4347 = scmp.le.s32.totalorder 2, %s13
      // Predicated region
      $region41: #{tpu_custom_call.1} parent=5 // pred_check
        %p4348 = pneg %p4347
      $region42: #{tpu_custom_call.1} parent=5 // pred_check_branch
        %4350 = sbr.rel (%p4348) target = $region44
      $region43: #{tpu_custom_call.1} parent=5 // pred_region
        %s4351 = ssub.s32 %s13, 2
        // Predicated region
        $region45: #{tpu_custom_call.1} parent=43 // pred_check
          %p4352 = pneg %p136
        $region46: #{tpu_custom_call.1} parent=43 // pred_check_branch
          %4354 = sbr.rel (%p4352) target = $region48
        $region47: #{tpu_custom_call.1} parent=43 // pred_region
          %s4355 = sand.u32 %s121, 1
          %s4356 = scalar_lea.sflag [#allocation3], %s4355
          %s4357 = sand.u32 %s121, 1
          %s4358 = smul.addr %s4357, 8
          %s4359 = scalar_lea.vmem [#allocation2], %s4358
          %4360 = dma.done %s4356, 128
        $region48: #{tpu_custom_call.1} parent=43 // pred_fallthru
          _
      $region44: #{tpu_custom_call.1} parent=5 // pred_fallthru
        _
    $region6: #{tpu_custom_call.1} parent=1 // loop_footer
      %s17 = sadd.s32 1, %s13
    $region7: #{tpu_custom_call.1} parent=1 // loop_footer_branch
      %12 = sbr.rel target = $region3
    $region8: #{tpu_custom_call.1} parent=1 // loop_exit
      _
    %4361 = vsyncpa [#allocation3], 1
    %s4362 = scalar_lea.sflag [#allocation3], 1
    %4363 = vsyncpa %s4362, 1

</llo_original>
